<compile_context>
chip_gen: v5e
topology: v5e:2x2
jax: 0.10.0
libtpu: 0.0.40
codegen_flags: <defaults>
</compile_context>

<pallas_src>
import functools
import math

import jax
import jax.numpy as jnp
from jax.experimental import pallas as pl
from jax.experimental.pallas import tpu as pltpu

# ----------------------------- model config (scaled-down BERT) ---------------
HIDDEN = 128          # stands in for 768 of the real checkpoint
HEADS = 4
HEAD_DIM = HIDDEN // HEADS
INTER = 256
LAYERS = 2
VOCAB = 100
MAX_POS = 64
NUM_LABELS = 8
PAD_LABELS = 128      # lane-padded classifier width (logits sliced back to NUM_LABELS)
LN_EPS = 1e-12
NUM_ENC = 2           # the two encoders (enc, emo)
NEG_INF = -1e9        # additive-mask / padding bias value (f32)

VMEM_SPEC = pl.BlockSpec(memory_space=pltpu.MemorySpace.VMEM)


# ----------------------------- in-kernel helpers ------------------------------
def _layernorm(x, g, b, eps):
    mu = jnp.mean(x, axis=-1, keepdims=True)
    xc = x - mu
    var = jnp.mean(xc * xc, axis=-1, keepdims=True)
    return xc * jax.lax.rsqrt(var + eps) * g + b


# ----------------------------- fully fused forward kernel --------------------
def _fused_forward_kernel(hemb_ref, mask_ref, embg_ref, embb_ref,
                          qkvw_ref, qkvb_ref, ow_ref, ob_ref,
                          alng_ref, alnb_ref, fiw_ref, fib_ref,
                          fow_ref, fob_ref, olng_ref, olnb_ref,
                          pw_ref, pb_ref, fcw_ref, fcb_ref,
                          *rest, batch, seq, heads, head_dim, layers, eps,
                          with_loss):
    if with_loss:
        onehot_ref, out_ref = rest
    else:
        (out_ref,) = rest

    B, S, hd = batch, seq, head_dim
    M = B * S
    H = heads * hd
    G = heads * B

    # additive attention mask: built once, reused by every layer of both encoders
    neg = (1.0 - mask_ref[...].astype(jnp.float32)) * NEG_INF          # (B, S)
    neg_g = jnp.concatenate([neg] * heads, axis=0)                     # (G, S), head-major

    pooled = []
    for e in range(NUM_ENC):             # unrolled: both encoders in one body
        # embedding LayerNorm; residual stream h stays f32 and never leaves VMEM
        h = _layernorm(hemb_ref[e], embg_ref[e], embb_ref[e], eps)     # (M, H) f32

        for li in range(layers):         # unrolled: all encoder layers fused
            idx = li * NUM_ENC + e
            x16 = h.astype(jnp.bfloat16)

            # fused QKV projection (1/sqrt(head_dim) folded into the Q weights)
            qkv = (jnp.dot(x16, qkvw_ref[idx], preferred_element_type=jnp.float32)
                   + qkvb_ref[idx])                                    # (M, 3H) f32
            qkv16 = qkv.astype(jnp.bfloat16)

            # head split -> single batched (heads*B, S, hd) tensor (head-major).
            # The 32-lane column slices are the irreducible relayout of the
            # head split; softmax/ctx/out-proj below all run once, batched.
            def split_heads(base):
                return jnp.concatenate(
                    [qkv16[:, base + hh * hd: base + (hh + 1) * hd].reshape(B, S, hd)
                     for hh in range(heads)], axis=0)                  # (G, S, hd)

            q = split_heads(0)
            k = split_heads(H)
            v = split_heads(2 * H)

            # batched attention; scores keep S_k lane-dense in the last dim
            s = jnp.einsum("gqd,gkd->gqk", q, k,
                           preferred_element_type=jnp.float32)         # (G, S, S)
            s = s + neg_g[:, None, :]
            mx = jnp.max(s, axis=-1, keepdims=True)
            p = jnp.exp(s - mx)
            p = p * pl.reciprocal(jnp.sum(p, axis=-1, keepdims=True), approx=True)
            ctx = jnp.einsum("gqk,gkd->gqd", p.astype(jnp.bfloat16), v,
                             preferred_element_type=jnp.float32)       # (G, S, hd)

            # merge heads with one lane concat, then ONE K=H out-projection dot
            ctx2d = jnp.concatenate(
                [ctx[hh * B:(hh + 1) * B].reshape(M, hd) for hh in range(heads)],
                axis=-1)                                               # (M, H) f32
            attn = (jnp.dot(ctx2d.astype(jnp.bfloat16), ow_ref[idx],
                            preferred_element_type=jnp.float32) + ob_ref[idx])

            # add & LayerNorm (f32 residual / statistics)
            h1 = _layernorm(attn + h, alng_ref[idx], alnb_ref[idx], eps)

            # FFN: matmul -> gelu -> matmul -> add & LayerNorm
            ff = (jnp.dot(h1.astype(jnp.bfloat16), fiw_ref[idx],
                          preferred_element_type=jnp.float32) + fib_ref[idx])
            # TODO(synk): HF BERT uses the exact erf GELU; the tanh approximation
            # is used here for guaranteed Mosaic lowering (weights are random anyway).
            ff = jax.nn.gelu(ff, approximate=True)
            ff = (jnp.dot(ff.astype(jnp.bfloat16), fow_ref[idx],
                          preferred_element_type=jnp.float32) + fob_ref[idx])
            h = _layernorm(ff + h1, olng_ref[idx], olnb_ref[idx], eps)

        # BERT pooler on the CLS token of this encoder: tanh(cls @ W + b)
        cls = jnp.concatenate([h[b * S: b * S + 1, :] for b in range(B)], axis=0)
        pooled.append(jnp.tanh(jnp.dot(cls.astype(jnp.bfloat16), pw_ref[e],
                                       preferred_element_type=jnp.float32)
                               + pb_ref[e]))                           # (B, H) f32

    # TODO(synk): nn.Dropout(0.2) on embeds / emo_embeds / combined is a no-op
    # here (eval-mode / inference semantics).
    combined = jnp.maximum(pooled[0], pooled[1])                       # (B, H) f32

    # classifier over lane-padded label dim (padding columns carry NEG_INF bias)
    logits = (jnp.dot(combined.astype(jnp.bfloat16), fcw_ref[...],
                      preferred_element_type=jnp.float32) + fcb_ref[...])  # (B, PAD)

    if with_loss:
        mx = jnp.max(logits, axis=-1, keepdims=True)
        lse = mx + jnp.log(jnp.sum(jnp.exp(logits - mx), axis=-1, keepdims=True))
        correct = jnp.sum(logits * onehot_ref[...], axis=-1, keepdims=True)
        loss = jnp.sum(lse - correct) / logits.shape[0]
        # pack the scalar loss into padding column NUM_LABELS of row 0 so the
        # kernel has a single dense lane-wide store (no (1,1) VMEM output).
        row = jax.lax.broadcasted_iota(jnp.int32, logits.shape, 0)
        col = jax.lax.broadcasted_iota(jnp.int32, logits.shape, 1)
        logits = jnp.where((row == 0) & (col == NUM_LABELS), loss, logits)

    out_ref[...] = logits


# ----------------------------- parameter init (deterministic) ----------------
def _dense(key, fan_in, fan_out):
    w = jax.random.normal(key, (fan_in, fan_out), jnp.float32) * 0.02
    b = jnp.zeros((1, fan_out), jnp.float32)
    return w, b


def _init_one_encoder(key):
    keys = jax.random.split(key, 4 + LAYERS)
    p = {
        "word_emb": jax.random.normal(keys[0], (VOCAB, HIDDEN), jnp.float32) * 0.02,
        "pos_emb": jax.random.normal(keys[1], (MAX_POS, HIDDEN), jnp.float32) * 0.02,
        "type_emb": jax.random.normal(keys[2], (2, HIDDEN), jnp.float32) * 0.02,
        "emb_ln_g": jnp.ones((1, HIDDEN), jnp.float32),
        "emb_ln_b": jnp.zeros((1, HIDDEN), jnp.float32),
        "layers": [],
    }
    for li in range(LAYERS):
        lk = jax.random.split(keys[3 + li], 6)
        qw, qb = _dense(lk[0], HIDDEN, HIDDEN)
        kw, kb = _dense(lk[1], HIDDEN, HIDDEN)
        vw, vb = _dense(lk[2], HIDDEN, HIDDEN)
        ow, ob = _dense(lk[3], HIDDEN, HIDDEN)
        fiw, fib = _dense(lk[4], HIDDEN, INTER)
        fow, fob = _dense(lk[5], INTER, HIDDEN)
        p["layers"].append(dict(
            q_w=qw, q_b=qb, k_w=kw, k_b=kb, v_w=vw, v_b=vb, o_w=ow, o_b=ob,
            attn_ln_g=jnp.ones((1, HIDDEN), jnp.float32),
            attn_ln_b=jnp.zeros((1, HIDDEN), jnp.float32),
            fi_w=fiw, fi_b=fib, fo_w=fow, fo_b=fob,
            out_ln_g=jnp.ones((1, HIDDEN), jnp.float32),
            out_ln_b=jnp.zeros((1, HIDDEN), jnp.float32)))
    p["pool_w"], p["pool_b"] = _dense(keys[3 + LAYERS], HIDDEN, HIDDEN)
    return p


def init_mtl_params(key):
    """Init both encoders; pack kernel-ready stacked params.

    Per-layer/per-encoder tensors are stacked on a single leading axis of size
    LAYERS*NUM_ENC and indexed in-kernel with  idx = layer*NUM_ENC + encoder.
    """
    k_enc, k_emo, k_fc = jax.random.split(key, 3)
    encs = [_init_one_encoder(k_enc), _init_one_encoder(k_emo)]
    scale = 1.0 / math.sqrt(HEAD_DIM)

    stack_e = lambda name: jnp.stack([e[name] for e in encs], axis=0)

    def stack_le(name):     # (LAYERS*NUM_ENC, ...) with idx = li*NUM_ENC + e
        return jnp.stack([encs[e]["layers"][li][name]
                          for li in range(LAYERS) for e in range(NUM_ENC)], axis=0)

    # fused QKV projection; 1/sqrt(head_dim) folded into the Q block
    qkv_w = jnp.concatenate([stack_le("q_w") * scale, stack_le("k_w"),
                             stack_le("v_w")], axis=-1)                # (LE, H, 3H)
    qkv_b = jnp.concatenate([stack_le("q_b") * scale, stack_le("k_b"),
                             stack_le("v_b")], axis=-1)                # (LE, 1, 3H)

    # classifier: lane-pad NUM_LABELS -> PAD_LABELS (padding bias = NEG_INF so
    # padded columns never affect softmax / CE); logits sliced back outside.
    fc_w, fc_b = _dense(k_fc, HIDDEN, NUM_LABELS)
    fc_w_pad = jnp.zeros((HIDDEN, PAD_LABELS), jnp.float32).at[:, :NUM_LABELS].set(fc_w)
    fc_b_pad = jnp.full((1, PAD_LABELS), NEG_INF, jnp.float32).at[:, :NUM_LABELS].set(fc_b)

    return {
        "word_emb": stack_e("word_emb"),            # (E, V, H) f32 (gather is XLA glue)
        "pos_emb": stack_e("pos_emb"),
        "type_emb": stack_e("type_emb"),
        "emb_ln_g": stack_e("emb_ln_g"),            # (E, 1, H) f32
        "emb_ln_b": stack_e("emb_ln_b"),
        "qkv_w": qkv_w.astype(jnp.bfloat16),        # (LE, H, 3H) bf16
        "qkv_b": qkv_b,                             # (LE, 1, 3H) f32
        "o_w": stack_le("o_w").astype(jnp.bfloat16),
        "o_b": stack_le("o_b"),
        "attn_ln_g": stack_le("attn_ln_g"), "attn_ln_b": stack_le("attn_ln_b"),
        "fi_w": stack_le("fi_w").astype(jnp.bfloat16), "fi_b": stack_le("fi_b"),
        "fo_w": stack_le("fo_w").astype(jnp.bfloat16), "fo_b": stack_le("fo_b"),
        "out_ln_g": stack_le("out_ln_g"), "out_ln_b": stack_le("out_ln_b"),
        "pool_w": stack_e("pool_w").astype(jnp.bfloat16),   # (E, H, H) bf16
        "pool_b": stack_e("pool_b"),                        # (E, 1, H) f32
        "fc_w": fc_w_pad.astype(jnp.bfloat16),              # (H, PAD_LABELS) bf16
        "fc_b": fc_b_pad,                                   # (1, PAD_LABELS) f32
    }


# ----------------------------- BERT_MTL_MAX forward ---------------------------
def bert_mtl_forward(params, input_ids, attention_mask=None, labels=None):
    B, S = input_ids.shape
    if attention_mask is None:
        attention_mask = jnp.ones_like(input_ids)

    # embeddings for both encoders (data-dependent gather/add = XLA glue that
    # feeds the single fused kernel)
    ids = input_ids.reshape(-1)
    hemb = jnp.take(params["word_emb"], ids, axis=1)                   # (E, B*S, H)
    hemb = hemb + jnp.tile(params["pos_emb"][:, :S, :], (1, B, 1))
    hemb = hemb + params["type_emb"][:, 0:1, :]                        # token_type_ids == 0
    mask_f32 = attention_mask.astype(jnp.float32)                      # (B, S)

    with_loss = labels is not None
    args = [hemb, mask_f32, params["emb_ln_g"], params["emb_ln_b"],
            params["qkv_w"], params["qkv_b"], params["o_w"], params["o_b"],
            params["attn_ln_g"], params["attn_ln_b"], params["fi_w"], params["fi_b"],
            params["fo_w"], params["fo_b"], params["out_ln_g"], params["out_ln_b"],
            params["pool_w"], params["pool_b"], params["fc_w"], params["fc_b"]]
    if with_loss:
        args.append(jax.nn.one_hot(labels, PAD_LABELS, dtype=jnp.float32))

    # ONE gridless pallas_call for the whole forward; every operand lives in VMEM.
    out = pl.pallas_call(
        functools.partial(_fused_forward_kernel, batch=B, seq=S, heads=HEADS,
                          head_dim=HEAD_DIM, layers=LAYERS, eps=LN_EPS,
                          with_loss=with_loss),
        out_shape=jax.ShapeDtypeStruct((B, PAD_LABELS), jnp.float32),
        in_specs=[VMEM_SPEC] * len(args),
        out_specs=VMEM_SPEC,
    )(*args)

    logits = out[:, :NUM_LABELS]
    if with_loss:
        loss = out[0, NUM_LABELS]          # scalar loss packed into a padding lane
        return loss, logits
    return (logits,)


# ----------------------------- main -------------------------------------------
if __name__ == "__main__":
    key = jax.random.PRNGKey(0)
    k_param, k_ids, k_lab = jax.random.split(key, 3)

    B, S = 2, 8
    params = init_mtl_params(k_param)
    input_ids = jax.random.randint(k_ids, (B, S), 0, VOCAB, dtype=jnp.int32)
    attention_mask = jnp.ones((B, S), jnp.int32)
    labels = jax.random.randint(k_lab, (B,), 0, NUM_LABELS, dtype=jnp.int32)

    fwd = jax.jit(bert_mtl_forward)
    loss, logits = fwd(params, input_ids, attention_mask, labels)
    loss = jax.block_until_ready(loss)
    logits = jax.block_until_ready(logits)

    assert logits.shape == (B, NUM_LABELS)
    assert bool(jnp.isfinite(loss))
    assert bool(jnp.all(jnp.isfinite(logits)))
    print("KERNEL_OK")
</pallas_src>

<mosaic_0001>
module attributes {stable_mosaic.version = 11 : i64} {
  func.func @_fused_forward_kernel(%arg0: memref<2x16x128xf32, #tpu.memory_space<vmem>>, %arg1: memref<2x8xf32, #tpu.memory_space<vmem>>, %arg2: memref<2x1x128xf32, #tpu.memory_space<vmem>>, %arg3: memref<2x1x128xf32, #tpu.memory_space<vmem>>, %arg4: memref<4x128x384xbf16, #tpu.memory_space<vmem>>, %arg5: memref<4x1x384xf32, #tpu.memory_space<vmem>>, %arg6: memref<4x128x128xbf16, #tpu.memory_space<vmem>>, %arg7: memref<4x1x128xf32, #tpu.memory_space<vmem>>, %arg8: memref<4x1x128xf32, #tpu.memory_space<vmem>>, %arg9: memref<4x1x128xf32, #tpu.memory_space<vmem>>, %arg10: memref<4x128x256xbf16, #tpu.memory_space<vmem>>, %arg11: memref<4x1x256xf32, #tpu.memory_space<vmem>>, %arg12: memref<4x256x128xbf16, #tpu.memory_space<vmem>>, %arg13: memref<4x1x128xf32, #tpu.memory_space<vmem>>, %arg14: memref<4x1x128xf32, #tpu.memory_space<vmem>>, %arg15: memref<4x1x128xf32, #tpu.memory_space<vmem>>, %arg16: memref<2x128x128xbf16, #tpu.memory_space<vmem>>, %arg17: memref<2x1x128xf32, #tpu.memory_space<vmem>>, %arg18: memref<128x128xbf16, #tpu.memory_space<vmem>>, %arg19: memref<1x128xf32, #tpu.memory_space<vmem>>, %arg20: memref<2x128xf32, #tpu.memory_space<vmem>>, %arg21: memref<2x128xf32, #tpu.memory_space<vmem>>) attributes {dimension_semantics = [], scalar_prefetch = 0 : i64, scratch_operands = 0 : i64, tpu.core_type = #tpu.core_type<tc>} {
    %c0 = arith.constant 0 : index
    %c0_0 = arith.constant 0 : index
    %0 = vector.load %arg1[%c0, %c0_0] : memref<2x8xf32, #tpu.memory_space<vmem>>, vector<2x8xf32>
    %cst = arith.constant 1.000000e+00 : f32
    %1 = vector.broadcast %cst : f32 to vector<2x8xf32>
    %2 = arith.subf %1, %0 : vector<2x8xf32>
    %cst_1 = arith.constant -1.000000e+09 : f32
    %3 = vector.broadcast %cst_1 : f32 to vector<2x8xf32>
    %4 = arith.mulf %2, %3 : vector<2x8xf32>
    %5 = tpu.concatenate %4, %4, %4, %4 in 0 : vector<2x8xf32>, vector<2x8xf32>, vector<2x8xf32>, vector<2x8xf32> -> vector<8x8xf32>
    %c0_2 = arith.constant 0 : index
    %c0_3 = arith.constant 0 : index
    %c0_4 = arith.constant 0 : index
    %6 = vector.load %arg0[%c0_2, %c0_3, %c0_4] : memref<2x16x128xf32, #tpu.memory_space<vmem>>, vector<1x16x128xf32>
    %7 = vector.shape_cast %6 : vector<1x16x128xf32> to vector<16x128xf32>
    %c0_5 = arith.constant 0 : index
    %c0_6 = arith.constant 0 : index
    %c0_7 = arith.constant 0 : index
    %8 = vector.load %arg2[%c0_5, %c0_6, %c0_7] : memref<2x1x128xf32, #tpu.memory_space<vmem>>, vector<1x1x128xf32>
    %9 = vector.shape_cast %8 : vector<1x1x128xf32> to vector<1x128xf32>
    %c0_8 = arith.constant 0 : index
    %c0_9 = arith.constant 0 : index
    %c0_10 = arith.constant 0 : index
    %10 = vector.load %arg3[%c0_8, %c0_9, %c0_10] : memref<2x1x128xf32, #tpu.memory_space<vmem>>, vector<1x1x128xf32>
    %11 = vector.shape_cast %10 : vector<1x1x128xf32> to vector<1x128xf32>
    %cst_11 = arith.constant dense<0.000000e+00> : vector<16xf32>
    %12 = vector.multi_reduction <add>, %7, %cst_11 [1] : vector<16x128xf32> to vector<16xf32>
    %13 = vector.shape_cast %12 : vector<16xf32> to vector<16x1xf32>
    %cst_12 = arith.constant 1.280000e+02 : f32
    %14 = vector.broadcast %cst_12 : f32 to vector<16x1xf32>
    %15 = arith.divf %13, %14 : vector<16x1xf32>
    %16 = vector.broadcast %15 : vector<16x1xf32> to vector<16x128xf32>
    %17 = arith.subf %7, %16 : vector<16x128xf32>
    %18 = arith.mulf %17, %17 : vector<16x128xf32>
    %cst_13 = arith.constant dense<0.000000e+00> : vector<16xf32>
    %19 = vector.multi_reduction <add>, %18, %cst_13 [1] : vector<16x128xf32> to vector<16xf32>
    %20 = vector.shape_cast %19 : vector<16xf32> to vector<16x1xf32>
    %cst_14 = arith.constant 1.280000e+02 : f32
    %21 = vector.broadcast %cst_14 : f32 to vector<16x1xf32>
    %22 = arith.divf %20, %21 : vector<16x1xf32>
    %cst_15 = arith.constant 9.99999996E-13 : f32
    %23 = vector.broadcast %cst_15 : f32 to vector<16x1xf32>
    %24 = arith.addf %22, %23 : vector<16x1xf32>
    %25 = math.rsqrt %24 : vector<16x1xf32>
    %26 = vector.broadcast %25 : vector<16x1xf32> to vector<16x128xf32>
    %27 = arith.mulf %17, %26 : vector<16x128xf32>
    %28 = vector.broadcast %9 : vector<1x128xf32> to vector<16x128xf32>
    %29 = arith.mulf %27, %28 : vector<16x128xf32>
    %30 = vector.broadcast %11 : vector<1x128xf32> to vector<16x128xf32>
    %31 = arith.addf %29, %30 : vector<16x128xf32>
    %32 = arith.truncf %31 : vector<16x128xf32> to vector<16x128xbf16>
    %c0_16 = arith.constant 0 : index
    %c0_17 = arith.constant 0 : index
    %c0_18 = arith.constant 0 : index
    %33 = vector.load %arg4[%c0_16, %c0_17, %c0_18] : memref<4x128x384xbf16, #tpu.memory_space<vmem>>, vector<1x128x384xbf16>
    %34 = vector.shape_cast %33 : vector<1x128x384xbf16> to vector<128x384xbf16>
    %cst_19 = arith.constant dense<0.000000e+00> : vector<16x384xf32>
    %35 = tpu.matmul %32, %34, %cst_19 {dimension_numbers = #tpu.dot_dimension_numbers<[1], [0], [0], [1], [0, 0, 1, 1], [], []>} : vector<16x128xbf16>, vector<128x384xbf16>, vector<16x384xf32> -> vector<16x384xf32>
    %c0_20 = arith.constant 0 : index
    %c0_21 = arith.constant 0 : index
    %c0_22 = arith.constant 0 : index
    %36 = vector.load %arg5[%c0_20, %c0_21, %c0_22] : memref<4x1x384xf32, #tpu.memory_space<vmem>>, vector<1x1x384xf32>
    %37 = vector.shape_cast %36 : vector<1x1x384xf32> to vector<1x384xf32>
    %38 = vector.broadcast %37 : vector<1x384xf32> to vector<16x384xf32>
    %39 = arith.addf %35, %38 : vector<16x384xf32>
    %40 = arith.truncf %39 : vector<16x384xf32> to vector<16x384xbf16>
    %41 = vector.extract_strided_slice %40 {offsets = [0, 0], sizes = [16, 32], strides = [1, 1]} : vector<16x384xbf16> to vector<16x32xbf16>
    %42 = vector.shape_cast %41 : vector<16x32xbf16> to vector<2x8x32xbf16>
    %43 = vector.extract_strided_slice %40 {offsets = [0, 32], sizes = [16, 32], strides = [1, 1]} : vector<16x384xbf16> to vector<16x32xbf16>
    %44 = vector.shape_cast %43 : vector<16x32xbf16> to vector<2x8x32xbf16>
    %45 = vector.extract_strided_slice %40 {offsets = [0, 64], sizes = [16, 32], strides = [1, 1]} : vector<16x384xbf16> to vector<16x32xbf16>
    %46 = vector.shape_cast %45 : vector<16x32xbf16> to vector<2x8x32xbf16>
    %47 = vector.extract_strided_slice %40 {offsets = [0, 96], sizes = [16, 32], strides = [1, 1]} : vector<16x384xbf16> to vector<16x32xbf16>
    %48 = vector.shape_cast %47 : vector<16x32xbf16> to vector<2x8x32xbf16>
    %49 = tpu.concatenate %42, %44, %46, %48 in 0 : vector<2x8x32xbf16>, vector<2x8x32xbf16>, vector<2x8x32xbf16>, vector<2x8x32xbf16> -> vector<8x8x32xbf16>
    %50 = vector.extract_strided_slice %40 {offsets = [0, 128], sizes = [16, 32], strides = [1, 1]} : vector<16x384xbf16> to vector<16x32xbf16>
    %51 = vector.shape_cast %50 : vector<16x32xbf16> to vector<2x8x32xbf16>
    %52 = vector.extract_strided_slice %40 {offsets = [0, 160], sizes = [16, 32], strides = [1, 1]} : vector<16x384xbf16> to vector<16x32xbf16>
    %53 = vector.shape_cast %52 : vector<16x32xbf16> to vector<2x8x32xbf16>
    %54 = vector.extract_strided_slice %40 {offsets = [0, 192], sizes = [16, 32], strides = [1, 1]} : vector<16x384xbf16> to vector<16x32xbf16>
    %55 = vector.shape_cast %54 : vector<16x32xbf16> to vector<2x8x32xbf16>
    %56 = vector.extract_strided_slice %40 {offsets = [0, 224], sizes = [16, 32], strides = [1, 1]} : vector<16x384xbf16> to vector<16x32xbf16>
    %57 = vector.shape_cast %56 : vector<16x32xbf16> to vector<2x8x32xbf16>
    %58 = tpu.concatenate %51, %53, %55, %57 in 0 : vector<2x8x32xbf16>, vector<2x8x32xbf16>, vector<2x8x32xbf16>, vector<2x8x32xbf16> -> vector<8x8x32xbf16>
    %59 = vector.extract_strided_slice %40 {offsets = [0, 256], sizes = [16, 32], strides = [1, 1]} : vector<16x384xbf16> to vector<16x32xbf16>
    %60 = vector.shape_cast %59 : vector<16x32xbf16> to vector<2x8x32xbf16>
    %61 = vector.extract_strided_slice %40 {offsets = [0, 288], sizes = [16, 32], strides = [1, 1]} : vector<16x384xbf16> to vector<16x32xbf16>
    %62 = vector.shape_cast %61 : vector<16x32xbf16> to vector<2x8x32xbf16>
    %63 = vector.extract_strided_slice %40 {offsets = [0, 320], sizes = [16, 32], strides = [1, 1]} : vector<16x384xbf16> to vector<16x32xbf16>
    %64 = vector.shape_cast %63 : vector<16x32xbf16> to vector<2x8x32xbf16>
    %65 = vector.extract_strided_slice %40 {offsets = [0, 352], sizes = [16, 32], strides = [1, 1]} : vector<16x384xbf16> to vector<16x32xbf16>
    %66 = vector.shape_cast %65 : vector<16x32xbf16> to vector<2x8x32xbf16>
    %67 = tpu.concatenate %60, %62, %64, %66 in 0 : vector<2x8x32xbf16>, vector<2x8x32xbf16>, vector<2x8x32xbf16>, vector<2x8x32xbf16> -> vector<8x8x32xbf16>
    "tpu.trace_start"() <{level = 10 : i32, message = "gqd,gkd->gqk"}> : () -> ()
    %cst_23 = arith.constant dense<0.000000e+00> : vector<8x8x8xf32>
    %68 = tpu.matmul %49, %58, %cst_23 {dimension_numbers = #tpu.dot_dimension_numbers<[2], [2], [1], [1], [0, 0, 0, 1, 1, 1], [0], [0]>} : vector<8x8x32xbf16>, vector<8x8x32xbf16>, vector<8x8x8xf32> -> vector<8x8x8xf32>
    "tpu.trace_stop"() : () -> ()
    %69 = vector.shape_cast %5 : vector<8x8xf32> to vector<8x1x8xf32>
    %70 = vector.broadcast %69 : vector<8x1x8xf32> to vector<8x8x8xf32>
    %71 = arith.addf %68, %70 : vector<8x8x8xf32>
    %cst_24 = arith.constant dense<0xFF800000> : vector<8x8xf32>
    %72 = vector.multi_reduction <maximumf>, %71, %cst_24 [2] : vector<8x8x8xf32> to vector<8x8xf32>
    %73 = vector.shape_cast %72 : vector<8x8xf32> to vector<8x8x1xf32>
    %74 = vector.broadcast %73 : vector<8x8x1xf32> to vector<8x8x8xf32>
    %75 = arith.subf %71, %74 : vector<8x8x8xf32>
    %76 = math.exp %75 : vector<8x8x8xf32>
    %cst_25 = arith.constant dense<0.000000e+00> : vector<8x8xf32>
    %77 = vector.multi_reduction <add>, %76, %cst_25 [2] : vector<8x8x8xf32> to vector<8x8xf32>
    %78 = vector.shape_cast %77 : vector<8x8xf32> to vector<8x8x1xf32>
    %79 = tpu.reciprocal %78 {approx = true} : vector<8x8x1xf32> -> vector<8x8x1xf32>
    %80 = vector.broadcast %79 : vector<8x8x1xf32> to vector<8x8x8xf32>
    %81 = arith.mulf %76, %80 : vector<8x8x8xf32>
    %82 = arith.truncf %81 : vector<8x8x8xf32> to vector<8x8x8xbf16>
    "tpu.trace_start"() <{level = 10 : i32, message = "gqk,gkd->gqd"}> : () -> ()
    %cst_26 = arith.constant dense<0.000000e+00> : vector<8x8x32xf32>
    %83 = tpu.matmul %82, %67, %cst_26 {dimension_numbers = #tpu.dot_dimension_numbers<[2], [1], [1], [2], [0, 0, 0, 1, 1, 2], [0], [0]>} : vector<8x8x8xbf16>, vector<8x8x32xbf16>, vector<8x8x32xf32> -> vector<8x8x32xf32>
    "tpu.trace_stop"() : () -> ()
    %84 = vector.extract_strided_slice %83 {offsets = [0, 0, 0], sizes = [2, 8, 32], strides = [1, 1, 1]} : vector<8x8x32xf32> to vector<2x8x32xf32>
    %85 = vector.shape_cast %84 : vector<2x8x32xf32> to vector<16x32xf32>
    %86 = vector.extract_strided_slice %83 {offsets = [2, 0, 0], sizes = [2, 8, 32], strides = [1, 1, 1]} : vector<8x8x32xf32> to vector<2x8x32xf32>
    %87 = vector.shape_cast %86 : vector<2x8x32xf32> to vector<16x32xf32>
    %88 = vector.extract_strided_slice %83 {offsets = [4, 0, 0], sizes = [2, 8, 32], strides = [1, 1, 1]} : vector<8x8x32xf32> to vector<2x8x32xf32>
    %89 = vector.shape_cast %88 : vector<2x8x32xf32> to vector<16x32xf32>
    %90 = vector.extract_strided_slice %83 {offsets = [6, 0, 0], sizes = [2, 8, 32], strides = [1, 1, 1]} : vector<8x8x32xf32> to vector<2x8x32xf32>
    %91 = vector.shape_cast %90 : vector<2x8x32xf32> to vector<16x32xf32>
    %92 = tpu.concatenate %85, %87, %89, %91 in 1 : vector<16x32xf32>, vector<16x32xf32>, vector<16x32xf32>, vector<16x32xf32> -> vector<16x128xf32>
    %93 = arith.truncf %92 : vector<16x128xf32> to vector<16x128xbf16>
    %c0_27 = arith.constant 0 : index
    %c0_28 = arith.constant 0 : index
    %c0_29 = arith.constant 0 : index
    %94 = vector.load %arg6[%c0_27, %c0_28, %c0_29] : memref<4x128x128xbf16, #tpu.memory_space<vmem>>, vector<1x128x128xbf16>
    %95 = vector.shape_cast %94 : vector<1x128x128xbf16> to vector<128x128xbf16>
    %cst_30 = arith.constant dense<0.000000e+00> : vector<16x128xf32>
    %96 = tpu.matmul %93, %95, %cst_30 {dimension_numbers = #tpu.dot_dimension_numbers<[1], [0], [0], [1], [0, 0, 1, 1], [], []>} : vector<16x128xbf16>, vector<128x128xbf16>, vector<16x128xf32> -> vector<16x128xf32>
    %c0_31 = arith.constant 0 : index
    %c0_32 = arith.constant 0 : index
    %c0_33 = arith.constant 0 : index
    %97 = vector.load %arg7[%c0_31, %c0_32, %c0_33] : memref<4x1x128xf32, #tpu.memory_space<vmem>>, vector<1x1x128xf32>
    %98 = vector.shape_cast %97 : vector<1x1x128xf32> to vector<1x128xf32>
    %99 = vector.broadcast %98 : vector<1x128xf32> to vector<16x128xf32>
    %100 = arith.addf %96, %99 : vector<16x128xf32>
    %101 = arith.addf %100, %31 : vector<16x128xf32>
    %c0_34 = arith.constant 0 : index
    %c0_35 = arith.constant 0 : index
    %c0_36 = arith.constant 0 : index
    %102 = vector.load %arg8[%c0_34, %c0_35, %c0_36] : memref<4x1x128xf32, #tpu.memory_space<vmem>>, vector<1x1x128xf32>
    %103 = vector.shape_cast %102 : vector<1x1x128xf32> to vector<1x128xf32>
    %c0_37 = arith.constant 0 : index
    %c0_38 = arith.constant 0 : index
    %c0_39 = arith.constant 0 : index
    %104 = vector.load %arg9[%c0_37, %c0_38, %c0_39] : memref<4x1x128xf32, #tpu.memory_space<vmem>>, vector<1x1x128xf32>
    %105 = vector.shape_cast %104 : vector<1x1x128xf32> to vector<1x128xf32>
    %cst_40 = arith.constant dense<0.000000e+00> : vector<16xf32>
    %106 = vector.multi_reduction <add>, %101, %cst_40 [1] : vector<16x128xf32> to vector<16xf32>
    %107 = vector.shape_cast %106 : vector<16xf32> to vector<16x1xf32>
    %cst_41 = arith.constant 1.280000e+02 : f32
    %108 = vector.broadcast %cst_41 : f32 to vector<16x1xf32>
    %109 = arith.divf %107, %108 : vector<16x1xf32>
    %110 = vector.broadcast %109 : vector<16x1xf32> to vector<16x128xf32>
    %111 = arith.subf %101, %110 : vector<16x128xf32>
    %112 = arith.mulf %111, %111 : vector<16x128xf32>
    %cst_42 = arith.constant dense<0.000000e+00> : vector<16xf32>
    %113 = vector.multi_reduction <add>, %112, %cst_42 [1] : vector<16x128xf32> to vector<16xf32>
    %114 = vector.shape_cast %113 : vector<16xf32> to vector<16x1xf32>
    %cst_43 = arith.constant 1.280000e+02 : f32
    %115 = vector.broadcast %cst_43 : f32 to vector<16x1xf32>
    %116 = arith.divf %114, %115 : vector<16x1xf32>
    %cst_44 = arith.constant 9.99999996E-13 : f32
    %117 = vector.broadcast %cst_44 : f32 to vector<16x1xf32>
    %118 = arith.addf %116, %117 : vector<16x1xf32>
    %119 = math.rsqrt %118 : vector<16x1xf32>
    %120 = vector.broadcast %119 : vector<16x1xf32> to vector<16x128xf32>
    %121 = arith.mulf %111, %120 : vector<16x128xf32>
    %122 = vector.broadcast %103 : vector<1x128xf32> to vector<16x128xf32>
    %123 = arith.mulf %121, %122 : vector<16x128xf32>
    %124 = vector.broadcast %105 : vector<1x128xf32> to vector<16x128xf32>
    %125 = arith.addf %123, %124 : vector<16x128xf32>
    %126 = arith.truncf %125 : vector<16x128xf32> to vector<16x128xbf16>
    %c0_45 = arith.constant 0 : index
    %c0_46 = arith.constant 0 : index
    %c0_47 = arith.constant 0 : index
    %127 = vector.load %arg10[%c0_45, %c0_46, %c0_47] : memref<4x128x256xbf16, #tpu.memory_space<vmem>>, vector<1x128x256xbf16>
    %128 = vector.shape_cast %127 : vector<1x128x256xbf16> to vector<128x256xbf16>
    %cst_48 = arith.constant dense<0.000000e+00> : vector<16x256xf32>
    %129 = tpu.matmul %126, %128, %cst_48 {dimension_numbers = #tpu.dot_dimension_numbers<[1], [0], [0], [1], [0, 0, 1, 1], [], []>} : vector<16x128xbf16>, vector<128x256xbf16>, vector<16x256xf32> -> vector<16x256xf32>
    %c0_49 = arith.constant 0 : index
    %c0_50 = arith.constant 0 : index
    %c0_51 = arith.constant 0 : index
    %130 = vector.load %arg11[%c0_49, %c0_50, %c0_51] : memref<4x1x256xf32, #tpu.memory_space<vmem>>, vector<1x1x256xf32>
    %131 = vector.shape_cast %130 : vector<1x1x256xf32> to vector<1x256xf32>
    %132 = vector.broadcast %131 : vector<1x256xf32> to vector<16x256xf32>
    %133 = arith.addf %129, %132 : vector<16x256xf32>
    %134 = arith.mulf %133, %133 : vector<16x256xf32>
    %135 = arith.mulf %133, %134 : vector<16x256xf32>
    %cst_52 = arith.constant 4.471500e-02 : f32
    %136 = vector.broadcast %cst_52 : f32 to vector<16x256xf32>
    %137 = arith.mulf %136, %135 : vector<16x256xf32>
    %138 = arith.addf %133, %137 : vector<16x256xf32>
    %cst_53 = arith.constant 0.797884583 : f32
    %139 = vector.broadcast %cst_53 : f32 to vector<16x256xf32>
    %140 = arith.mulf %139, %138 : vector<16x256xf32>
    %141 = math.tanh %140 : vector<16x256xf32>
    %cst_54 = arith.constant 1.000000e+00 : f32
    %142 = vector.broadcast %cst_54 : f32 to vector<16x256xf32>
    %143 = arith.addf %142, %141 : vector<16x256xf32>
    %cst_55 = arith.constant 5.000000e-01 : f32
    %144 = vector.broadcast %cst_55 : f32 to vector<16x256xf32>
    %145 = arith.mulf %144, %143 : vector<16x256xf32>
    %146 = arith.mulf %133, %145 : vector<16x256xf32>
    %147 = arith.truncf %146 : vector<16x256xf32> to vector<16x256xbf16>
    %c0_56 = arith.constant 0 : index
    %c0_57 = arith.constant 0 : index
    %c0_58 = arith.constant 0 : index
    %148 = vector.load %arg12[%c0_56, %c0_57, %c0_58] : memref<4x256x128xbf16, #tpu.memory_space<vmem>>, vector<1x256x128xbf16>
    %149 = vector.shape_cast %148 : vector<1x256x128xbf16> to vector<256x128xbf16>
    %cst_59 = arith.constant dense<0.000000e+00> : vector<16x128xf32>
    %150 = tpu.matmul %147, %149, %cst_59 {dimension_numbers = #tpu.dot_dimension_numbers<[1], [0], [0], [1], [0, 0, 1, 1], [], []>} : vector<16x256xbf16>, vector<256x128xbf16>, vector<16x128xf32> -> vector<16x128xf32>
    %c0_60 = arith.constant 0 : index
    %c0_61 = arith.constant 0 : index
    %c0_62 = arith.constant 0 : index
    %151 = vector.load %arg13[%c0_60, %c0_61, %c0_62] : memref<4x1x128xf32, #tpu.memory_space<vmem>>, vector<1x1x128xf32>
    %152 = vector.shape_cast %151 : vector<1x1x128xf32> to vector<1x128xf32>
    %153 = vector.broadcast %152 : vector<1x128xf32> to vector<16x128xf32>
    %154 = arith.addf %150, %153 : vector<16x128xf32>
    %155 = arith.addf %154, %125 : vector<16x128xf32>
    %c0_63 = arith.constant 0 : index
    %c0_64 = arith.constant 0 : index
    %c0_65 = arith.constant 0 : index
    %156 = vector.load %arg14[%c0_63, %c0_64, %c0_65] : memref<4x1x128xf32, #tpu.memory_space<vmem>>, vector<1x1x128xf32>
    %157 = vector.shape_cast %156 : vector<1x1x128xf32> to vector<1x128xf32>
    %c0_66 = arith.constant 0 : index
    %c0_67 = arith.constant 0 : index
    %c0_68 = arith.constant 0 : index
    %158 = vector.load %arg15[%c0_66, %c0_67, %c0_68] : memref<4x1x128xf32, #tpu.memory_space<vmem>>, vector<1x1x128xf32>
    %159 = vector.shape_cast %158 : vector<1x1x128xf32> to vector<1x128xf32>
    %cst_69 = arith.constant dense<0.000000e+00> : vector<16xf32>
    %160 = vector.multi_reduction <add>, %155, %cst_69 [1] : vector<16x128xf32> to vector<16xf32>
    %161 = vector.shape_cast %160 : vector<16xf32> to vector<16x1xf32>
    %cst_70 = arith.constant 1.280000e+02 : f32
    %162 = vector.broadcast %cst_70 : f32 to vector<16x1xf32>
    %163 = arith.divf %161, %162 : vector<16x1xf32>
    %164 = vector.broadcast %163 : vector<16x1xf32> to vector<16x128xf32>
    %165 = arith.subf %155, %164 : vector<16x128xf32>
    %166 = arith.mulf %165, %165 : vector<16x128xf32>
    %cst_71 = arith.constant dense<0.000000e+00> : vector<16xf32>
    %167 = vector.multi_reduction <add>, %166, %cst_71 [1] : vector<16x128xf32> to vector<16xf32>
    %168 = vector.shape_cast %167 : vector<16xf32> to vector<16x1xf32>
    %cst_72 = arith.constant 1.280000e+02 : f32
    %169 = vector.broadcast %cst_72 : f32 to vector<16x1xf32>
    %170 = arith.divf %168, %169 : vector<16x1xf32>
    %cst_73 = arith.constant 9.99999996E-13 : f32
    %171 = vector.broadcast %cst_73 : f32 to vector<16x1xf32>
    %172 = arith.addf %170, %171 : vector<16x1xf32>
    %173 = math.rsqrt %172 : vector<16x1xf32>
    %174 = vector.broadcast %173 : vector<16x1xf32> to vector<16x128xf32>
    %175 = arith.mulf %165, %174 : vector<16x128xf32>
    %176 = vector.broadcast %157 : vector<1x128xf32> to vector<16x128xf32>
    %177 = arith.mulf %175, %176 : vector<16x128xf32>
    %178 = vector.broadcast %159 : vector<1x128xf32> to vector<16x128xf32>
    %179 = arith.addf %177, %178 : vector<16x128xf32>
    %180 = arith.truncf %179 : vector<16x128xf32> to vector<16x128xbf16>
    %c2 = arith.constant 2 : index
    %c0_74 = arith.constant 0 : index
    %c0_75 = arith.constant 0 : index
    %181 = vector.load %arg4[%c2, %c0_74, %c0_75] : memref<4x128x384xbf16, #tpu.memory_space<vmem>>, vector<1x128x384xbf16>
    %182 = vector.shape_cast %181 : vector<1x128x384xbf16> to vector<128x384xbf16>
    %cst_76 = arith.constant dense<0.000000e+00> : vector<16x384xf32>
    %183 = tpu.matmul %180, %182, %cst_76 {dimension_numbers = #tpu.dot_dimension_numbers<[1], [0], [0], [1], [0, 0, 1, 1], [], []>} : vector<16x128xbf16>, vector<128x384xbf16>, vector<16x384xf32> -> vector<16x384xf32>
    %c2_77 = arith.constant 2 : index
    %c0_78 = arith.constant 0 : index
    %c0_79 = arith.constant 0 : index
    %184 = vector.load %arg5[%c2_77, %c0_78, %c0_79] : memref<4x1x384xf32, #tpu.memory_space<vmem>>, vector<1x1x384xf32>
    %185 = vector.shape_cast %184 : vector<1x1x384xf32> to vector<1x384xf32>
    %186 = vector.broadcast %185 : vector<1x384xf32> to vector<16x384xf32>
    %187 = arith.addf %183, %186 : vector<16x384xf32>
    %188 = arith.truncf %187 : vector<16x384xf32> to vector<16x384xbf16>
    %189 = vector.extract_strided_slice %188 {offsets = [0, 0], sizes = [16, 32], strides = [1, 1]} : vector<16x384xbf16> to vector<16x32xbf16>
    %190 = vector.shape_cast %189 : vector<16x32xbf16> to vector<2x8x32xbf16>
    %191 = vector.extract_strided_slice %188 {offsets = [0, 32], sizes = [16, 32], strides = [1, 1]} : vector<16x384xbf16> to vector<16x32xbf16>
    %192 = vector.shape_cast %191 : vector<16x32xbf16> to vector<2x8x32xbf16>
    %193 = vector.extract_strided_slice %188 {offsets = [0, 64], sizes = [16, 32], strides = [1, 1]} : vector<16x384xbf16> to vector<16x32xbf16>
    %194 = vector.shape_cast %193 : vector<16x32xbf16> to vector<2x8x32xbf16>
    %195 = vector.extract_strided_slice %188 {offsets = [0, 96], sizes = [16, 32], strides = [1, 1]} : vector<16x384xbf16> to vector<16x32xbf16>
    %196 = vector.shape_cast %195 : vector<16x32xbf16> to vector<2x8x32xbf16>
    %197 = tpu.concatenate %190, %192, %194, %196 in 0 : vector<2x8x32xbf16>, vector<2x8x32xbf16>, vector<2x8x32xbf16>, vector<2x8x32xbf16> -> vector<8x8x32xbf16>
    %198 = vector.extract_strided_slice %188 {offsets = [0, 128], sizes = [16, 32], strides = [1, 1]} : vector<16x384xbf16> to vector<16x32xbf16>
    %199 = vector.shape_cast %198 : vector<16x32xbf16> to vector<2x8x32xbf16>
    %200 = vector.extract_strided_slice %188 {offsets = [0, 160], sizes = [16, 32], strides = [1, 1]} : vector<16x384xbf16> to vector<16x32xbf16>
    %201 = vector.shape_cast %200 : vector<16x32xbf16> to vector<2x8x32xbf16>
    %202 = vector.extract_strided_slice %188 {offsets = [0, 192], sizes = [16, 32], strides = [1, 1]} : vector<16x384xbf16> to vector<16x32xbf16>
    %203 = vector.shape_cast %202 : vector<16x32xbf16> to vector<2x8x32xbf16>
    %204 = vector.extract_strided_slice %188 {offsets = [0, 224], sizes = [16, 32], strides = [1, 1]} : vector<16x384xbf16> to vector<16x32xbf16>
    %205 = vector.shape_cast %204 : vector<16x32xbf16> to vector<2x8x32xbf16>
    %206 = tpu.concatenate %199, %201, %203, %205 in 0 : vector<2x8x32xbf16>, vector<2x8x32xbf16>, vector<2x8x32xbf16>, vector<2x8x32xbf16> -> vector<8x8x32xbf16>
    %207 = vector.extract_strided_slice %188 {offsets = [0, 256], sizes = [16, 32], strides = [1, 1]} : vector<16x384xbf16> to vector<16x32xbf16>
    %208 = vector.shape_cast %207 : vector<16x32xbf16> to vector<2x8x32xbf16>
    %209 = vector.extract_strided_slice %188 {offsets = [0, 288], sizes = [16, 32], strides = [1, 1]} : vector<16x384xbf16> to vector<16x32xbf16>
    %210 = vector.shape_cast %209 : vector<16x32xbf16> to vector<2x8x32xbf16>
    %211 = vector.extract_strided_slice %188 {offsets = [0, 320], sizes = [16, 32], strides = [1, 1]} : vector<16x384xbf16> to vector<16x32xbf16>
    %212 = vector.shape_cast %211 : vector<16x32xbf16> to vector<2x8x32xbf16>
    %213 = vector.extract_strided_slice %188 {offsets = [0, 352], sizes = [16, 32], strides = [1, 1]} : vector<16x384xbf16> to vector<16x32xbf16>
    %214 = vector.shape_cast %213 : vector<16x32xbf16> to vector<2x8x32xbf16>
    %215 = tpu.concatenate %208, %210, %212, %214 in 0 : vector<2x8x32xbf16>, vector<2x8x32xbf16>, vector<2x8x32xbf16>, vector<2x8x32xbf16> -> vector<8x8x32xbf16>
    "tpu.trace_start"() <{level = 10 : i32, message = "gqd,gkd->gqk"}> : () -> ()
    %cst_80 = arith.constant dense<0.000000e+00> : vector<8x8x8xf32>
    %216 = tpu.matmul %197, %206, %cst_80 {dimension_numbers = #tpu.dot_dimension_numbers<[2], [2], [1], [1], [0, 0, 0, 1, 1, 1], [0], [0]>} : vector<8x8x32xbf16>, vector<8x8x32xbf16>, vector<8x8x8xf32> -> vector<8x8x8xf32>
    "tpu.trace_stop"() : () -> ()
    %217 = vector.shape_cast %5 : vector<8x8xf32> to vector<8x1x8xf32>
    %218 = vector.broadcast %217 : vector<8x1x8xf32> to vector<8x8x8xf32>
    %219 = arith.addf %216, %218 : vector<8x8x8xf32>
    %cst_81 = arith.constant dense<0xFF800000> : vector<8x8xf32>
    %220 = vector.multi_reduction <maximumf>, %219, %cst_81 [2] : vector<8x8x8xf32> to vector<8x8xf32>
    %221 = vector.shape_cast %220 : vector<8x8xf32> to vector<8x8x1xf32>
    %222 = vector.broadcast %221 : vector<8x8x1xf32> to vector<8x8x8xf32>
    %223 = arith.subf %219, %222 : vector<8x8x8xf32>
    %224 = math.exp %223 : vector<8x8x8xf32>
    %cst_82 = arith.constant dense<0.000000e+00> : vector<8x8xf32>
    %225 = vector.multi_reduction <add>, %224, %cst_82 [2] : vector<8x8x8xf32> to vector<8x8xf32>
    %226 = vector.shape_cast %225 : vector<8x8xf32> to vector<8x8x1xf32>
    %227 = tpu.reciprocal %226 {approx = true} : vector<8x8x1xf32> -> vector<8x8x1xf32>
    %228 = vector.broadcast %227 : vector<8x8x1xf32> to vector<8x8x8xf32>
    %229 = arith.mulf %224, %228 : vector<8x8x8xf32>
    %230 = arith.truncf %229 : vector<8x8x8xf32> to vector<8x8x8xbf16>
    "tpu.trace_start"() <{level = 10 : i32, message = "gqk,gkd->gqd"}> : () -> ()
    %cst_83 = arith.constant dense<0.000000e+00> : vector<8x8x32xf32>
    %231 = tpu.matmul %230, %215, %cst_83 {dimension_numbers = #tpu.dot_dimension_numbers<[2], [1], [1], [2], [0, 0, 0, 1, 1, 2], [0], [0]>} : vector<8x8x8xbf16>, vector<8x8x32xbf16>, vector<8x8x32xf32> -> vector<8x8x32xf32>
    "tpu.trace_stop"() : () -> ()
    %232 = vector.extract_strided_slice %231 {offsets = [0, 0, 0], sizes = [2, 8, 32], strides = [1, 1, 1]} : vector<8x8x32xf32> to vector<2x8x32xf32>
    %233 = vector.shape_cast %232 : vector<2x8x32xf32> to vector<16x32xf32>
    %234 = vector.extract_strided_slice %231 {offsets = [2, 0, 0], sizes = [2, 8, 32], strides = [1, 1, 1]} : vector<8x8x32xf32> to vector<2x8x32xf32>
    %235 = vector.shape_cast %234 : vector<2x8x32xf32> to vector<16x32xf32>
    %236 = vector.extract_strided_slice %231 {offsets = [4, 0, 0], sizes = [2, 8, 32], strides = [1, 1, 1]} : vector<8x8x32xf32> to vector<2x8x32xf32>
    %237 = vector.shape_cast %236 : vector<2x8x32xf32> to vector<16x32xf32>
    %238 = vector.extract_strided_slice %231 {offsets = [6, 0, 0], sizes = [2, 8, 32], strides = [1, 1, 1]} : vector<8x8x32xf32> to vector<2x8x32xf32>
    %239 = vector.shape_cast %238 : vector<2x8x32xf32> to vector<16x32xf32>
    %240 = tpu.concatenate %233, %235, %237, %239 in 1 : vector<16x32xf32>, vector<16x32xf32>, vector<16x32xf32>, vector<16x32xf32> -> vector<16x128xf32>
    %241 = arith.truncf %240 : vector<16x128xf32> to vector<16x128xbf16>
    %c2_84 = arith.constant 2 : index
    %c0_85 = arith.constant 0 : index
    %c0_86 = arith.constant 0 : index
    %242 = vector.load %arg6[%c2_84, %c0_85, %c0_86] : memref<4x128x128xbf16, #tpu.memory_space<vmem>>, vector<1x128x128xbf16>
    %243 = vector.shape_cast %242 : vector<1x128x128xbf16> to vector<128x128xbf16>
    %cst_87 = arith.constant dense<0.000000e+00> : vector<16x128xf32>
    %244 = tpu.matmul %241, %243, %cst_87 {dimension_numbers = #tpu.dot_dimension_numbers<[1], [0], [0], [1], [0, 0, 1, 1], [], []>} : vector<16x128xbf16>, vector<128x128xbf16>, vector<16x128xf32> -> vector<16x128xf32>
    %c2_88 = arith.constant 2 : index
    %c0_89 = arith.constant 0 : index
    %c0_90 = arith.constant 0 : index
    %245 = vector.load %arg7[%c2_88, %c0_89, %c0_90] : memref<4x1x128xf32, #tpu.memory_space<vmem>>, vector<1x1x128xf32>
    %246 = vector.shape_cast %245 : vector<1x1x128xf32> to vector<1x128xf32>
    %247 = vector.broadcast %246 : vector<1x128xf32> to vector<16x128xf32>
    %248 = arith.addf %244, %247 : vector<16x128xf32>
    %249 = arith.addf %248, %179 : vector<16x128xf32>
    %c2_91 = arith.constant 2 : index
    %c0_92 = arith.constant 0 : index
    %c0_93 = arith.constant 0 : index
    %250 = vector.load %arg8[%c2_91, %c0_92, %c0_93] : memref<4x1x128xf32, #tpu.memory_space<vmem>>, vector<1x1x128xf32>
    %251 = vector.shape_cast %250 : vector<1x1x128xf32> to vector<1x128xf32>
    %c2_94 = arith.constant 2 : index
    %c0_95 = arith.constant 0 : index
    %c0_96 = arith.constant 0 : index
    %252 = vector.load %arg9[%c2_94, %c0_95, %c0_96] : memref<4x1x128xf32, #tpu.memory_space<vmem>>, vector<1x1x128xf32>
    %253 = vector.shape_cast %252 : vector<1x1x128xf32> to vector<1x128xf32>
    %cst_97 = arith.constant dense<0.000000e+00> : vector<16xf32>
    %254 = vector.multi_reduction <add>, %249, %cst_97 [1] : vector<16x128xf32> to vector<16xf32>
    %255 = vector.shape_cast %254 : vector<16xf32> to vector<16x1xf32>
    %cst_98 = arith.constant 1.280000e+02 : f32
    %256 = vector.broadcast %cst_98 : f32 to vector<16x1xf32>
    %257 = arith.divf %255, %256 : vector<16x1xf32>
    %258 = vector.broadcast %257 : vector<16x1xf32> to vector<16x128xf32>
    %259 = arith.subf %249, %258 : vector<16x128xf32>
    %260 = arith.mulf %259, %259 : vector<16x128xf32>
    %cst_99 = arith.constant dense<0.000000e+00> : vector<16xf32>
    %261 = vector.multi_reduction <add>, %260, %cst_99 [1] : vector<16x128xf32> to vector<16xf32>
    %262 = vector.shape_cast %261 : vector<16xf32> to vector<16x1xf32>
    %cst_100 = arith.constant 1.280000e+02 : f32
    %263 = vector.broadcast %cst_100 : f32 to vector<16x1xf32>
    %264 = arith.divf %262, %263 : vector<16x1xf32>
    %cst_101 = arith.constant 9.99999996E-13 : f32
    %265 = vector.broadcast %cst_101 : f32 to vector<16x1xf32>
    %266 = arith.addf %264, %265 : vector<16x1xf32>
    %267 = math.rsqrt %266 : vector<16x1xf32>
    %268 = vector.broadcast %267 : vector<16x1xf32> to vector<16x128xf32>
    %269 = arith.mulf %259, %268 : vector<16x128xf32>
    %270 = vector.broadcast %251 : vector<1x128xf32> to vector<16x128xf32>
    %271 = arith.mulf %269, %270 : vector<16x128xf32>
    %272 = vector.broadcast %253 : vector<1x128xf32> to vector<16x128xf32>
    %273 = arith.addf %271, %272 : vector<16x128xf32>
    %274 = arith.truncf %273 : vector<16x128xf32> to vector<16x128xbf16>
    %c2_102 = arith.constant 2 : index
    %c0_103 = arith.constant 0 : index
    %c0_104 = arith.constant 0 : index
    %275 = vector.load %arg10[%c2_102, %c0_103, %c0_104] : memref<4x128x256xbf16, #tpu.memory_space<vmem>>, vector<1x128x256xbf16>
    %276 = vector.shape_cast %275 : vector<1x128x256xbf16> to vector<128x256xbf16>
    %cst_105 = arith.constant dense<0.000000e+00> : vector<16x256xf32>
    %277 = tpu.matmul %274, %276, %cst_105 {dimension_numbers = #tpu.dot_dimension_numbers<[1], [0], [0], [1], [0, 0, 1, 1], [], []>} : vector<16x128xbf16>, vector<128x256xbf16>, vector<16x256xf32> -> vector<16x256xf32>
    %c2_106 = arith.constant 2 : index
    %c0_107 = arith.constant 0 : index
    %c0_108 = arith.constant 0 : index
    %278 = vector.load %arg11[%c2_106, %c0_107, %c0_108] : memref<4x1x256xf32, #tpu.memory_space<vmem>>, vector<1x1x256xf32>
    %279 = vector.shape_cast %278 : vector<1x1x256xf32> to vector<1x256xf32>
    %280 = vector.broadcast %279 : vector<1x256xf32> to vector<16x256xf32>
    %281 = arith.addf %277, %280 : vector<16x256xf32>
    %282 = arith.mulf %281, %281 : vector<16x256xf32>
    %283 = arith.mulf %281, %282 : vector<16x256xf32>
    %cst_109 = arith.constant 4.471500e-02 : f32
    %284 = vector.broadcast %cst_109 : f32 to vector<16x256xf32>
    %285 = arith.mulf %284, %283 : vector<16x256xf32>
    %286 = arith.addf %281, %285 : vector<16x256xf32>
    %cst_110 = arith.constant 0.797884583 : f32
    %287 = vector.broadcast %cst_110 : f32 to vector<16x256xf32>
    %288 = arith.mulf %287, %286 : vector<16x256xf32>
    %289 = math.tanh %288 : vector<16x256xf32>
    %cst_111 = arith.constant 1.000000e+00 : f32
    %290 = vector.broadcast %cst_111 : f32 to vector<16x256xf32>
    %291 = arith.addf %290, %289 : vector<16x256xf32>
    %cst_112 = arith.constant 5.000000e-01 : f32
    %292 = vector.broadcast %cst_112 : f32 to vector<16x256xf32>
    %293 = arith.mulf %292, %291 : vector<16x256xf32>
    %294 = arith.mulf %281, %293 : vector<16x256xf32>
    %295 = arith.truncf %294 : vector<16x256xf32> to vector<16x256xbf16>
    %c2_113 = arith.constant 2 : index
    %c0_114 = arith.constant 0 : index
    %c0_115 = arith.constant 0 : index
    %296 = vector.load %arg12[%c2_113, %c0_114, %c0_115] : memref<4x256x128xbf16, #tpu.memory_space<vmem>>, vector<1x256x128xbf16>
    %297 = vector.shape_cast %296 : vector<1x256x128xbf16> to vector<256x128xbf16>
    %cst_116 = arith.constant dense<0.000000e+00> : vector<16x128xf32>
    %298 = tpu.matmul %295, %297, %cst_116 {dimension_numbers = #tpu.dot_dimension_numbers<[1], [0], [0], [1], [0, 0, 1, 1], [], []>} : vector<16x256xbf16>, vector<256x128xbf16>, vector<16x128xf32> -> vector<16x128xf32>
    %c2_117 = arith.constant 2 : index
    %c0_118 = arith.constant 0 : index
    %c0_119 = arith.constant 0 : index
    %299 = vector.load %arg13[%c2_117, %c0_118, %c0_119] : memref<4x1x128xf32, #tpu.memory_space<vmem>>, vector<1x1x128xf32>
    %300 = vector.shape_cast %299 : vector<1x1x128xf32> to vector<1x128xf32>
    %301 = vector.broadcast %300 : vector<1x128xf32> to vector<16x128xf32>
    %302 = arith.addf %298, %301 : vector<16x128xf32>
    %303 = arith.addf %302, %273 : vector<16x128xf32>
    %c2_120 = arith.constant 2 : index
    %c0_121 = arith.constant 0 : index
    %c0_122 = arith.constant 0 : index
    %304 = vector.load %arg14[%c2_120, %c0_121, %c0_122] : memref<4x1x128xf32, #tpu.memory_space<vmem>>, vector<1x1x128xf32>
    %305 = vector.shape_cast %304 : vector<1x1x128xf32> to vector<1x128xf32>
    %c2_123 = arith.constant 2 : index
    %c0_124 = arith.constant 0 : index
    %c0_125 = arith.constant 0 : index
    %306 = vector.load %arg15[%c2_123, %c0_124, %c0_125] : memref<4x1x128xf32, #tpu.memory_space<vmem>>, vector<1x1x128xf32>
    %307 = vector.shape_cast %306 : vector<1x1x128xf32> to vector<1x128xf32>
    %cst_126 = arith.constant dense<0.000000e+00> : vector<16xf32>
    %308 = vector.multi_reduction <add>, %303, %cst_126 [1] : vector<16x128xf32> to vector<16xf32>
    %309 = vector.shape_cast %308 : vector<16xf32> to vector<16x1xf32>
    %cst_127 = arith.constant 1.280000e+02 : f32
    %310 = vector.broadcast %cst_127 : f32 to vector<16x1xf32>
    %311 = arith.divf %309, %310 : vector<16x1xf32>
    %312 = vector.broadcast %311 : vector<16x1xf32> to vector<16x128xf32>
    %313 = arith.subf %303, %312 : vector<16x128xf32>
    %314 = arith.mulf %313, %313 : vector<16x128xf32>
    %cst_128 = arith.constant dense<0.000000e+00> : vector<16xf32>
    %315 = vector.multi_reduction <add>, %314, %cst_128 [1] : vector<16x128xf32> to vector<16xf32>
    %316 = vector.shape_cast %315 : vector<16xf32> to vector<16x1xf32>
    %cst_129 = arith.constant 1.280000e+02 : f32
    %317 = vector.broadcast %cst_129 : f32 to vector<16x1xf32>
    %318 = arith.divf %316, %317 : vector<16x1xf32>
    %cst_130 = arith.constant 9.99999996E-13 : f32
    %319 = vector.broadcast %cst_130 : f32 to vector<16x1xf32>
    %320 = arith.addf %318, %319 : vector<16x1xf32>
    %321 = math.rsqrt %320 : vector<16x1xf32>
    %322 = vector.broadcast %321 : vector<16x1xf32> to vector<16x128xf32>
    %323 = arith.mulf %313, %322 : vector<16x128xf32>
    %324 = vector.broadcast %305 : vector<1x128xf32> to vector<16x128xf32>
    %325 = arith.mulf %323, %324 : vector<16x128xf32>
    %326 = vector.broadcast %307 : vector<1x128xf32> to vector<16x128xf32>
    %327 = arith.addf %325, %326 : vector<16x128xf32>
    %328 = vector.extract_strided_slice %327 {offsets = [0, 0], sizes = [1, 128], strides = [1, 1]} : vector<16x128xf32> to vector<1x128xf32>
    %329 = vector.extract_strided_slice %327 {offsets = [8, 0], sizes = [1, 128], strides = [1, 1]} : vector<16x128xf32> to vector<1x128xf32>
    %330 = tpu.concatenate %328, %329 in 0 : vector<1x128xf32>, vector<1x128xf32> -> vector<2x128xf32>
    %331 = arith.truncf %330 : vector<2x128xf32> to vector<2x128xbf16>
    %c0_131 = arith.constant 0 : index
    %c0_132 = arith.constant 0 : index
    %c0_133 = arith.constant 0 : index
    %332 = vector.load %arg16[%c0_131, %c0_132, %c0_133] : memref<2x128x128xbf16, #tpu.memory_space<vmem>>, vector<1x128x128xbf16>
    %333 = vector.shape_cast %332 : vector<1x128x128xbf16> to vector<128x128xbf16>
    %cst_134 = arith.constant dense<0.000000e+00> : vector<2x128xf32>
    %334 = tpu.matmul %331, %333, %cst_134 {dimension_numbers = #tpu.dot_dimension_numbers<[1], [0], [0], [1], [0, 0, 1, 1], [], []>} : vector<2x128xbf16>, vector<128x128xbf16>, vector<2x128xf32> -> vector<2x128xf32>
    %c0_135 = arith.constant 0 : index
    %c0_136 = arith.constant 0 : index
    %c0_137 = arith.constant 0 : index
    %335 = vector.load %arg17[%c0_135, %c0_136, %c0_137] : memref<2x1x128xf32, #tpu.memory_space<vmem>>, vector<1x1x128xf32>
    %336 = vector.shape_cast %335 : vector<1x1x128xf32> to vector<1x128xf32>
    %337 = vector.broadcast %336 : vector<1x128xf32> to vector<2x128xf32>
    %338 = arith.addf %334, %337 : vector<2x128xf32>
    %339 = math.tanh %338 : vector<2x128xf32>
    %c1 = arith.constant 1 : index
    %c0_138 = arith.constant 0 : index
    %c0_139 = arith.constant 0 : index
    %340 = vector.load %arg0[%c1, %c0_138, %c0_139] : memref<2x16x128xf32, #tpu.memory_space<vmem>>, vector<1x16x128xf32>
    %341 = vector.shape_cast %340 : vector<1x16x128xf32> to vector<16x128xf32>
    %c1_140 = arith.constant 1 : index
    %c0_141 = arith.constant 0 : index
    %c0_142 = arith.constant 0 : index
    %342 = vector.load %arg2[%c1_140, %c0_141, %c0_142] : memref<2x1x128xf32, #tpu.memory_space<vmem>>, vector<1x1x128xf32>
    %343 = vector.shape_cast %342 : vector<1x1x128xf32> to vector<1x128xf32>
    %c1_143 = arith.constant 1 : index
    %c0_144 = arith.constant 0 : index
    %c0_145 = arith.constant 0 : index
    %344 = vector.load %arg3[%c1_143, %c0_144, %c0_145] : memref<2x1x128xf32, #tpu.memory_space<vmem>>, vector<1x1x128xf32>
    %345 = vector.shape_cast %344 : vector<1x1x128xf32> to vector<1x128xf32>
    %cst_146 = arith.constant dense<0.000000e+00> : vector<16xf32>
    %346 = vector.multi_reduction <add>, %341, %cst_146 [1] : vector<16x128xf32> to vector<16xf32>
    %347 = vector.shape_cast %346 : vector<16xf32> to vector<16x1xf32>
    %cst_147 = arith.constant 1.280000e+02 : f32
    %348 = vector.broadcast %cst_147 : f32 to vector<16x1xf32>
    %349 = arith.divf %347, %348 : vector<16x1xf32>
    %350 = vector.broadcast %349 : vector<16x1xf32> to vector<16x128xf32>
    %351 = arith.subf %341, %350 : vector<16x128xf32>
    %352 = arith.mulf %351, %351 : vector<16x128xf32>
    %cst_148 = arith.constant dense<0.000000e+00> : vector<16xf32>
    %353 = vector.multi_reduction <add>, %352, %cst_148 [1] : vector<16x128xf32> to vector<16xf32>
    %354 = vector.shape_cast %353 : vector<16xf32> to vector<16x1xf32>
    %cst_149 = arith.constant 1.280000e+02 : f32
    %355 = vector.broadcast %cst_149 : f32 to vector<16x1xf32>
    %356 = arith.divf %354, %355 : vector<16x1xf32>
    %cst_150 = arith.constant 9.99999996E-13 : f32
    %357 = vector.broadcast %cst_150 : f32 to vector<16x1xf32>
    %358 = arith.addf %356, %357 : vector<16x1xf32>
    %359 = math.rsqrt %358 : vector<16x1xf32>
    %360 = vector.broadcast %359 : vector<16x1xf32> to vector<16x128xf32>
    %361 = arith.mulf %351, %360 : vector<16x128xf32>
    %362 = vector.broadcast %343 : vector<1x128xf32> to vector<16x128xf32>
    %363 = arith.mulf %361, %362 : vector<16x128xf32>
    %364 = vector.broadcast %345 : vector<1x128xf32> to vector<16x128xf32>
    %365 = arith.addf %363, %364 : vector<16x128xf32>
    %366 = arith.truncf %365 : vector<16x128xf32> to vector<16x128xbf16>
    %c1_151 = arith.constant 1 : index
    %c0_152 = arith.constant 0 : index
    %c0_153 = arith.constant 0 : index
    %367 = vector.load %arg4[%c1_151, %c0_152, %c0_153] : memref<4x128x384xbf16, #tpu.memory_space<vmem>>, vector<1x128x384xbf16>
    %368 = vector.shape_cast %367 : vector<1x128x384xbf16> to vector<128x384xbf16>
    %cst_154 = arith.constant dense<0.000000e+00> : vector<16x384xf32>
    %369 = tpu.matmul %366, %368, %cst_154 {dimension_numbers = #tpu.dot_dimension_numbers<[1], [0], [0], [1], [0, 0, 1, 1], [], []>} : vector<16x128xbf16>, vector<128x384xbf16>, vector<16x384xf32> -> vector<16x384xf32>
    %c1_155 = arith.constant 1 : index
    %c0_156 = arith.constant 0 : index
    %c0_157 = arith.constant 0 : index
    %370 = vector.load %arg5[%c1_155, %c0_156, %c0_157] : memref<4x1x384xf32, #tpu.memory_space<vmem>>, vector<1x1x384xf32>
    %371 = vector.shape_cast %370 : vector<1x1x384xf32> to vector<1x384xf32>
    %372 = vector.broadcast %371 : vector<1x384xf32> to vector<16x384xf32>
    %373 = arith.addf %369, %372 : vector<16x384xf32>
    %374 = arith.truncf %373 : vector<16x384xf32> to vector<16x384xbf16>
    %375 = vector.extract_strided_slice %374 {offsets = [0, 0], sizes = [16, 32], strides = [1, 1]} : vector<16x384xbf16> to vector<16x32xbf16>
    %376 = vector.shape_cast %375 : vector<16x32xbf16> to vector<2x8x32xbf16>
    %377 = vector.extract_strided_slice %374 {offsets = [0, 32], sizes = [16, 32], strides = [1, 1]} : vector<16x384xbf16> to vector<16x32xbf16>
    %378 = vector.shape_cast %377 : vector<16x32xbf16> to vector<2x8x32xbf16>
    %379 = vector.extract_strided_slice %374 {offsets = [0, 64], sizes = [16, 32], strides = [1, 1]} : vector<16x384xbf16> to vector<16x32xbf16>
    %380 = vector.shape_cast %379 : vector<16x32xbf16> to vector<2x8x32xbf16>
    %381 = vector.extract_strided_slice %374 {offsets = [0, 96], sizes = [16, 32], strides = [1, 1]} : vector<16x384xbf16> to vector<16x32xbf16>
    %382 = vector.shape_cast %381 : vector<16x32xbf16> to vector<2x8x32xbf16>
    %383 = tpu.concatenate %376, %378, %380, %382 in 0 : vector<2x8x32xbf16>, vector<2x8x32xbf16>, vector<2x8x32xbf16>, vector<2x8x32xbf16> -> vector<8x8x32xbf16>
    %384 = vector.extract_strided_slice %374 {offsets = [0, 128], sizes = [16, 32], strides = [1, 1]} : vector<16x384xbf16> to vector<16x32xbf16>
    %385 = vector.shape_cast %384 : vector<16x32xbf16> to vector<2x8x32xbf16>
    %386 = vector.extract_strided_slice %374 {offsets = [0, 160], sizes = [16, 32], strides = [1, 1]} : vector<16x384xbf16> to vector<16x32xbf16>
    %387 = vector.shape_cast %386 : vector<16x32xbf16> to vector<2x8x32xbf16>
    %388 = vector.extract_strided_slice %374 {offsets = [0, 192], sizes = [16, 32], strides = [1, 1]} : vector<16x384xbf16> to vector<16x32xbf16>
    %389 = vector.shape_cast %388 : vector<16x32xbf16> to vector<2x8x32xbf16>
    %390 = vector.extract_strided_slice %374 {offsets = [0, 224], sizes = [16, 32], strides = [1, 1]} : vector<16x384xbf16> to vector<16x32xbf16>
    %391 = vector.shape_cast %390 : vector<16x32xbf16> to vector<2x8x32xbf16>
    %392 = tpu.concatenate %385, %387, %389, %391 in 0 : vector<2x8x32xbf16>, vector<2x8x32xbf16>, vector<2x8x32xbf16>, vector<2x8x32xbf16> -> vector<8x8x32xbf16>
    %393 = vector.extract_strided_slice %374 {offsets = [0, 256], sizes = [16, 32], strides = [1, 1]} : vector<16x384xbf16> to vector<16x32xbf16>
    %394 = vector.shape_cast %393 : vector<16x32xbf16> to vector<2x8x32xbf16>
    %395 = vector.extract_strided_slice %374 {offsets = [0, 288], sizes = [16, 32], strides = [1, 1]} : vector<16x384xbf16> to vector<16x32xbf16>
    %396 = vector.shape_cast %395 : vector<16x32xbf16> to vector<2x8x32xbf16>
    %397 = vector.extract_strided_slice %374 {offsets = [0, 320], sizes = [16, 32], strides = [1, 1]} : vector<16x384xbf16> to vector<16x32xbf16>
    %398 = vector.shape_cast %397 : vector<16x32xbf16> to vector<2x8x32xbf16>
    %399 = vector.extract_strided_slice %374 {offsets = [0, 352], sizes = [16, 32], strides = [1, 1]} : vector<16x384xbf16> to vector<16x32xbf16>
    %400 = vector.shape_cast %399 : vector<16x32xbf16> to vector<2x8x32xbf16>
    %401 = tpu.concatenate %394, %396, %398, %400 in 0 : vector<2x8x32xbf16>, vector<2x8x32xbf16>, vector<2x8x32xbf16>, vector<2x8x32xbf16> -> vector<8x8x32xbf16>
    "tpu.trace_start"() <{level = 10 : i32, message = "gqd,gkd->gqk"}> : () -> ()
    %cst_158 = arith.constant dense<0.000000e+00> : vector<8x8x8xf32>
    %402 = tpu.matmul %383, %392, %cst_158 {dimension_numbers = #tpu.dot_dimension_numbers<[2], [2], [1], [1], [0, 0, 0, 1, 1, 1], [0], [0]>} : vector<8x8x32xbf16>, vector<8x8x32xbf16>, vector<8x8x8xf32> -> vector<8x8x8xf32>
    "tpu.trace_stop"() : () -> ()
    %403 = vector.shape_cast %5 : vector<8x8xf32> to vector<8x1x8xf32>
    %404 = vector.broadcast %403 : vector<8x1x8xf32> to vector<8x8x8xf32>
    %405 = arith.addf %402, %404 : vector<8x8x8xf32>
    %cst_159 = arith.constant dense<0xFF800000> : vector<8x8xf32>
    %406 = vector.multi_reduction <maximumf>, %405, %cst_159 [2] : vector<8x8x8xf32> to vector<8x8xf32>
    %407 = vector.shape_cast %406 : vector<8x8xf32> to vector<8x8x1xf32>
    %408 = vector.broadcast %407 : vector<8x8x1xf32> to vector<8x8x8xf32>
    %409 = arith.subf %405, %408 : vector<8x8x8xf32>
    %410 = math.exp %409 : vector<8x8x8xf32>
    %cst_160 = arith.constant dense<0.000000e+00> : vector<8x8xf32>
    %411 = vector.multi_reduction <add>, %410, %cst_160 [2] : vector<8x8x8xf32> to vector<8x8xf32>
    %412 = vector.shape_cast %411 : vector<8x8xf32> to vector<8x8x1xf32>
    %413 = tpu.reciprocal %412 {approx = true} : vector<8x8x1xf32> -> vector<8x8x1xf32>
    %414 = vector.broadcast %413 : vector<8x8x1xf32> to vector<8x8x8xf32>
    %415 = arith.mulf %410, %414 : vector<8x8x8xf32>
    %416 = arith.truncf %415 : vector<8x8x8xf32> to vector<8x8x8xbf16>
    "tpu.trace_start"() <{level = 10 : i32, message = "gqk,gkd->gqd"}> : () -> ()
    %cst_161 = arith.constant dense<0.000000e+00> : vector<8x8x32xf32>
    %417 = tpu.matmul %416, %401, %cst_161 {dimension_numbers = #tpu.dot_dimension_numbers<[2], [1], [1], [2], [0, 0, 0, 1, 1, 2], [0], [0]>} : vector<8x8x8xbf16>, vector<8x8x32xbf16>, vector<8x8x32xf32> -> vector<8x8x32xf32>
    "tpu.trace_stop"() : () -> ()
    %418 = vector.extract_strided_slice %417 {offsets = [0, 0, 0], sizes = [2, 8, 32], strides = [1, 1, 1]} : vector<8x8x32xf32> to vector<2x8x32xf32>
    %419 = vector.shape_cast %418 : vector<2x8x32xf32> to vector<16x32xf32>
    %420 = vector.extract_strided_slice %417 {offsets = [2, 0, 0], sizes = [2, 8, 32], strides = [1, 1, 1]} : vector<8x8x32xf32> to vector<2x8x32xf32>
    %421 = vector.shape_cast %420 : vector<2x8x32xf32> to vector<16x32xf32>
    %422 = vector.extract_strided_slice %417 {offsets = [4, 0, 0], sizes = [2, 8, 32], strides = [1, 1, 1]} : vector<8x8x32xf32> to vector<2x8x32xf32>
    %423 = vector.shape_cast %422 : vector<2x8x32xf32> to vector<16x32xf32>
    %424 = vector.extract_strided_slice %417 {offsets = [6, 0, 0], sizes = [2, 8, 32], strides = [1, 1, 1]} : vector<8x8x32xf32> to vector<2x8x32xf32>
    %425 = vector.shape_cast %424 : vector<2x8x32xf32> to vector<16x32xf32>
    %426 = tpu.concatenate %419, %421, %423, %425 in 1 : vector<16x32xf32>, vector<16x32xf32>, vector<16x32xf32>, vector<16x32xf32> -> vector<16x128xf32>
    %427 = arith.truncf %426 : vector<16x128xf32> to vector<16x128xbf16>
    %c1_162 = arith.constant 1 : index
    %c0_163 = arith.constant 0 : index
    %c0_164 = arith.constant 0 : index
    %428 = vector.load %arg6[%c1_162, %c0_163, %c0_164] : memref<4x128x128xbf16, #tpu.memory_space<vmem>>, vector<1x128x128xbf16>
    %429 = vector.shape_cast %428 : vector<1x128x128xbf16> to vector<128x128xbf16>
    %cst_165 = arith.constant dense<0.000000e+00> : vector<16x128xf32>
    %430 = tpu.matmul %427, %429, %cst_165 {dimension_numbers = #tpu.dot_dimension_numbers<[1], [0], [0], [1], [0, 0, 1, 1], [], []>} : vector<16x128xbf16>, vector<128x128xbf16>, vector<16x128xf32> -> vector<16x128xf32>
    %c1_166 = arith.constant 1 : index
    %c0_167 = arith.constant 0 : index
    %c0_168 = arith.constant 0 : index
    %431 = vector.load %arg7[%c1_166, %c0_167, %c0_168] : memref<4x1x128xf32, #tpu.memory_space<vmem>>, vector<1x1x128xf32>
    %432 = vector.shape_cast %431 : vector<1x1x128xf32> to vector<1x128xf32>
    %433 = vector.broadcast %432 : vector<1x128xf32> to vector<16x128xf32>
    %434 = arith.addf %430, %433 : vector<16x128xf32>
    %435 = arith.addf %434, %365 : vector<16x128xf32>
    %c1_169 = arith.constant 1 : index
    %c0_170 = arith.constant 0 : index
    %c0_171 = arith.constant 0 : index
    %436 = vector.load %arg8[%c1_169, %c0_170, %c0_171] : memref<4x1x128xf32, #tpu.memory_space<vmem>>, vector<1x1x128xf32>
    %437 = vector.shape_cast %436 : vector<1x1x128xf32> to vector<1x128xf32>
    %c1_172 = arith.constant 1 : index
    %c0_173 = arith.constant 0 : index
    %c0_174 = arith.constant 0 : index
    %438 = vector.load %arg9[%c1_172, %c0_173, %c0_174] : memref<4x1x128xf32, #tpu.memory_space<vmem>>, vector<1x1x128xf32>
    %439 = vector.shape_cast %438 : vector<1x1x128xf32> to vector<1x128xf32>
    %cst_175 = arith.constant dense<0.000000e+00> : vector<16xf32>
    %440 = vector.multi_reduction <add>, %435, %cst_175 [1] : vector<16x128xf32> to vector<16xf32>
    %441 = vector.shape_cast %440 : vector<16xf32> to vector<16x1xf32>
    %cst_176 = arith.constant 1.280000e+02 : f32
    %442 = vector.broadcast %cst_176 : f32 to vector<16x1xf32>
    %443 = arith.divf %441, %442 : vector<16x1xf32>
    %444 = vector.broadcast %443 : vector<16x1xf32> to vector<16x128xf32>
    %445 = arith.subf %435, %444 : vector<16x128xf32>
    %446 = arith.mulf %445, %445 : vector<16x128xf32>
    %cst_177 = arith.constant dense<0.000000e+00> : vector<16xf32>
    %447 = vector.multi_reduction <add>, %446, %cst_177 [1] : vector<16x128xf32> to vector<16xf32>
    %448 = vector.shape_cast %447 : vector<16xf32> to vector<16x1xf32>
    %cst_178 = arith.constant 1.280000e+02 : f32
    %449 = vector.broadcast %cst_178 : f32 to vector<16x1xf32>
    %450 = arith.divf %448, %449 : vector<16x1xf32>
    %cst_179 = arith.constant 9.99999996E-13 : f32
    %451 = vector.broadcast %cst_179 : f32 to vector<16x1xf32>
    %452 = arith.addf %450, %451 : vector<16x1xf32>
    %453 = math.rsqrt %452 : vector<16x1xf32>
    %454 = vector.broadcast %453 : vector<16x1xf32> to vector<16x128xf32>
    %455 = arith.mulf %445, %454 : vector<16x128xf32>
    %456 = vector.broadcast %437 : vector<1x128xf32> to vector<16x128xf32>
    %457 = arith.mulf %455, %456 : vector<16x128xf32>
    %458 = vector.broadcast %439 : vector<1x128xf32> to vector<16x128xf32>
    %459 = arith.addf %457, %458 : vector<16x128xf32>
    %460 = arith.truncf %459 : vector<16x128xf32> to vector<16x128xbf16>
    %c1_180 = arith.constant 1 : index
    %c0_181 = arith.constant 0 : index
    %c0_182 = arith.constant 0 : index
    %461 = vector.load %arg10[%c1_180, %c0_181, %c0_182] : memref<4x128x256xbf16, #tpu.memory_space<vmem>>, vector<1x128x256xbf16>
    %462 = vector.shape_cast %461 : vector<1x128x256xbf16> to vector<128x256xbf16>
    %cst_183 = arith.constant dense<0.000000e+00> : vector<16x256xf32>
    %463 = tpu.matmul %460, %462, %cst_183 {dimension_numbers = #tpu.dot_dimension_numbers<[1], [0], [0], [1], [0, 0, 1, 1], [], []>} : vector<16x128xbf16>, vector<128x256xbf16>, vector<16x256xf32> -> vector<16x256xf32>
    %c1_184 = arith.constant 1 : index
    %c0_185 = arith.constant 0 : index
    %c0_186 = arith.constant 0 : index
    %464 = vector.load %arg11[%c1_184, %c0_185, %c0_186] : memref<4x1x256xf32, #tpu.memory_space<vmem>>, vector<1x1x256xf32>
    %465 = vector.shape_cast %464 : vector<1x1x256xf32> to vector<1x256xf32>
    %466 = vector.broadcast %465 : vector<1x256xf32> to vector<16x256xf32>
    %467 = arith.addf %463, %466 : vector<16x256xf32>
    %468 = arith.mulf %467, %467 : vector<16x256xf32>
    %469 = arith.mulf %467, %468 : vector<16x256xf32>
    %cst_187 = arith.constant 4.471500e-02 : f32
    %470 = vector.broadcast %cst_187 : f32 to vector<16x256xf32>
    %471 = arith.mulf %470, %469 : vector<16x256xf32>
    %472 = arith.addf %467, %471 : vector<16x256xf32>
    %cst_188 = arith.constant 0.797884583 : f32
    %473 = vector.broadcast %cst_188 : f32 to vector<16x256xf32>
    %474 = arith.mulf %473, %472 : vector<16x256xf32>
    %475 = math.tanh %474 : vector<16x256xf32>
    %cst_189 = arith.constant 1.000000e+00 : f32
    %476 = vector.broadcast %cst_189 : f32 to vector<16x256xf32>
    %477 = arith.addf %476, %475 : vector<16x256xf32>
    %cst_190 = arith.constant 5.000000e-01 : f32
    %478 = vector.broadcast %cst_190 : f32 to vector<16x256xf32>
    %479 = arith.mulf %478, %477 : vector<16x256xf32>
    %480 = arith.mulf %467, %479 : vector<16x256xf32>
    %481 = arith.truncf %480 : vector<16x256xf32> to vector<16x256xbf16>
    %c1_191 = arith.constant 1 : index
    %c0_192 = arith.constant 0 : index
    %c0_193 = arith.constant 0 : index
    %482 = vector.load %arg12[%c1_191, %c0_192, %c0_193] : memref<4x256x128xbf16, #tpu.memory_space<vmem>>, vector<1x256x128xbf16>
    %483 = vector.shape_cast %482 : vector<1x256x128xbf16> to vector<256x128xbf16>
    %cst_194 = arith.constant dense<0.000000e+00> : vector<16x128xf32>
    %484 = tpu.matmul %481, %483, %cst_194 {dimension_numbers = #tpu.dot_dimension_numbers<[1], [0], [0], [1], [0, 0, 1, 1], [], []>} : vector<16x256xbf16>, vector<256x128xbf16>, vector<16x128xf32> -> vector<16x128xf32>
    %c1_195 = arith.constant 1 : index
    %c0_196 = arith.constant 0 : index
    %c0_197 = arith.constant 0 : index
    %485 = vector.load %arg13[%c1_195, %c0_196, %c0_197] : memref<4x1x128xf32, #tpu.memory_space<vmem>>, vector<1x1x128xf32>
    %486 = vector.shape_cast %485 : vector<1x1x128xf32> to vector<1x128xf32>
    %487 = vector.broadcast %486 : vector<1x128xf32> to vector<16x128xf32>
    %488 = arith.addf %484, %487 : vector<16x128xf32>
    %489 = arith.addf %488, %459 : vector<16x128xf32>
    %c1_198 = arith.constant 1 : index
    %c0_199 = arith.constant 0 : index
    %c0_200 = arith.constant 0 : index
    %490 = vector.load %arg14[%c1_198, %c0_199, %c0_200] : memref<4x1x128xf32, #tpu.memory_space<vmem>>, vector<1x1x128xf32>
    %491 = vector.shape_cast %490 : vector<1x1x128xf32> to vector<1x128xf32>
    %c1_201 = arith.constant 1 : index
    %c0_202 = arith.constant 0 : index
    %c0_203 = arith.constant 0 : index
    %492 = vector.load %arg15[%c1_201, %c0_202, %c0_203] : memref<4x1x128xf32, #tpu.memory_space<vmem>>, vector<1x1x128xf32>
    %493 = vector.shape_cast %492 : vector<1x1x128xf32> to vector<1x128xf32>
    %cst_204 = arith.constant dense<0.000000e+00> : vector<16xf32>
    %494 = vector.multi_reduction <add>, %489, %cst_204 [1] : vector<16x128xf32> to vector<16xf32>
    %495 = vector.shape_cast %494 : vector<16xf32> to vector<16x1xf32>
    %cst_205 = arith.constant 1.280000e+02 : f32
    %496 = vector.broadcast %cst_205 : f32 to vector<16x1xf32>
    %497 = arith.divf %495, %496 : vector<16x1xf32>
    %498 = vector.broadcast %497 : vector<16x1xf32> to vector<16x128xf32>
    %499 = arith.subf %489, %498 : vector<16x128xf32>
    %500 = arith.mulf %499, %499 : vector<16x128xf32>
    %cst_206 = arith.constant dense<0.000000e+00> : vector<16xf32>
    %501 = vector.multi_reduction <add>, %500, %cst_206 [1] : vector<16x128xf32> to vector<16xf32>
    %502 = vector.shape_cast %501 : vector<16xf32> to vector<16x1xf32>
    %cst_207 = arith.constant 1.280000e+02 : f32
    %503 = vector.broadcast %cst_207 : f32 to vector<16x1xf32>
    %504 = arith.divf %502, %503 : vector<16x1xf32>
    %cst_208 = arith.constant 9.99999996E-13 : f32
    %505 = vector.broadcast %cst_208 : f32 to vector<16x1xf32>
    %506 = arith.addf %504, %505 : vector<16x1xf32>
    %507 = math.rsqrt %506 : vector<16x1xf32>
    %508 = vector.broadcast %507 : vector<16x1xf32> to vector<16x128xf32>
    %509 = arith.mulf %499, %508 : vector<16x128xf32>
    %510 = vector.broadcast %491 : vector<1x128xf32> to vector<16x128xf32>
    %511 = arith.mulf %509, %510 : vector<16x128xf32>
    %512 = vector.broadcast %493 : vector<1x128xf32> to vector<16x128xf32>
    %513 = arith.addf %511, %512 : vector<16x128xf32>
    %514 = arith.truncf %513 : vector<16x128xf32> to vector<16x128xbf16>
    %c3 = arith.constant 3 : index
    %c0_209 = arith.constant 0 : index
    %c0_210 = arith.constant 0 : index
    %515 = vector.load %arg4[%c3, %c0_209, %c0_210] : memref<4x128x384xbf16, #tpu.memory_space<vmem>>, vector<1x128x384xbf16>
    %516 = vector.shape_cast %515 : vector<1x128x384xbf16> to vector<128x384xbf16>
    %cst_211 = arith.constant dense<0.000000e+00> : vector<16x384xf32>
    %517 = tpu.matmul %514, %516, %cst_211 {dimension_numbers = #tpu.dot_dimension_numbers<[1], [0], [0], [1], [0, 0, 1, 1], [], []>} : vector<16x128xbf16>, vector<128x384xbf16>, vector<16x384xf32> -> vector<16x384xf32>
    %c3_212 = arith.constant 3 : index
    %c0_213 = arith.constant 0 : index
    %c0_214 = arith.constant 0 : index
    %518 = vector.load %arg5[%c3_212, %c0_213, %c0_214] : memref<4x1x384xf32, #tpu.memory_space<vmem>>, vector<1x1x384xf32>
    %519 = vector.shape_cast %518 : vector<1x1x384xf32> to vector<1x384xf32>
    %520 = vector.broadcast %519 : vector<1x384xf32> to vector<16x384xf32>
    %521 = arith.addf %517, %520 : vector<16x384xf32>
    %522 = arith.truncf %521 : vector<16x384xf32> to vector<16x384xbf16>
    %523 = vector.extract_strided_slice %522 {offsets = [0, 0], sizes = [16, 32], strides = [1, 1]} : vector<16x384xbf16> to vector<16x32xbf16>
    %524 = vector.shape_cast %523 : vector<16x32xbf16> to vector<2x8x32xbf16>
    %525 = vector.extract_strided_slice %522 {offsets = [0, 32], sizes = [16, 32], strides = [1, 1]} : vector<16x384xbf16> to vector<16x32xbf16>
    %526 = vector.shape_cast %525 : vector<16x32xbf16> to vector<2x8x32xbf16>
    %527 = vector.extract_strided_slice %522 {offsets = [0, 64], sizes = [16, 32], strides = [1, 1]} : vector<16x384xbf16> to vector<16x32xbf16>
    %528 = vector.shape_cast %527 : vector<16x32xbf16> to vector<2x8x32xbf16>
    %529 = vector.extract_strided_slice %522 {offsets = [0, 96], sizes = [16, 32], strides = [1, 1]} : vector<16x384xbf16> to vector<16x32xbf16>
    %530 = vector.shape_cast %529 : vector<16x32xbf16> to vector<2x8x32xbf16>
    %531 = tpu.concatenate %524, %526, %528, %530 in 0 : vector<2x8x32xbf16>, vector<2x8x32xbf16>, vector<2x8x32xbf16>, vector<2x8x32xbf16> -> vector<8x8x32xbf16>
    %532 = vector.extract_strided_slice %522 {offsets = [0, 128], sizes = [16, 32], strides = [1, 1]} : vector<16x384xbf16> to vector<16x32xbf16>
    %533 = vector.shape_cast %532 : vector<16x32xbf16> to vector<2x8x32xbf16>
    %534 = vector.extract_strided_slice %522 {offsets = [0, 160], sizes = [16, 32], strides = [1, 1]} : vector<16x384xbf16> to vector<16x32xbf16>
    %535 = vector.shape_cast %534 : vector<16x32xbf16> to vector<2x8x32xbf16>
    %536 = vector.extract_strided_slice %522 {offsets = [0, 192], sizes = [16, 32], strides = [1, 1]} : vector<16x384xbf16> to vector<16x32xbf16>
    %537 = vector.shape_cast %536 : vector<16x32xbf16> to vector<2x8x32xbf16>
    %538 = vector.extract_strided_slice %522 {offsets = [0, 224], sizes = [16, 32], strides = [1, 1]} : vector<16x384xbf16> to vector<16x32xbf16>
    %539 = vector.shape_cast %538 : vector<16x32xbf16> to vector<2x8x32xbf16>
    %540 = tpu.concatenate %533, %535, %537, %539 in 0 : vector<2x8x32xbf16>, vector<2x8x32xbf16>, vector<2x8x32xbf16>, vector<2x8x32xbf16> -> vector<8x8x32xbf16>
    %541 = vector.extract_strided_slice %522 {offsets = [0, 256], sizes = [16, 32], strides = [1, 1]} : vector<16x384xbf16> to vector<16x32xbf16>
    %542 = vector.shape_cast %541 : vector<16x32xbf16> to vector<2x8x32xbf16>
    %543 = vector.extract_strided_slice %522 {offsets = [0, 288], sizes = [16, 32], strides = [1, 1]} : vector<16x384xbf16> to vector<16x32xbf16>
    %544 = vector.shape_cast %543 : vector<16x32xbf16> to vector<2x8x32xbf16>
    %545 = vector.extract_strided_slice %522 {offsets = [0, 320], sizes = [16, 32], strides = [1, 1]} : vector<16x384xbf16> to vector<16x32xbf16>
    %546 = vector.shape_cast %545 : vector<16x32xbf16> to vector<2x8x32xbf16>
    %547 = vector.extract_strided_slice %522 {offsets = [0, 352], sizes = [16, 32], strides = [1, 1]} : vector<16x384xbf16> to vector<16x32xbf16>
    %548 = vector.shape_cast %547 : vector<16x32xbf16> to vector<2x8x32xbf16>
    %549 = tpu.concatenate %542, %544, %546, %548 in 0 : vector<2x8x32xbf16>, vector<2x8x32xbf16>, vector<2x8x32xbf16>, vector<2x8x32xbf16> -> vector<8x8x32xbf16>
    "tpu.trace_start"() <{level = 10 : i32, message = "gqd,gkd->gqk"}> : () -> ()
    %cst_215 = arith.constant dense<0.000000e+00> : vector<8x8x8xf32>
    %550 = tpu.matmul %531, %540, %cst_215 {dimension_numbers = #tpu.dot_dimension_numbers<[2], [2], [1], [1], [0, 0, 0, 1, 1, 1], [0], [0]>} : vector<8x8x32xbf16>, vector<8x8x32xbf16>, vector<8x8x8xf32> -> vector<8x8x8xf32>
    "tpu.trace_stop"() : () -> ()
    %551 = vector.shape_cast %5 : vector<8x8xf32> to vector<8x1x8xf32>
    %552 = vector.broadcast %551 : vector<8x1x8xf32> to vector<8x8x8xf32>
    %553 = arith.addf %550, %552 : vector<8x8x8xf32>
    %cst_216 = arith.constant dense<0xFF800000> : vector<8x8xf32>
    %554 = vector.multi_reduction <maximumf>, %553, %cst_216 [2] : vector<8x8x8xf32> to vector<8x8xf32>
    %555 = vector.shape_cast %554 : vector<8x8xf32> to vector<8x8x1xf32>
    %556 = vector.broadcast %555 : vector<8x8x1xf32> to vector<8x8x8xf32>
    %557 = arith.subf %553, %556 : vector<8x8x8xf32>
    %558 = math.exp %557 : vector<8x8x8xf32>
    %cst_217 = arith.constant dense<0.000000e+00> : vector<8x8xf32>
    %559 = vector.multi_reduction <add>, %558, %cst_217 [2] : vector<8x8x8xf32> to vector<8x8xf32>
    %560 = vector.shape_cast %559 : vector<8x8xf32> to vector<8x8x1xf32>
    %561 = tpu.reciprocal %560 {approx = true} : vector<8x8x1xf32> -> vector<8x8x1xf32>
    %562 = vector.broadcast %561 : vector<8x8x1xf32> to vector<8x8x8xf32>
    %563 = arith.mulf %558, %562 : vector<8x8x8xf32>
    %564 = arith.truncf %563 : vector<8x8x8xf32> to vector<8x8x8xbf16>
    "tpu.trace_start"() <{level = 10 : i32, message = "gqk,gkd->gqd"}> : () -> ()
    %cst_218 = arith.constant dense<0.000000e+00> : vector<8x8x32xf32>
    %565 = tpu.matmul %564, %549, %cst_218 {dimension_numbers = #tpu.dot_dimension_numbers<[2], [1], [1], [2], [0, 0, 0, 1, 1, 2], [0], [0]>} : vector<8x8x8xbf16>, vector<8x8x32xbf16>, vector<8x8x32xf32> -> vector<8x8x32xf32>
    "tpu.trace_stop"() : () -> ()
    %566 = vector.extract_strided_slice %565 {offsets = [0, 0, 0], sizes = [2, 8, 32], strides = [1, 1, 1]} : vector<8x8x32xf32> to vector<2x8x32xf32>
    %567 = vector.shape_cast %566 : vector<2x8x32xf32> to vector<16x32xf32>
    %568 = vector.extract_strided_slice %565 {offsets = [2, 0, 0], sizes = [2, 8, 32], strides = [1, 1, 1]} : vector<8x8x32xf32> to vector<2x8x32xf32>
    %569 = vector.shape_cast %568 : vector<2x8x32xf32> to vector<16x32xf32>
    %570 = vector.extract_strided_slice %565 {offsets = [4, 0, 0], sizes = [2, 8, 32], strides = [1, 1, 1]} : vector<8x8x32xf32> to vector<2x8x32xf32>
    %571 = vector.shape_cast %570 : vector<2x8x32xf32> to vector<16x32xf32>
    %572 = vector.extract_strided_slice %565 {offsets = [6, 0, 0], sizes = [2, 8, 32], strides = [1, 1, 1]} : vector<8x8x32xf32> to vector<2x8x32xf32>
    %573 = vector.shape_cast %572 : vector<2x8x32xf32> to vector<16x32xf32>
    %574 = tpu.concatenate %567, %569, %571, %573 in 1 : vector<16x32xf32>, vector<16x32xf32>, vector<16x32xf32>, vector<16x32xf32> -> vector<16x128xf32>
    %575 = arith.truncf %574 : vector<16x128xf32> to vector<16x128xbf16>
    %c3_219 = arith.constant 3 : index
    %c0_220 = arith.constant 0 : index
    %c0_221 = arith.constant 0 : index
    %576 = vector.load %arg6[%c3_219, %c0_220, %c0_221] : memref<4x128x128xbf16, #tpu.memory_space<vmem>>, vector<1x128x128xbf16>
    %577 = vector.shape_cast %576 : vector<1x128x128xbf16> to vector<128x128xbf16>
    %cst_222 = arith.constant dense<0.000000e+00> : vector<16x128xf32>
    %578 = tpu.matmul %575, %577, %cst_222 {dimension_numbers = #tpu.dot_dimension_numbers<[1], [0], [0], [1], [0, 0, 1, 1], [], []>} : vector<16x128xbf16>, vector<128x128xbf16>, vector<16x128xf32> -> vector<16x128xf32>
    %c3_223 = arith.constant 3 : index
    %c0_224 = arith.constant 0 : index
    %c0_225 = arith.constant 0 : index
    %579 = vector.load %arg7[%c3_223, %c0_224, %c0_225] : memref<4x1x128xf32, #tpu.memory_space<vmem>>, vector<1x1x128xf32>
    %580 = vector.shape_cast %579 : vector<1x1x128xf32> to vector<1x128xf32>
    %581 = vector.broadcast %580 : vector<1x128xf32> to vector<16x128xf32>
    %582 = arith.addf %578, %581 : vector<16x128xf32>
    %583 = arith.addf %582, %513 : vector<16x128xf32>
    %c3_226 = arith.constant 3 : index
    %c0_227 = arith.constant 0 : index
    %c0_228 = arith.constant 0 : index
    %584 = vector.load %arg8[%c3_226, %c0_227, %c0_228] : memref<4x1x128xf32, #tpu.memory_space<vmem>>, vector<1x1x128xf32>
    %585 = vector.shape_cast %584 : vector<1x1x128xf32> to vector<1x128xf32>
    %c3_229 = arith.constant 3 : index
    %c0_230 = arith.constant 0 : index
    %c0_231 = arith.constant 0 : index
    %586 = vector.load %arg9[%c3_229, %c0_230, %c0_231] : memref<4x1x128xf32, #tpu.memory_space<vmem>>, vector<1x1x128xf32>
    %587 = vector.shape_cast %586 : vector<1x1x128xf32> to vector<1x128xf32>
    %cst_232 = arith.constant dense<0.000000e+00> : vector<16xf32>
    %588 = vector.multi_reduction <add>, %583, %cst_232 [1] : vector<16x128xf32> to vector<16xf32>
    %589 = vector.shape_cast %588 : vector<16xf32> to vector<16x1xf32>
    %cst_233 = arith.constant 1.280000e+02 : f32
    %590 = vector.broadcast %cst_233 : f32 to vector<16x1xf32>
    %591 = arith.divf %589, %590 : vector<16x1xf32>
    %592 = vector.broadcast %591 : vector<16x1xf32> to vector<16x128xf32>
    %593 = arith.subf %583, %592 : vector<16x128xf32>
    %594 = arith.mulf %593, %593 : vector<16x128xf32>
    %cst_234 = arith.constant dense<0.000000e+00> : vector<16xf32>
    %595 = vector.multi_reduction <add>, %594, %cst_234 [1] : vector<16x128xf32> to vector<16xf32>
    %596 = vector.shape_cast %595 : vector<16xf32> to vector<16x1xf32>
    %cst_235 = arith.constant 1.280000e+02 : f32
    %597 = vector.broadcast %cst_235 : f32 to vector<16x1xf32>
    %598 = arith.divf %596, %597 : vector<16x1xf32>
    %cst_236 = arith.constant 9.99999996E-13 : f32
    %599 = vector.broadcast %cst_236 : f32 to vector<16x1xf32>
    %600 = arith.addf %598, %599 : vector<16x1xf32>
    %601 = math.rsqrt %600 : vector<16x1xf32>
    %602 = vector.broadcast %601 : vector<16x1xf32> to vector<16x128xf32>
    %603 = arith.mulf %593, %602 : vector<16x128xf32>
    %604 = vector.broadcast %585 : vector<1x128xf32> to vector<16x128xf32>
    %605 = arith.mulf %603, %604 : vector<16x128xf32>
    %606 = vector.broadcast %587 : vector<1x128xf32> to vector<16x128xf32>
    %607 = arith.addf %605, %606 : vector<16x128xf32>
    %608 = arith.truncf %607 : vector<16x128xf32> to vector<16x128xbf16>
    %c3_237 = arith.constant 3 : index
    %c0_238 = arith.constant 0 : index
    %c0_239 = arith.constant 0 : index
    %609 = vector.load %arg10[%c3_237, %c0_238, %c0_239] : memref<4x128x256xbf16, #tpu.memory_space<vmem>>, vector<1x128x256xbf16>
    %610 = vector.shape_cast %609 : vector<1x128x256xbf16> to vector<128x256xbf16>
    %cst_240 = arith.constant dense<0.000000e+00> : vector<16x256xf32>
    %611 = tpu.matmul %608, %610, %cst_240 {dimension_numbers = #tpu.dot_dimension_numbers<[1], [0], [0], [1], [0, 0, 1, 1], [], []>} : vector<16x128xbf16>, vector<128x256xbf16>, vector<16x256xf32> -> vector<16x256xf32>
    %c3_241 = arith.constant 3 : index
    %c0_242 = arith.constant 0 : index
    %c0_243 = arith.constant 0 : index
    %612 = vector.load %arg11[%c3_241, %c0_242, %c0_243] : memref<4x1x256xf32, #tpu.memory_space<vmem>>, vector<1x1x256xf32>
    %613 = vector.shape_cast %612 : vector<1x1x256xf32> to vector<1x256xf32>
    %614 = vector.broadcast %613 : vector<1x256xf32> to vector<16x256xf32>
    %615 = arith.addf %611, %614 : vector<16x256xf32>
    %616 = arith.mulf %615, %615 : vector<16x256xf32>
    %617 = arith.mulf %615, %616 : vector<16x256xf32>
    %cst_244 = arith.constant 4.471500e-02 : f32
    %618 = vector.broadcast %cst_244 : f32 to vector<16x256xf32>
    %619 = arith.mulf %618, %617 : vector<16x256xf32>
    %620 = arith.addf %615, %619 : vector<16x256xf32>
    %cst_245 = arith.constant 0.797884583 : f32
    %621 = vector.broadcast %cst_245 : f32 to vector<16x256xf32>
    %622 = arith.mulf %621, %620 : vector<16x256xf32>
    %623 = math.tanh %622 : vector<16x256xf32>
    %cst_246 = arith.constant 1.000000e+00 : f32
    %624 = vector.broadcast %cst_246 : f32 to vector<16x256xf32>
    %625 = arith.addf %624, %623 : vector<16x256xf32>
    %cst_247 = arith.constant 5.000000e-01 : f32
    %626 = vector.broadcast %cst_247 : f32 to vector<16x256xf32>
    %627 = arith.mulf %626, %625 : vector<16x256xf32>
    %628 = arith.mulf %615, %627 : vector<16x256xf32>
    %629 = arith.truncf %628 : vector<16x256xf32> to vector<16x256xbf16>
    %c3_248 = arith.constant 3 : index
    %c0_249 = arith.constant 0 : index
    %c0_250 = arith.constant 0 : index
    %630 = vector.load %arg12[%c3_248, %c0_249, %c0_250] : memref<4x256x128xbf16, #tpu.memory_space<vmem>>, vector<1x256x128xbf16>
    %631 = vector.shape_cast %630 : vector<1x256x128xbf16> to vector<256x128xbf16>
    %cst_251 = arith.constant dense<0.000000e+00> : vector<16x128xf32>
    %632 = tpu.matmul %629, %631, %cst_251 {dimension_numbers = #tpu.dot_dimension_numbers<[1], [0], [0], [1], [0, 0, 1, 1], [], []>} : vector<16x256xbf16>, vector<256x128xbf16>, vector<16x128xf32> -> vector<16x128xf32>
    %c3_252 = arith.constant 3 : index
    %c0_253 = arith.constant 0 : index
    %c0_254 = arith.constant 0 : index
    %633 = vector.load %arg13[%c3_252, %c0_253, %c0_254] : memref<4x1x128xf32, #tpu.memory_space<vmem>>, vector<1x1x128xf32>
    %634 = vector.shape_cast %633 : vector<1x1x128xf32> to vector<1x128xf32>
    %635 = vector.broadcast %634 : vector<1x128xf32> to vector<16x128xf32>
    %636 = arith.addf %632, %635 : vector<16x128xf32>
    %637 = arith.addf %636, %607 : vector<16x128xf32>
    %c3_255 = arith.constant 3 : index
    %c0_256 = arith.constant 0 : index
    %c0_257 = arith.constant 0 : index
    %638 = vector.load %arg14[%c3_255, %c0_256, %c0_257] : memref<4x1x128xf32, #tpu.memory_space<vmem>>, vector<1x1x128xf32>
    %639 = vector.shape_cast %638 : vector<1x1x128xf32> to vector<1x128xf32>
    %c3_258 = arith.constant 3 : index
    %c0_259 = arith.constant 0 : index
    %c0_260 = arith.constant 0 : index
    %640 = vector.load %arg15[%c3_258, %c0_259, %c0_260] : memref<4x1x128xf32, #tpu.memory_space<vmem>>, vector<1x1x128xf32>
    %641 = vector.shape_cast %640 : vector<1x1x128xf32> to vector<1x128xf32>
    %cst_261 = arith.constant dense<0.000000e+00> : vector<16xf32>
    %642 = vector.multi_reduction <add>, %637, %cst_261 [1] : vector<16x128xf32> to vector<16xf32>
    %643 = vector.shape_cast %642 : vector<16xf32> to vector<16x1xf32>
    %cst_262 = arith.constant 1.280000e+02 : f32
    %644 = vector.broadcast %cst_262 : f32 to vector<16x1xf32>
    %645 = arith.divf %643, %644 : vector<16x1xf32>
    %646 = vector.broadcast %645 : vector<16x1xf32> to vector<16x128xf32>
    %647 = arith.subf %637, %646 : vector<16x128xf32>
    %648 = arith.mulf %647, %647 : vector<16x128xf32>
    %cst_263 = arith.constant dense<0.000000e+00> : vector<16xf32>
    %649 = vector.multi_reduction <add>, %648, %cst_263 [1] : vector<16x128xf32> to vector<16xf32>
    %650 = vector.shape_cast %649 : vector<16xf32> to vector<16x1xf32>
    %cst_264 = arith.constant 1.280000e+02 : f32
    %651 = vector.broadcast %cst_264 : f32 to vector<16x1xf32>
    %652 = arith.divf %650, %651 : vector<16x1xf32>
    %cst_265 = arith.constant 9.99999996E-13 : f32
    %653 = vector.broadcast %cst_265 : f32 to vector<16x1xf32>
    %654 = arith.addf %652, %653 : vector<16x1xf32>
    %655 = math.rsqrt %654 : vector<16x1xf32>
    %656 = vector.broadcast %655 : vector<16x1xf32> to vector<16x128xf32>
    %657 = arith.mulf %647, %656 : vector<16x128xf32>
    %658 = vector.broadcast %639 : vector<1x128xf32> to vector<16x128xf32>
    %659 = arith.mulf %657, %658 : vector<16x128xf32>
    %660 = vector.broadcast %641 : vector<1x128xf32> to vector<16x128xf32>
    %661 = arith.addf %659, %660 : vector<16x128xf32>
    %662 = vector.extract_strided_slice %661 {offsets = [0, 0], sizes = [1, 128], strides = [1, 1]} : vector<16x128xf32> to vector<1x128xf32>
    %663 = vector.extract_strided_slice %661 {offsets = [8, 0], sizes = [1, 128], strides = [1, 1]} : vector<16x128xf32> to vector<1x128xf32>
    %664 = tpu.concatenate %662, %663 in 0 : vector<1x128xf32>, vector<1x128xf32> -> vector<2x128xf32>
    %665 = arith.truncf %664 : vector<2x128xf32> to vector<2x128xbf16>
    %c1_266 = arith.constant 1 : index
    %c0_267 = arith.constant 0 : index
    %c0_268 = arith.constant 0 : index
    %666 = vector.load %arg16[%c1_266, %c0_267, %c0_268] : memref<2x128x128xbf16, #tpu.memory_space<vmem>>, vector<1x128x128xbf16>
    %667 = vector.shape_cast %666 : vector<1x128x128xbf16> to vector<128x128xbf16>
    %cst_269 = arith.constant dense<0.000000e+00> : vector<2x128xf32>
    %668 = tpu.matmul %665, %667, %cst_269 {dimension_numbers = #tpu.dot_dimension_numbers<[1], [0], [0], [1], [0, 0, 1, 1], [], []>} : vector<2x128xbf16>, vector<128x128xbf16>, vector<2x128xf32> -> vector<2x128xf32>
    %c1_270 = arith.constant 1 : index
    %c0_271 = arith.constant 0 : index
    %c0_272 = arith.constant 0 : index
    %669 = vector.load %arg17[%c1_270, %c0_271, %c0_272] : memref<2x1x128xf32, #tpu.memory_space<vmem>>, vector<1x1x128xf32>
    %670 = vector.shape_cast %669 : vector<1x1x128xf32> to vector<1x128xf32>
    %671 = vector.broadcast %670 : vector<1x128xf32> to vector<2x128xf32>
    %672 = arith.addf %668, %671 : vector<2x128xf32>
    %673 = math.tanh %672 : vector<2x128xf32>
    %674 = arith.maximumf %339, %673 : vector<2x128xf32>
    %675 = arith.truncf %674 : vector<2x128xf32> to vector<2x128xbf16>
    %c0_273 = arith.constant 0 : index
    %c0_274 = arith.constant 0 : index
    %676 = vector.load %arg18[%c0_273, %c0_274] : memref<128x128xbf16, #tpu.memory_space<vmem>>, vector<128x128xbf16>
    %cst_275 = arith.constant dense<0.000000e+00> : vector<2x128xf32>
    %677 = tpu.matmul %675, %676, %cst_275 {dimension_numbers = #tpu.dot_dimension_numbers<[1], [0], [0], [1], [0, 0, 1, 1], [], []>} : vector<2x128xbf16>, vector<128x128xbf16>, vector<2x128xf32> -> vector<2x128xf32>
    %c0_276 = arith.constant 0 : index
    %c0_277 = arith.constant 0 : index
    %678 = vector.load %arg19[%c0_276, %c0_277] : memref<1x128xf32, #tpu.memory_space<vmem>>, vector<1x128xf32>
    %679 = vector.broadcast %678 : vector<1x128xf32> to vector<2x128xf32>
    %680 = arith.addf %677, %679 : vector<2x128xf32>
    %cst_278 = arith.constant dense<0xFF800000> : vector<2xf32>
    %681 = vector.multi_reduction <maximumf>, %680, %cst_278 [1] : vector<2x128xf32> to vector<2xf32>
    %682 = vector.shape_cast %681 : vector<2xf32> to vector<2x1xf32>
    %683 = vector.broadcast %682 : vector<2x1xf32> to vector<2x128xf32>
    %684 = arith.subf %680, %683 : vector<2x128xf32>
    %685 = math.exp %684 : vector<2x128xf32>
    %cst_279 = arith.constant dense<0.000000e+00> : vector<2xf32>
    %686 = vector.multi_reduction <add>, %685, %cst_279 [1] : vector<2x128xf32> to vector<2xf32>
    %687 = vector.shape_cast %686 : vector<2xf32> to vector<2x1xf32>
    %688 = math.log %687 : vector<2x1xf32>
    %689 = arith.addf %682, %688 : vector<2x1xf32>
    %c0_280 = arith.constant 0 : index
    %c0_281 = arith.constant 0 : index
    %690 = vector.load %arg20[%c0_280, %c0_281] : memref<2x128xf32, #tpu.memory_space<vmem>>, vector<2x128xf32>
    %691 = arith.mulf %680, %690 : vector<2x128xf32>
    %cst_282 = arith.constant dense<0.000000e+00> : vector<2xf32>
    %692 = vector.multi_reduction <add>, %691, %cst_282 [1] : vector<2x128xf32> to vector<2xf32>
    %693 = vector.shape_cast %692 : vector<2xf32> to vector<2x1xf32>
    %694 = arith.subf %689, %693 : vector<2x1xf32>
    %695 = vector.shape_cast %694 : vector<2x1xf32> to vector<1x2x1xf32>
    %cst_283 = arith.constant dense<0.000000e+00> : vector<1xf32>
    %696 = vector.multi_reduction <add>, %695, %cst_283 [1, 2] : vector<1x2x1xf32> to vector<1xf32>
    %697 = vector.shape_cast %696 : vector<1xf32> to vector<1x1x1xf32>
    %698 = vector.extract %697[0, 0, 0] : f32 from vector<1x1x1xf32>
    %cst_284 = arith.constant 2.000000e+00 : f32
    %699 = arith.divf %698, %cst_284 : f32
    %700 = tpu.iota {dimensions = array<i32: 0>} : vector<2x128xi32>
    %701 = tpu.iota {dimensions = array<i32: 1>} : vector<2x128xi32>
    %c0_i32 = arith.constant 0 : i32
    %702 = vector.broadcast %c0_i32 : i32 to vector<2x128xi32>
    %703 = arith.cmpi eq, %700, %702 : vector<2x128xi32>
    %c8_i32 = arith.constant 8 : i32
    %704 = vector.broadcast %c8_i32 : i32 to vector<2x128xi32>
    %705 = arith.cmpi eq, %701, %704 : vector<2x128xi32>
    %706 = arith.andi %703, %705 : vector<2x128xi1>
    %707 = vector.broadcast %699 : f32 to vector<2x128xf32>
    %708 = arith.select %706, %707, %680 : vector<2x128xi1>, vector<2x128xf32>
    %c0_285 = arith.constant 0 : index
    %c0_286 = arith.constant 0 : index
    %709 = vector.load %arg21[%c0_285, %c0_286] : memref<2x128xf32, #tpu.memory_space<vmem>>, vector<2x128xf32>
    tpu.vector_store %arg21[%c0_285, %c0_286], %708 {strides = array<i32>} : memref<2x128xf32, #tpu.memory_space<vmem>>, vector<2x128xf32>,
    return
  }
}

</mosaic_0001>

<llo_original>
// kernel: bert_mtl_forward.1
$region0: #{bert_mtl_forward.1}
  #allocation0 [shape = 'u32[]', space=smem, size = 0x4, offset = 0x4, fixed_abs, tag = 'smem constant byte address 0x4 - core index']
  #allocation1 [shape = 'u32[72,128]{1,0:T(1,128)}', space=vmem, size = 0x9000, scoped, tag = 'internal scratch']
  %s0 = inlined_call_operand.vmem [shape: f32[2,16,128], index: 0, kind: input, shape index: {}]
  %s1 = inlined_call_operand.vmem [shape: f32[2,8], index: 1, kind: input, shape index: {}]
  %s2 = inlined_call_operand.vmem [shape: f32[2,1,128], index: 2, kind: input, shape index: {}]
  %s3 = inlined_call_operand.vmem [shape: f32[2,1,128], index: 3, kind: input, shape index: {}]
  %s4 = inlined_call_operand.hbm [shape: bf16[4,128,384], index: 4, kind: input, shape index: {}]
  %s5 = inlined_call_operand.vmem [shape: f32[4,1,384], index: 5, kind: input, shape index: {}]
  %s6 = inlined_call_operand.hbm [shape: bf16[4,128,128], index: 6, kind: input, shape index: {}]
  %s7 = inlined_call_operand.vmem [shape: f32[4,1,128], index: 7, kind: input, shape index: {}]
  %s8 = inlined_call_operand.vmem [shape: f32[4,1,128], index: 8, kind: input, shape index: {}]
  %s9 = inlined_call_operand.vmem [shape: f32[4,1,128], index: 9, kind: input, shape index: {}]
  %s10 = inlined_call_operand.hbm [shape: bf16[4,128,256], index: 10, kind: input, shape index: {}]
  %s11 = inlined_call_operand.vmem [shape: f32[4,1,256], index: 11, kind: input, shape index: {}]
  %s12 = inlined_call_operand.hbm [shape: bf16[4,256,128], index: 12, kind: input, shape index: {}]
  %s13 = inlined_call_operand.vmem [shape: f32[4,1,128], index: 13, kind: input, shape index: {}]
  %s14 = inlined_call_operand.vmem [shape: f32[4,1,128], index: 14, kind: input, shape index: {}]
  %s15 = inlined_call_operand.vmem [shape: f32[4,1,128], index: 15, kind: input, shape index: {}]
  %s16 = inlined_call_operand.hbm [shape: bf16[2,128,128], index: 16, kind: input, shape index: {}]
  %s17 = inlined_call_operand.vmem [shape: f32[2,1,128], index: 17, kind: input, shape index: {}]
  %s18 = inlined_call_operand.vmem [shape: bf16[128,128], index: 18, kind: input, shape index: {}]
  %s19 = inlined_call_operand.vmem [shape: f32[1,128], index: 19, kind: input, shape index: {}]
  %s20 = inlined_call_operand.vmem [shape: f32[2,128], index: 20, kind: input, shape index: {}]
  %s21 = inlined_call_operand.vmem [shape: f32[2,128], index: 21, kind: output, shape index: {}]
  %s22 = sld [smem:[#allocation0]]
  $region114: #{bert_mtl_forward.1} parent=0
    _
  %s24 = ssub.s32 1, %s22
  %s25 = scalar_select 0, %s24, %s22
  $region1: #{bert_mtl_forward.1} parent=0
    #allocation2 [shape = 'u8[393216]{0}', space=vmem, size = 0x60000, scoped, tag = 'input window, operand 4, single buffered']
    #allocation3 [shape = 's32[1]{0}', space=sflag, size = 0x4, scoped, tag = 'scoped memory for bert_mtl_forward.1']
    #allocation4 [shape = 'u8[131072]{0}', space=vmem, size = 0x20000, scoped, tag = 'input window, operand 6, single buffered']
    #allocation5 [shape = 's32[1]{0}', space=sflag, size = 0x4, scoped, tag = 'scoped memory for bert_mtl_forward.1']
    #allocation6 [shape = 'u8[262144]{0}', space=vmem, size = 0x40000, scoped, tag = 'input window, operand 10, single buffered']
    #allocation7 [shape = 'u8[262144]{0}', space=vmem, size = 0x40000, scoped, tag = 'input window, operand 12, single buffered']
    #allocation8 [shape = 's32[1]{0}', space=sflag, size = 0x4, scoped, tag = 'scoped memory for bert_mtl_forward.1']
    #allocation9 [shape = 'u8[65536]{0}', space=vmem, size = 0x10000, scoped, tag = 'input window, operand 16, single buffered']
    %26 = vsyncpa [#allocation3], 0
    %27 = vsyncpa [#allocation5], 0
    %28 = vsyncpa [#allocation8], 0
    // Predicated region
    $region2: #{bert_mtl_forward.1} parent=1 // pred_check
      _
    $region3: #{bert_mtl_forward.1} parent=1 // pred_check_branch
      %30 = sbr.rel (0) target = $region5
    $region4: #{bert_mtl_forward.1} parent=1 // pred_region
      _
    $region5: #{bert_mtl_forward.1} parent=1 // pred_fallthru
      _
    // Predicated region
    $region6: #{bert_mtl_forward.1} parent=1 // pred_check
      _
    $region7: #{bert_mtl_forward.1} parent=1 // pred_check_branch
      %32 = sbr.rel (0) target = $region9
    $region8: #{bert_mtl_forward.1} parent=1 // pred_region
      _
    $region9: #{bert_mtl_forward.1} parent=1 // pred_fallthru
      _
    // Predicated region
    $region10: #{bert_mtl_forward.1} parent=1 // pred_check
      _
    $region11: #{bert_mtl_forward.1} parent=1 // pred_check_branch
      %34 = sbr.rel (0) target = $region13
    $region12: #{bert_mtl_forward.1} parent=1 // pred_region
      _
    $region13: #{bert_mtl_forward.1} parent=1 // pred_fallthru
      _
    // Predicated region
    $region14: #{bert_mtl_forward.1} parent=1 // pred_check
      _
    $region15: #{bert_mtl_forward.1} parent=1 // pred_check_branch
      %36 = sbr.rel (0) target = $region17
    $region16: #{bert_mtl_forward.1} parent=1 // pred_region
      _
    $region17: #{bert_mtl_forward.1} parent=1 // pred_fallthru
      _
    // Predicated region
    $region18: #{bert_mtl_forward.1} parent=1 // pred_check
      _
    $region19: #{bert_mtl_forward.1} parent=1 // pred_check_branch
      %38 = sbr.rel (0) target = $region21
    $region20: #{bert_mtl_forward.1} parent=1 // pred_region
      %40 = vsyncadd [#allocation3], 0
      %s41 = sshll.u32 %s4, 4
      %s42 = int_to_ptr.hbm [resolvable:$true] %s41
      %s43 = sshll.u32 [#allocation2], 4
      %s44 = int_to_ptr.vmem [resolvable:$true] %s43
      %49 = dma.hbm_to_vmem [thread:$0]  %s42, 12288, %s44, [#allocation3], 192, 192, 12
    $region21: #{bert_mtl_forward.1} parent=1 // pred_fallthru
      _
    // Predicated region
    $region22: #{bert_mtl_forward.1} parent=1 // pred_check
      _
    $region23: #{bert_mtl_forward.1} parent=1 // pred_check_branch
      %51 = sbr.rel (0) target = $region25
    $region24: #{bert_mtl_forward.1} parent=1 // pred_region
      _
    $region25: #{bert_mtl_forward.1} parent=1 // pred_fallthru
      _
    // Predicated region
    $region26: #{bert_mtl_forward.1} parent=1 // pred_check
      _
    $region27: #{bert_mtl_forward.1} parent=1 // pred_check_branch
      %53 = sbr.rel (0) target = $region29
    $region28: #{bert_mtl_forward.1} parent=1 // pred_region
      %55 = vsyncadd [#allocation5], 0
      %s56 = sshll.u32 %s6, 4
      %s57 = int_to_ptr.hbm [resolvable:$true] %s56
      %s58 = sshll.u32 [#allocation4], 4
      %s59 = int_to_ptr.vmem [resolvable:$true] %s58
      %64 = dma.hbm_to_vmem [thread:$0]  %s57, 4096, %s59, [#allocation5], 64, 64, 4
    $region29: #{bert_mtl_forward.1} parent=1 // pred_fallthru
      _
    // Predicated region
    $region30: #{bert_mtl_forward.1} parent=1 // pred_check
      _
    $region31: #{bert_mtl_forward.1} parent=1 // pred_check_branch
      %66 = sbr.rel (0) target = $region33
    $region32: #{bert_mtl_forward.1} parent=1 // pred_region
      _
    $region33: #{bert_mtl_forward.1} parent=1 // pred_fallthru
      _
    // Predicated region
    $region34: #{bert_mtl_forward.1} parent=1 // pred_check
      _
    $region35: #{bert_mtl_forward.1} parent=1 // pred_check_branch
      %68 = sbr.rel (0) target = $region37
    $region36: #{bert_mtl_forward.1} parent=1 // pred_region
      _
    $region37: #{bert_mtl_forward.1} parent=1 // pred_fallthru
      _
    // Predicated region
    $region38: #{bert_mtl_forward.1} parent=1 // pred_check
      _
    $region39: #{bert_mtl_forward.1} parent=1 // pred_check_branch
      %70 = sbr.rel (0) target = $region41
    $region40: #{bert_mtl_forward.1} parent=1 // pred_region
      _
    $region41: #{bert_mtl_forward.1} parent=1 // pred_fallthru
      _
    // Predicated region
    $region42: #{bert_mtl_forward.1} parent=1 // pred_check
      _
    $region43: #{bert_mtl_forward.1} parent=1 // pred_check_branch
      %72 = sbr.rel (0) target = $region45
    $region44: #{bert_mtl_forward.1} parent=1 // pred_region
      %74 = vsyncadd [#allocation5], 0
      %s75 = sshll.u32 %s10, 4
      %s76 = int_to_ptr.hbm [resolvable:$true] %s75
      %s77 = sshll.u32 [#allocation6], 4
      %s78 = int_to_ptr.vmem [resolvable:$true] %s77
      %83 = dma.hbm_to_vmem [thread:$0]  %s76, 8192, %s78, [#allocation5], 128, 128, 8
    $region45: #{bert_mtl_forward.1} parent=1 // pred_fallthru
      _
    // Predicated region
    $region46: #{bert_mtl_forward.1} parent=1 // pred_check
      _
    $region47: #{bert_mtl_forward.1} parent=1 // pred_check_branch
      %85 = sbr.rel (0) target = $region49
    $region48: #{bert_mtl_forward.1} parent=1 // pred_region
      _
    $region49: #{bert_mtl_forward.1} parent=1 // pred_fallthru
      _
    // Predicated region
    $region50: #{bert_mtl_forward.1} parent=1 // pred_check
      _
    $region51: #{bert_mtl_forward.1} parent=1 // pred_check_branch
      %87 = sbr.rel (0) target = $region53
    $region52: #{bert_mtl_forward.1} parent=1 // pred_region
      %89 = vsyncadd [#allocation8], 0
      %s90 = sshll.u32 %s12, 4
      %s91 = int_to_ptr.hbm [resolvable:$true] %s90
      %s92 = sshll.u32 [#allocation7], 4
      %s93 = int_to_ptr.vmem [resolvable:$true] %s92
      %98 = dma.hbm_to_vmem [thread:$0]  %s91, 8192, %s93, [#allocation8], 64, 64, 4
    $region53: #{bert_mtl_forward.1} parent=1 // pred_fallthru
      _
    // Predicated region
    $region54: #{bert_mtl_forward.1} parent=1 // pred_check
      _
    $region55: #{bert_mtl_forward.1} parent=1 // pred_check_branch
      %100 = sbr.rel (0) target = $region57
    $region56: #{bert_mtl_forward.1} parent=1 // pred_region
      _
    $region57: #{bert_mtl_forward.1} parent=1 // pred_fallthru
      _
    // Predicated region
    $region58: #{bert_mtl_forward.1} parent=1 // pred_check
      _
    $region59: #{bert_mtl_forward.1} parent=1 // pred_check_branch
      %102 = sbr.rel (0) target = $region61
    $region60: #{bert_mtl_forward.1} parent=1 // pred_region
      _
    $region61: #{bert_mtl_forward.1} parent=1 // pred_fallthru
      _
    // Predicated region
    $region62: #{bert_mtl_forward.1} parent=1 // pred_check
      _
    $region63: #{bert_mtl_forward.1} parent=1 // pred_check_branch
      %104 = sbr.rel (0) target = $region65
    $region64: #{bert_mtl_forward.1} parent=1 // pred_region
      _
    $region65: #{bert_mtl_forward.1} parent=1 // pred_fallthru
      _
    // Predicated region
    $region66: #{bert_mtl_forward.1} parent=1 // pred_check
      _
    $region67: #{bert_mtl_forward.1} parent=1 // pred_check_branch
      %106 = sbr.rel (0) target = $region69
    $region68: #{bert_mtl_forward.1} parent=1 // pred_region
      %108 = vsyncadd [#allocation8], 0
      %s109 = sshll.u32 %s16, 4
      %s110 = int_to_ptr.hbm [resolvable:$true] %s109
      %s111 = sshll.u32 [#allocation9], 4
      %s112 = int_to_ptr.vmem [resolvable:$true] %s111
      %117 = dma.hbm_to_vmem [thread:$0]  %s110, 2048, %s112, [#allocation8], 64, 64, 4
    $region69: #{bert_mtl_forward.1} parent=1 // pred_fallthru
      _
    // Predicated region
    $region70: #{bert_mtl_forward.1} parent=1 // pred_check
      _
    $region71: #{bert_mtl_forward.1} parent=1 // pred_check_branch
      %119 = sbr.rel (0) target = $region73
    $region72: #{bert_mtl_forward.1} parent=1 // pred_region
      _
    $region73: #{bert_mtl_forward.1} parent=1 // pred_fallthru
      _
    // Predicated region
    $region74: #{bert_mtl_forward.1} parent=1 // pred_check
      _
    $region75: #{bert_mtl_forward.1} parent=1 // pred_check_branch
      %121 = sbr.rel (0) target = $region77
    $region76: #{bert_mtl_forward.1} parent=1 // pred_region
      _
    $region77: #{bert_mtl_forward.1} parent=1 // pred_fallthru
      _
    // Predicated region
    $region78: #{bert_mtl_forward.1} parent=1 // pred_check
      _
    $region79: #{bert_mtl_forward.1} parent=1 // pred_check_branch
      %123 = sbr.rel (0) target = $region81
    $region80: #{bert_mtl_forward.1} parent=1 // pred_region
      _
    $region81: #{bert_mtl_forward.1} parent=1 // pred_fallthru
      _
    // Predicated region
    $region82: #{bert_mtl_forward.1} parent=1 // pred_check
      _
    $region83: #{bert_mtl_forward.1} parent=1 // pred_check_branch
      %125 = sbr.rel (0) target = $region85
    $region84: #{bert_mtl_forward.1} parent=1 // pred_region
      _
    $region85: #{bert_mtl_forward.1} parent=1 // pred_fallthru
      _
    // Predicated region
    $region86: #{bert_mtl_forward.1} parent=1 // pred_check
      _
    $region87: #{bert_mtl_forward.1} parent=1 // pred_check_branch
      %127 = sbr.rel (0) target = $region89
    $region88: #{bert_mtl_forward.1} parent=1 // pred_region
      %129 = dma.done [#allocation3], 12288
    $region89: #{bert_mtl_forward.1} parent=1 // pred_fallthru
      _
    // Predicated region
    $region90: #{bert_mtl_forward.1} parent=1 // pred_check
      _
    $region91: #{bert_mtl_forward.1} parent=1 // pred_check_branch
      %131 = sbr.rel (0) target = $region93
    $region92: #{bert_mtl_forward.1} parent=1 // pred_region
      %133 = dma.done [#allocation5], 4096
    $region93: #{bert_mtl_forward.1} parent=1 // pred_fallthru
      _
    // Predicated region
    $region94: #{bert_mtl_forward.1} parent=1 // pred_check
      _
    $region95: #{bert_mtl_forward.1} parent=1 // pred_check_branch
      %135 = sbr.rel (0) target = $region97
    $region96: #{bert_mtl_forward.1} parent=1 // pred_region
      %137 = dma.done [#allocation5], 8192
    $region97: #{bert_mtl_forward.1} parent=1 // pred_fallthru
      _
    // Predicated region
    $region98: #{bert_mtl_forward.1} parent=1 // pred_check
      _
    $region99: #{bert_mtl_forward.1} parent=1 // pred_check_branch
      %139 = sbr.rel (0) target = $region101
    $region100: #{bert_mtl_forward.1} parent=1 // pred_region
      %141 = dma.done [#allocation8], 8192
    $region101: #{bert_mtl_forward.1} parent=1 // pred_fallthru
      _
    // Predicated region
    $region102: #{bert_mtl_forward.1} parent=1 // pred_check
      _
    $region103: #{bert_mtl_forward.1} parent=1 // pred_check_branch
      %143 = sbr.rel (0) target = $region105
    $region104: #{bert_mtl_forward.1} parent=1 // pred_region
      %145 = dma.done [#allocation8], 2048
    $region105: #{bert_mtl_forward.1} parent=1 // pred_fallthru
      _
    %v147 = vld [vmem:[%s1] sm:$0x3]
    %v148 = vsub.f32 1.0, %v147
    %v149 = vmul.f32 %v148, -1e+09
    %v151 = vrot.slane %v149, 6
    %v153 = vrot.slane %v149, 4
    %v155 = vrot.slane %v149, 2
    %vm157 = vcmask 1041408
    %v158 = vsel %vm157, %v149, %v151
    %vm159 = vcmask 1043456
    %v160 = vsel %vm159, %v158, %v153
    %vm161 = vcmask 1045504
    %v162 = vsel %vm161, %v160, %v155
    %v163 = vld [vmem:[%s0] sm:$0xff]
    %v164 = vld [vmem:[%s0 + $0x8] sm:$0xff]
    %v165 = vld [vmem:[%s2] sm:$0x1]
    %v166 = vld [vmem:[%s3] sm:$0x1]
    %167 = vadd.xlane.f32.xlu0 %v163
    %v168 = vpop.xlane.xlu0 %167
    %169 = vadd.xlane.f32.xlu0 %v164
    %v170 = vpop.xlane.xlu0 %169
    %v171 = vrcp.pop 128.0
    %v172 = vmul.f32 128.0, %v171
    %v173 = vsub.f32 1.0, %v172
    %v174 = vmul.f32 %v171, %v173
    %v175 = vadd.f32 %v171, %v174
    %vm176 = vweird.f32 %v171
    %v177 = vsel %vm176, %v171, %v175
    %v178 = vmul.f32 %v168, %v177
    %v179 = vmul.f32 %v170, %v177
    %v180 = vsub.f32 %v163, %v178
    %v181 = vsub.f32 %v164, %v179
    %v182 = vmul.f32 %v180, %v180
    %v183 = vmul.f32 %v181, %v181
    %184 = vadd.xlane.f32.xlu0 %v182
    %v185 = vpop.xlane.xlu0 %184
    %186 = vadd.xlane.f32.xlu0 %v183
    %v187 = vpop.xlane.xlu0 %186
    %v188 = vmul.f32 %v185, %v177
    %v189 = vmul.f32 %v187, %v177
    %v190 = vadd.f32 %v188, 1e-12
    %v191 = vadd.f32 %v189, 1e-12
    %v192 = vrsqrt.pop %v190
    %v193 = vmul.f32 %v192, %v190
    %v194 = vmul.f32 %v193, %v192
    %v195 = vmul.f32 0.5, %v194
    %v196 = vsub.f32 1.5, %v195
    %v197 = vmul.f32 %v192, %v196
    %vm198 = vweird.f32 %v190
    %vm199 = vweird.f32 %v192
    %vm200 = vmor %vm198, %vm199
    %v201 = vsel %vm200, %v192, %v197
    %v202 = vrsqrt.pop %v191
    %v203 = vmul.f32 %v202, %v191
    %v204 = vmul.f32 %v203, %v202
    %v205 = vmul.f32 0.5, %v204
    %v206 = vsub.f32 1.5, %v205
    %v207 = vmul.f32 %v202, %v206
    %vm208 = vweird.f32 %v191
    %vm209 = vweird.f32 %v202
    %vm210 = vmor %vm208, %vm209
    %v211 = vsel %vm210, %v202, %v207
    %v212 = vmul.f32 %v180, %v201
    %v213 = vmul.f32 %v181, %v211
    %v215 = vperm.slane %v165, 0
    %v217 = vmul.f32 %v212, %v215
    %v218 = vmul.f32 %v213, %v215
    %v220 = vperm.slane %v166, 0
    %v222 = vadd.f32 %v217, %v220
    %v223 = vadd.f32 %v218, %v220
    %v224 = vpack.c.bf16 %v223, %v222
    %v225 = vld [vmem:[#allocation2] sm:$0xff]
    %v226 = vld [vmem:[#allocation2 + $0x8] sm:$0xf]
    %v227 = vld [vmem:[#allocation2 + $0xc] sm:$0xff]
    %v228 = vld [vmem:[#allocation2 + $0x14] sm:$0xf]
    %v229 = vld [vmem:[#allocation2 + $0x18] sm:$0xff]
    %v230 = vld [vmem:[#allocation2 + $0x20] sm:$0xf]
    %v231 = vld [vmem:[#allocation2 + $0x24] sm:$0xff]
    %v232 = vld [vmem:[#allocation2 + $0x2c] sm:$0xf]
    %v233 = vld [vmem:[#allocation2 + $0x30] sm:$0xff]
    %v234 = vld [vmem:[#allocation2 + $0x38] sm:$0xf]
    %v235 = vld [vmem:[#allocation2 + $0x3c] sm:$0xff]
    %v236 = vld [vmem:[#allocation2 + $0x44] sm:$0xf]
    %v237 = vld [vmem:[#allocation2 + $0x48] sm:$0xff]
    %v238 = vld [vmem:[#allocation2 + $0x50] sm:$0xf]
    %v239 = vld [vmem:[#allocation2 + $0x54] sm:$0xff]
    %v240 = vld [vmem:[#allocation2 + $0x5c] sm:$0xf]
    %v241 = vld [vmem:[#allocation2 + $0x60] sm:$0xff]
    %v242 = vld [vmem:[#allocation2 + $0x68] sm:$0xf]
    %v243 = vld [vmem:[#allocation2 + $0x6c] sm:$0xff]
    %v244 = vld [vmem:[#allocation2 + $0x74] sm:$0xf]
    %v245 = vld [vmem:[#allocation2 + $0x78] sm:$0xff]
    %v246 = vld [vmem:[#allocation2 + $0x80] sm:$0xf]
    %v247 = vld [vmem:[#allocation2 + $0x84] sm:$0xff]
    %v248 = vld [vmem:[#allocation2 + $0x8c] sm:$0xf]
    %v249 = vld [vmem:[#allocation2 + $0x90] sm:$0xff]
    %v250 = vld [vmem:[#allocation2 + $0x98] sm:$0xf]
    %v251 = vld [vmem:[#allocation2 + $0x9c] sm:$0xff]
    %v252 = vld [vmem:[#allocation2 + $0xa4] sm:$0xf]
    %v253 = vld [vmem:[#allocation2 + $0xa8] sm:$0xff]
    %v254 = vld [vmem:[#allocation2 + $0xb0] sm:$0xf]
    %v255 = vld [vmem:[#allocation2 + $0xb4] sm:$0xff]
    %v256 = vld [vmem:[#allocation2 + $0xbc] sm:$0xf]
    %v257 = vld [vmem:[%s5] sm:$0x7]
    %v259 = vperm.slane %v257, 0
    %v260 = vperm.slane %v257, 1
    %v261 = vperm.slane %v257, 2
    %v297 = vunpack.c.l.b16 %v225
    %v298 = vunpack.c.h.b16 %v225
    %v299 = vunpack.c.l.b16 %v226
    %v300 = vunpack.c.l.b16 %v227
    %v301 = vunpack.c.h.b16 %v227
    %v302 = vunpack.c.l.b16 %v228
    %v303 = vunpack.c.l.b16 %v229
    %v304 = vunpack.c.h.b16 %v229
    %v305 = vunpack.c.l.b16 %v230
    %v306 = vunpack.c.l.b16 %v231
    %v307 = vunpack.c.h.b16 %v231
    %v308 = vunpack.c.l.b16 %v232
    %v309 = vunpack.c.l.b16 %v233
    %v310 = vunpack.c.h.b16 %v233
    %v311 = vunpack.c.l.b16 %v234
    %v312 = vunpack.c.l.b16 %v235
    %v313 = vunpack.c.h.b16 %v235
    %v314 = vunpack.c.l.b16 %v236
    %v315 = vunpack.c.l.b16 %v237
    %v316 = vunpack.c.h.b16 %v237
    %v317 = vunpack.c.l.b16 %v238
    %v318 = vunpack.c.l.b16 %v239
    %v319 = vunpack.c.h.b16 %v239
    %v320 = vunpack.c.l.b16 %v240
    %v321 = vunpack.c.l.b16 %v241
    %v322 = vunpack.c.h.b16 %v241
    %v323 = vunpack.c.l.b16 %v242
    %v324 = vunpack.c.l.b16 %v243
    %v325 = vunpack.c.h.b16 %v243
    %v326 = vunpack.c.l.b16 %v244
    %v327 = vunpack.c.l.b16 %v245
    %v328 = vunpack.c.h.b16 %v245
    %v329 = vunpack.c.l.b16 %v246
    %v330 = vunpack.c.l.b16 %v247
    %v331 = vunpack.c.h.b16 %v247
    %v332 = vunpack.c.l.b16 %v248
    %v333 = vunpack.c.l.b16 %v249
    %v334 = vunpack.c.h.b16 %v249
    %v335 = vunpack.c.l.b16 %v250
    %v336 = vunpack.c.l.b16 %v251
    %v337 = vunpack.c.h.b16 %v251
    %v338 = vunpack.c.l.b16 %v252
    %v339 = vunpack.c.l.b16 %v253
    %v340 = vunpack.c.h.b16 %v253
    %v341 = vunpack.c.l.b16 %v254
    %v342 = vunpack.c.l.b16 %v255
    %v343 = vunpack.c.h.b16 %v255
    %v344 = vunpack.c.l.b16 %v256
    %v345 = vpack.c.b16 %v300, %v297
    %v346 = vpack.c.b16 %v301, %v298
    %v347 = vpack.c.b16 %v302, %v299
    %v348 = vpack.c.b16 %v306, %v303
    %v349 = vpack.c.b16 %v307, %v304
    %v350 = vpack.c.b16 %v308, %v305
    %v351 = vpack.c.b16 %v312, %v309
    %v352 = vpack.c.b16 %v313, %v310
    %v353 = vpack.c.b16 %v314, %v311
    %v354 = vpack.c.b16 %v318, %v315
    %v355 = vpack.c.b16 %v319, %v316
    %v356 = vpack.c.b16 %v320, %v317
    %v357 = vpack.c.b16 %v324, %v321
    %v358 = vpack.c.b16 %v325, %v322
    %v359 = vpack.c.b16 %v326, %v323
    %v360 = vpack.c.b16 %v330, %v327
    %v361 = vpack.c.b16 %v331, %v328
    %v362 = vpack.c.b16 %v332, %v329
    %v363 = vpack.c.b16 %v336, %v333
    %v364 = vpack.c.b16 %v337, %v334
    %v365 = vpack.c.b16 %v338, %v335
    %v366 = vpack.c.b16 %v342, %v339
    %v367 = vpack.c.b16 %v343, %v340
    %v368 = vpack.c.b16 %v344, %v341
    %393 = vmatpush.bf16.msra.mxu0 %v366
    %394 = vmatpush.bf16.msra.mxu0 %v363
    %395 = vmatpush.bf16.msra.mxu0 %v360
    %396 = vmatpush.bf16.msra.mxu0 %v357
    %397 = vmatpush.bf16.msra.mxu0 %v354
    %398 = vmatpush.bf16.msra.mxu0 %v351
    %399 = vmatpush.bf16.msra.mxu0 %v348
    %400 = vmatpush.bf16.msra.mxu0 %v345
    %401 = vmatmul.bf16.gmra.mxu0 %v224
    %v402 = vpop.f32.mrf.mxu0
    %v403 = vadd.f32 %v259, %v402
    %v404 = vpop.f32.mrf.mxu0
    %v405 = vadd.f32 %v259, %v404
    %406 = vdwg.mxu0
    %407 = vmatpush.bf16.msra.mxu0 %v367
    %408 = vmatpush.bf16.msra.mxu0 %v364
    %409 = vmatpush.bf16.msra.mxu0 %v361
    %410 = vmatpush.bf16.msra.mxu0 %v358
    %411 = vmatpush.bf16.msra.mxu0 %v355
    %412 = vmatpush.bf16.msra.mxu0 %v352
    %413 = vmatpush.bf16.msra.mxu0 %v349
    %414 = vmatpush.bf16.msra.mxu0 %v346
    %415 = vmatmul.bf16.gmra.mxu0 %v224
    %v416 = vpop.f32.mrf.mxu0
    %v417 = vadd.f32 %v260, %v416
    %v418 = vpop.f32.mrf.mxu0
    %v419 = vadd.f32 %v260, %v418
    %420 = vdwg.mxu0
    %421 = vmatpush.bf16.msra.mxu0 %v368
    %422 = vmatpush.bf16.msra.mxu0 %v365
    %423 = vmatpush.bf16.msra.mxu0 %v362
    %424 = vmatpush.bf16.msra.mxu0 %v359
    %425 = vmatpush.bf16.msra.mxu0 %v356
    %426 = vmatpush.bf16.msra.mxu0 %v353
    %427 = vmatpush.bf16.msra.mxu0 %v350
    %428 = vmatpush.bf16.msra.mxu0 %v347
    %429 = vmatmul.bf16.gmra.mxu0 %v224
    %v430 = vpop.f32.mrf.mxu0
    %v431 = vadd.f32 %v261, %v430
    %v432 = vpop.f32.mrf.mxu0
    %v433 = vadd.f32 %v261, %v432
    %434 = vdwg.mxu0
    %v435 = vpack.c.bf16 %v417, %v403
    %v436 = vpack.c.bf16 %v431, %v431
    %v437 = vpack.c.bf16 %v419, %v405
    %v438 = vpack.c.bf16 %v433, %v433
    %441 = vrot.lane.b32.xlu0 %v435, 96
    %v442 = vpop.permute.xlu0 %441
    %443 = vrot.lane.b32.xlu0 %v437, 96
    %v444 = vpop.permute.xlu0 %443
    %445 = vrot.lane.b32.xlu0 %v435, 64
    %v446 = vpop.permute.xlu0 %445
    %447 = vrot.lane.b32.xlu0 %v437, 64
    %v448 = vpop.permute.xlu0 %447
    %449 = vrot.lane.b32.xlu0 %v435, 32
    %v450 = vpop.permute.xlu0 %449
    %451 = vrot.lane.b32.xlu0 %v437, 32
    %v452 = vpop.permute.xlu0 %451
    %v453 = vrot.slane %v435, 4
    %v454 = vrot.slane %v437, 4
    %v455 = vrot.slane %v442, 4
    %v456 = vrot.slane %v444, 4
    %v457 = vrot.slane %v446, 4
    %v458 = vrot.slane %v448, 4
    %v459 = vrot.slane %v450, 4
    %v460 = vrot.slane %v452, 4
    %463 = vrot.lane.b32.xlu0 %v436, 96
    %v464 = vpop.permute.xlu0 %463
    %465 = vrot.lane.b32.xlu0 %v438, 96
    %v466 = vpop.permute.xlu0 %465
    %467 = vrot.lane.b32.xlu0 %v436, 64
    %v468 = vpop.permute.xlu0 %467
    %469 = vrot.lane.b32.xlu0 %v438, 64
    %v470 = vpop.permute.xlu0 %469
    %471 = vrot.lane.b32.xlu0 %v436, 32
    %v472 = vpop.permute.xlu0 %471
    %473 = vrot.lane.b32.xlu0 %v438, 32
    %v474 = vpop.permute.xlu0 %473
    %v476 = vrot.slane %v162, 1
    %v477 = vrot.slane %v162, 2
    %v478 = vrot.slane %v162, 3
    %v479 = vrot.slane %v162, 4
    %v480 = vrot.slane %v162, 5
    %v481 = vrot.slane %v162, 6
    %v482 = vrot.slane %v162, 7
    %v483 = vperm.slane %v162, 0
    %v484 = vperm.slane %v476, 0
    %v485 = vperm.slane %v477, 0
    %v486 = vperm.slane %v478, 0
    %v487 = vperm.slane %v479, 0
    %v488 = vperm.slane %v480, 0
    %v489 = vperm.slane %v481, 0
    %v490 = vperm.slane %v482, 0
    %vm499 = vcmask 261120
    %v501 = vsel %vm499, %v435, 0
    %v504 = vsel %vm499, %v453, 0
    %506 = vmatpush.bf16.xpose.msra.mxu0 0
    %507 = vmatpush.bf16.xpose.msra.mxu0 0
    %508 = vmatpush.bf16.xpose.msra.mxu0 0
    %509 = vmatpush.bf16.xpose.msra.mxu0 0
    %510 = vmatpush.bf16.xpose.msra.mxu0 0
    %511 = vmatpush.bf16.xpose.msra.mxu0 0
    %512 = vmatpush.bf16.xpose.msra.mxu0 0
    %513 = vmatpush.bf16.xpose.msra.mxu0 %v504
    %514 = vmatmul.bf16.gmra.mxu0 %v501
    %v515 = vpop.f32.mrf.mxu0
    %v516 = vadd.f32 %v483, %v515
    %v517 = vpop.f32.mrf.mxu0
    %518 = vdwg.mxu0
    %v520 = vsel %vm499, %v437, 0
    %v523 = vsel %vm499, %v454, 0
    %525 = vmatpush.bf16.xpose.msra.mxu0 0
    %526 = vmatpush.bf16.xpose.msra.mxu0 0
    %527 = vmatpush.bf16.xpose.msra.mxu0 0
    %528 = vmatpush.bf16.xpose.msra.mxu0 0
    %529 = vmatpush.bf16.xpose.msra.mxu0 0
    %530 = vmatpush.bf16.xpose.msra.mxu0 0
    %531 = vmatpush.bf16.xpose.msra.mxu0 0
    %532 = vmatpush.bf16.xpose.msra.mxu0 %v523
    %533 = vmatmul.bf16.gmra.mxu0 %v520
    %v534 = vpop.f32.mrf.mxu0
    %v535 = vadd.f32 %v484, %v534
    %v536 = vpop.f32.mrf.mxu0
    %537 = vdwg.mxu0
    %v539 = vsel %vm499, %v442, 0
    %v542 = vsel %vm499, %v455, 0
    %544 = vmatpush.bf16.xpose.msra.mxu0 0
    %545 = vmatpush.bf16.xpose.msra.mxu0 0
    %546 = vmatpush.bf16.xpose.msra.mxu0 0
    %547 = vmatpush.bf16.xpose.msra.mxu0 0
    %548 = vmatpush.bf16.xpose.msra.mxu0 0
    %549 = vmatpush.bf16.xpose.msra.mxu0 0
    %550 = vmatpush.bf16.xpose.msra.mxu0 0
    %551 = vmatpush.bf16.xpose.msra.mxu0 %v542
    %552 = vmatmul.bf16.gmra.mxu0 %v539
    %v553 = vpop.f32.mrf.mxu0
    %v554 = vadd.f32 %v485, %v553
    %v555 = vpop.f32.mrf.mxu0
    %556 = vdwg.mxu0
    %v558 = vsel %vm499, %v444, 0
    %v561 = vsel %vm499, %v456, 0
    %563 = vmatpush.bf16.xpose.msra.mxu0 0
    %564 = vmatpush.bf16.xpose.msra.mxu0 0
    %565 = vmatpush.bf16.xpose.msra.mxu0 0
    %566 = vmatpush.bf16.xpose.msra.mxu0 0
    %567 = vmatpush.bf16.xpose.msra.mxu0 0
    %568 = vmatpush.bf16.xpose.msra.mxu0 0
    %569 = vmatpush.bf16.xpose.msra.mxu0 0
    %570 = vmatpush.bf16.xpose.msra.mxu0 %v561
    %571 = vmatmul.bf16.gmra.mxu0 %v558
    %v572 = vpop.f32.mrf.mxu0
    %v573 = vadd.f32 %v486, %v572
    %v574 = vpop.f32.mrf.mxu0
    %575 = vdwg.mxu0
    %v577 = vsel %vm499, %v446, 0
    %v580 = vsel %vm499, %v457, 0
    %582 = vmatpush.bf16.xpose.msra.mxu0 0
    %583 = vmatpush.bf16.xpose.msra.mxu0 0
    %584 = vmatpush.bf16.xpose.msra.mxu0 0
    %585 = vmatpush.bf16.xpose.msra.mxu0 0
    %586 = vmatpush.bf16.xpose.msra.mxu0 0
    %587 = vmatpush.bf16.xpose.msra.mxu0 0
    %588 = vmatpush.bf16.xpose.msra.mxu0 0
    %589 = vmatpush.bf16.xpose.msra.mxu0 %v580
    %590 = vmatmul.bf16.gmra.mxu0 %v577
    %v591 = vpop.f32.mrf.mxu0
    %v592 = vadd.f32 %v487, %v591
    %v593 = vpop.f32.mrf.mxu0
    %594 = vdwg.mxu0
    %v596 = vsel %vm499, %v448, 0
    %v599 = vsel %vm499, %v458, 0
    %601 = vmatpush.bf16.xpose.msra.mxu0 0
    %602 = vmatpush.bf16.xpose.msra.mxu0 0
    %603 = vmatpush.bf16.xpose.msra.mxu0 0
    %604 = vmatpush.bf16.xpose.msra.mxu0 0
    %605 = vmatpush.bf16.xpose.msra.mxu0 0
    %606 = vmatpush.bf16.xpose.msra.mxu0 0
    %607 = vmatpush.bf16.xpose.msra.mxu0 0
    %608 = vmatpush.bf16.xpose.msra.mxu0 %v599
    %609 = vmatmul.bf16.gmra.mxu0 %v596
    %v610 = vpop.f32.mrf.mxu0
    %v611 = vadd.f32 %v488, %v610
    %v612 = vpop.f32.mrf.mxu0
    %613 = vdwg.mxu0
    %v615 = vsel %vm499, %v450, 0
    %v618 = vsel %vm499, %v459, 0
    %620 = vmatpush.bf16.xpose.msra.mxu0 0
    %621 = vmatpush.bf16.xpose.msra.mxu0 0
    %622 = vmatpush.bf16.xpose.msra.mxu0 0
    %623 = vmatpush.bf16.xpose.msra.mxu0 0
    %624 = vmatpush.bf16.xpose.msra.mxu0 0
    %625 = vmatpush.bf16.xpose.msra.mxu0 0
    %626 = vmatpush.bf16.xpose.msra.mxu0 0
    %627 = vmatpush.bf16.xpose.msra.mxu0 %v618
    %628 = vmatmul.bf16.gmra.mxu0 %v615
    %v629 = vpop.f32.mrf.mxu0
    %v630 = vadd.f32 %v489, %v629
    %v631 = vpop.f32.mrf.mxu0
    %632 = vdwg.mxu0
    %v634 = vsel %vm499, %v452, 0
    %v637 = vsel %vm499, %v460, 0
    %639 = vmatpush.bf16.xpose.msra.mxu0 0
    %640 = vmatpush.bf16.xpose.msra.mxu0 0
    %641 = vmatpush.bf16.xpose.msra.mxu0 0
    %642 = vmatpush.bf16.xpose.msra.mxu0 0
    %643 = vmatpush.bf16.xpose.msra.mxu0 0
    %644 = vmatpush.bf16.xpose.msra.mxu0 0
    %645 = vmatpush.bf16.xpose.msra.mxu0 0
    %646 = vmatpush.bf16.xpose.msra.mxu0 %v637
    %647 = vmatmul.bf16.gmra.mxu0 %v634
    %v648 = vpop.f32.mrf.mxu0
    %v649 = vadd.f32 %v490, %v648
    %v650 = vpop.f32.mrf.mxu0
    %651 = vdwg.mxu0
    %vm652 = vcmask 64512
    %v653 = vsel %vm652, %v516, -inf
    %654 = vmax.xlane.f32.xlu0 %v653
    %v655 = vpop.xlane.xlu0 %654
    %v656 = vsel %vm652, %v535, -inf
    %657 = vmax.xlane.f32.xlu0 %v656
    %v658 = vpop.xlane.xlu0 %657
    %v659 = vsel %vm652, %v554, -inf
    %660 = vmax.xlane.f32.xlu0 %v659
    %v661 = vpop.xlane.xlu0 %660
    %v662 = vsel %vm652, %v573, -inf
    %663 = vmax.xlane.f32.xlu0 %v662
    %v664 = vpop.xlane.xlu0 %663
    %v665 = vsel %vm652, %v592, -inf
    %666 = vmax.xlane.f32.xlu0 %v665
    %v667 = vpop.xlane.xlu0 %666
    %v668 = vsel %vm652, %v611, -inf
    %669 = vmax.xlane.f32.xlu0 %v668
    %v670 = vpop.xlane.xlu0 %669
    %v671 = vsel %vm652, %v630, -inf
    %672 = vmax.xlane.f32.xlu0 %v671
    %v673 = vpop.xlane.xlu0 %672
    %v674 = vsel %vm652, %v649, -inf
    %675 = vmax.xlane.f32.xlu0 %v674
    %v676 = vpop.xlane.xlu0 %675
    %v677 = vsub.f32 %v516, %v655
    %v678 = vsub.f32 %v535, %v658
    %v679 = vsub.f32 %v554, %v661
    %v680 = vsub.f32 %v573, %v664
    %v681 = vsub.f32 %v592, %v667
    %v682 = vsub.f32 %v611, %v670
    %v683 = vsub.f32 %v630, %v673
    %v684 = vsub.f32 %v649, %v676
    %v685 = vmul.f32 %v677, 1.442695
    %v686 = vpow.pop %v685
    %v687 = vmul.f32 %v678, 1.442695
    %v688 = vpow.pop %v687
    %v689 = vmul.f32 %v679, 1.442695
    %v690 = vpow.pop %v689
    %v691 = vmul.f32 %v680, 1.442695
    %v692 = vpow.pop %v691
    %v693 = vmul.f32 %v681, 1.442695
    %v694 = vpow.pop %v693
    %v695 = vmul.f32 %v682, 1.442695
    %v696 = vpow.pop %v695
    %v697 = vmul.f32 %v683, 1.442695
    %v698 = vpow.pop %v697
    %v699 = vmul.f32 %v684, 1.442695
    %v700 = vpow.pop %v699
    %v701 = vsel %vm652, %v686, 0.0
    %702 = vadd.xlane.f32.xlu0 %v701
    %v703 = vpop.xlane.xlu0 %702
    %v704 = vsel %vm652, %v688, 0.0
    %705 = vadd.xlane.f32.xlu0 %v704
    %v706 = vpop.xlane.xlu0 %705
    %v707 = vsel %vm652, %v690, 0.0
    %708 = vadd.xlane.f32.xlu0 %v707
    %v709 = vpop.xlane.xlu0 %708
    %v710 = vsel %vm652, %v692, 0.0
    %711 = vadd.xlane.f32.xlu0 %v710
    %v712 = vpop.xlane.xlu0 %711
    %v713 = vsel %vm652, %v694, 0.0
    %714 = vadd.xlane.f32.xlu0 %v713
    %v715 = vpop.xlane.xlu0 %714
    %v716 = vsel %vm652, %v696, 0.0
    %717 = vadd.xlane.f32.xlu0 %v716
    %v718 = vpop.xlane.xlu0 %717
    %v719 = vsel %vm652, %v698, 0.0
    %720 = vadd.xlane.f32.xlu0 %v719
    %v721 = vpop.xlane.xlu0 %720
    %v722 = vsel %vm652, %v700, 0.0
    %723 = vadd.xlane.f32.xlu0 %v722
    %v724 = vpop.xlane.xlu0 %723
    %v725 = vrcp.pop %v703
    %v726 = vrcp.pop %v706
    %v727 = vrcp.pop %v709
    %v728 = vrcp.pop %v712
    %v729 = vrcp.pop %v715
    %v730 = vrcp.pop %v718
    %v731 = vrcp.pop %v721
    %v732 = vrcp.pop %v724
    %v733 = vmul.f32 %v686, %v725
    %v734 = vmul.f32 %v688, %v726
    %v735 = vmul.f32 %v690, %v727
    %v736 = vmul.f32 %v692, %v728
    %v737 = vmul.f32 %v694, %v729
    %v738 = vmul.f32 %v696, %v730
    %v739 = vmul.f32 %v698, %v731
    %v740 = vmul.f32 %v700, %v732
    %v741 = vpack.c.bf16 %v733, %v733
    %v742 = vpack.c.bf16 %v734, %v734
    %v743 = vpack.c.bf16 %v735, %v735
    %v744 = vpack.c.bf16 %v736, %v736
    %v745 = vpack.c.bf16 %v737, %v737
    %v746 = vpack.c.bf16 %v738, %v738
    %v747 = vpack.c.bf16 %v739, %v739
    %v748 = vpack.c.bf16 %v740, %v740
    %v750 = vsel %vm652, %v741, 0
    %v753 = vsel %vm159, %v436, 0
    %755 = vmatpush.bf16.msra.mxu0 0
    %756 = vmatpush.bf16.msra.mxu0 0
    %757 = vmatpush.bf16.msra.mxu0 0
    %758 = vmatpush.bf16.msra.mxu0 0
    %759 = vmatpush.bf16.msra.mxu0 0
    %760 = vmatpush.bf16.msra.mxu0 0
    %761 = vmatpush.bf16.msra.mxu0 0
    %762 = vmatpush.bf16.msra.mxu0 %v753
    %763 = vmatmul.bf16.gmra.mxu0 %v750
    %v764 = vpop.f32.mrf.mxu0
    %v765 = vadd.f32 0.0, %v764
    %v766 = vpop.f32.mrf.mxu0
    %767 = vdwg.mxu0
    %v769 = vsel %vm652, %v742, 0
    %v772 = vsel %vm159, %v438, 0
    %774 = vmatpush.bf16.msra.mxu0 0
    %775 = vmatpush.bf16.msra.mxu0 0
    %776 = vmatpush.bf16.msra.mxu0 0
    %777 = vmatpush.bf16.msra.mxu0 0
    %778 = vmatpush.bf16.msra.mxu0 0
    %779 = vmatpush.bf16.msra.mxu0 0
    %780 = vmatpush.bf16.msra.mxu0 0
    %781 = vmatpush.bf16.msra.mxu0 %v772
    %782 = vmatmul.bf16.gmra.mxu0 %v769
    %v783 = vpop.f32.mrf.mxu0
    %v784 = vadd.f32 0.0, %v783
    %v785 = vpop.f32.mrf.mxu0
    %786 = vdwg.mxu0
    %v788 = vsel %vm652, %v743, 0
    %v791 = vsel %vm159, %v464, 0
    %793 = vmatpush.bf16.msra.mxu0 0
    %794 = vmatpush.bf16.msra.mxu0 0
    %795 = vmatpush.bf16.msra.mxu0 0
    %796 = vmatpush.bf16.msra.mxu0 0
    %797 = vmatpush.bf16.msra.mxu0 0
    %798 = vmatpush.bf16.msra.mxu0 0
    %799 = vmatpush.bf16.msra.mxu0 0
    %800 = vmatpush.bf16.msra.mxu0 %v791
    %801 = vmatmul.bf16.gmra.mxu0 %v788
    %v802 = vpop.f32.mrf.mxu0
    %v803 = vadd.f32 0.0, %v802
    %v804 = vpop.f32.mrf.mxu0
    %805 = vdwg.mxu0
    %v807 = vsel %vm652, %v744, 0
    %v810 = vsel %vm159, %v466, 0
    %812 = vmatpush.bf16.msra.mxu0 0
    %813 = vmatpush.bf16.msra.mxu0 0
    %814 = vmatpush.bf16.msra.mxu0 0
    %815 = vmatpush.bf16.msra.mxu0 0
    %816 = vmatpush.bf16.msra.mxu0 0
    %817 = vmatpush.bf16.msra.mxu0 0
    %818 = vmatpush.bf16.msra.mxu0 0
    %819 = vmatpush.bf16.msra.mxu0 %v810
    %820 = vmatmul.bf16.gmra.mxu0 %v807
    %v821 = vpop.f32.mrf.mxu0
    %v822 = vadd.f32 0.0, %v821
    %v823 = vpop.f32.mrf.mxu0
    %824 = vdwg.mxu0
    %v826 = vsel %vm652, %v745, 0
    %v829 = vsel %vm159, %v468, 0
    %831 = vmatpush.bf16.msra.mxu0 0
    %832 = vmatpush.bf16.msra.mxu0 0
    %833 = vmatpush.bf16.msra.mxu0 0
    %834 = vmatpush.bf16.msra.mxu0 0
    %835 = vmatpush.bf16.msra.mxu0 0
    %836 = vmatpush.bf16.msra.mxu0 0
    %837 = vmatpush.bf16.msra.mxu0 0
    %838 = vmatpush.bf16.msra.mxu0 %v829
    %839 = vmatmul.bf16.gmra.mxu0 %v826
    %v840 = vpop.f32.mrf.mxu0
    %v841 = vadd.f32 0.0, %v840
    %v842 = vpop.f32.mrf.mxu0
    %843 = vdwg.mxu0
    %v845 = vsel %vm652, %v746, 0
    %v848 = vsel %vm159, %v470, 0
    %850 = vmatpush.bf16.msra.mxu0 0
    %851 = vmatpush.bf16.msra.mxu0 0
    %852 = vmatpush.bf16.msra.mxu0 0
    %853 = vmatpush.bf16.msra.mxu0 0
    %854 = vmatpush.bf16.msra.mxu0 0
    %855 = vmatpush.bf16.msra.mxu0 0
    %856 = vmatpush.bf16.msra.mxu0 0
    %857 = vmatpush.bf16.msra.mxu0 %v848
    %858 = vmatmul.bf16.gmra.mxu0 %v845
    %v859 = vpop.f32.mrf.mxu0
    %v860 = vadd.f32 0.0, %v859
    %v861 = vpop.f32.mrf.mxu0
    %862 = vdwg.mxu0
    %v864 = vsel %vm652, %v747, 0
    %v867 = vsel %vm159, %v472, 0
    %869 = vmatpush.bf16.msra.mxu0 0
    %870 = vmatpush.bf16.msra.mxu0 0
    %871 = vmatpush.bf16.msra.mxu0 0
    %872 = vmatpush.bf16.msra.mxu0 0
    %873 = vmatpush.bf16.msra.mxu0 0
    %874 = vmatpush.bf16.msra.mxu0 0
    %875 = vmatpush.bf16.msra.mxu0 0
    %876 = vmatpush.bf16.msra.mxu0 %v867
    %877 = vmatmul.bf16.gmra.mxu0 %v864
    %v878 = vpop.f32.mrf.mxu0
    %v879 = vadd.f32 0.0, %v878
    %v880 = vpop.f32.mrf.mxu0
    %881 = vdwg.mxu0
    %v883 = vsel %vm652, %v748, 0
    %v886 = vsel %vm159, %v474, 0
    %888 = vmatpush.bf16.msra.mxu0 0
    %889 = vmatpush.bf16.msra.mxu0 0
    %890 = vmatpush.bf16.msra.mxu0 0
    %891 = vmatpush.bf16.msra.mxu0 0
    %892 = vmatpush.bf16.msra.mxu0 0
    %893 = vmatpush.bf16.msra.mxu0 0
    %894 = vmatpush.bf16.msra.mxu0 0
    %895 = vmatpush.bf16.msra.mxu0 %v886
    %896 = vmatmul.bf16.gmra.mxu0 %v883
    %v897 = vpop.f32.mrf.mxu0
    %v898 = vadd.f32 0.0, %v897
    %v899 = vpop.f32.mrf.mxu0
    %900 = vdwg.mxu0
    %903 = vrot.lane.b32.xlu0 %v803, 32
    %v904 = vpop.permute.xlu0 %903
    %905 = vrot.lane.b32.xlu0 %v822, 32
    %v906 = vpop.permute.xlu0 %905
    %911 = vrot.lane.b32.xlu0 %v841, 64
    %v912 = vpop.permute.xlu0 %911
    %913 = vrot.lane.b32.xlu0 %v860, 64
    %v914 = vpop.permute.xlu0 %913
    %919 = vrot.lane.b32.xlu0 %v879, 96
    %v920 = vpop.permute.xlu0 %919
    %921 = vrot.lane.b32.xlu0 %v898, 96
    %v922 = vpop.permute.xlu0 %921
    %v925 = vsel %vm499, %v765, %v904
    %v926 = vsel %vm499, %v784, %v906
    %vm927 = vcmask 523264
    %v928 = vsel %vm927, %v925, %v912
    %v929 = vsel %vm927, %v926, %v914
    %vm930 = vcmask 785408
    %v931 = vsel %vm930, %v928, %v920
    %v932 = vsel %vm930, %v929, %v922
    %v933 = vpack.c.bf16 %v932, %v931
    %v934 = vld [vmem:[#allocation4] sm:$0xf]
    %v935 = vld [vmem:[#allocation4 + $0x4] sm:$0xf]
    %v936 = vld [vmem:[#allocation4 + $0x8] sm:$0xf]
    %v937 = vld [vmem:[#allocation4 + $0xc] sm:$0xf]
    %v938 = vld [vmem:[#allocation4 + $0x10] sm:$0xf]
    %v939 = vld [vmem:[#allocation4 + $0x14] sm:$0xf]
    %v940 = vld [vmem:[#allocation4 + $0x18] sm:$0xf]
    %v941 = vld [vmem:[#allocation4 + $0x1c] sm:$0xf]
    %v942 = vld [vmem:[#allocation4 + $0x20] sm:$0xf]
    %v943 = vld [vmem:[#allocation4 + $0x24] sm:$0xf]
    %v944 = vld [vmem:[#allocation4 + $0x28] sm:$0xf]
    %v945 = vld [vmem:[#allocation4 + $0x2c] sm:$0xf]
    %v946 = vld [vmem:[#allocation4 + $0x30] sm:$0xf]
    %v947 = vld [vmem:[#allocation4 + $0x34] sm:$0xf]
    %v948 = vld [vmem:[#allocation4 + $0x38] sm:$0xf]
    %v949 = vld [vmem:[#allocation4 + $0x3c] sm:$0xf]
    %v950 = vld [vmem:[%s7] sm:$0x1]
    %v952 = vperm.slane %v950, 0
    %v970 = vunpack.c.l.b16 %v934
    %v971 = vunpack.c.l.b16 %v935
    %v972 = vunpack.c.l.b16 %v936
    %v973 = vunpack.c.l.b16 %v937
    %v974 = vunpack.c.l.b16 %v938
    %v975 = vunpack.c.l.b16 %v939
    %v976 = vunpack.c.l.b16 %v940
    %v977 = vunpack.c.l.b16 %v941
    %v978 = vunpack.c.l.b16 %v942
    %v979 = vunpack.c.l.b16 %v943
    %v980 = vunpack.c.l.b16 %v944
    %v981 = vunpack.c.l.b16 %v945
    %v982 = vunpack.c.l.b16 %v946
    %v983 = vunpack.c.l.b16 %v947
    %v984 = vunpack.c.l.b16 %v948
    %v985 = vunpack.c.l.b16 %v949
    %v986 = vpack.c.b16 %v971, %v970
    %v987 = vpack.c.b16 %v973, %v972
    %v988 = vpack.c.b16 %v975, %v974
    %v989 = vpack.c.b16 %v977, %v976
    %v990 = vpack.c.b16 %v979, %v978
    %v991 = vpack.c.b16 %v981, %v980
    %v992 = vpack.c.b16 %v983, %v982
    %v993 = vpack.c.b16 %v985, %v984
    %1002 = vmatpush.bf16.msra.mxu0 %v993
    %1003 = vmatpush.bf16.msra.mxu0 %v992
    %1004 = vmatpush.bf16.msra.mxu0 %v991
    %1005 = vmatpush.bf16.msra.mxu0 %v990
    %1006 = vmatpush.bf16.msra.mxu0 %v989
    %1007 = vmatpush.bf16.msra.mxu0 %v988
    %1008 = vmatpush.bf16.msra.mxu0 %v987
    %1009 = vmatpush.bf16.msra.mxu0 %v986
    %1010 = vmatmul.bf16.gmra.mxu0 %v933
    %v1011 = vpop.f32.mrf.mxu0
    %v1012 = vadd.f32 %v952, %v1011
    %v1013 = vpop.f32.mrf.mxu0
    %v1014 = vadd.f32 %v952, %v1013
    %1015 = vdwg.mxu0
    %v1016 = vadd.f32 %v1012, %v222
    %v1017 = vadd.f32 %v1014, %v223
    %v1018 = vld [vmem:[%s8] sm:$0x1]
    %v1019 = vld [vmem:[%s9] sm:$0x1]
    %1020 = vadd.xlane.f32.xlu0 %v1016
    %v1021 = vpop.xlane.xlu0 %1020
    %1022 = vadd.xlane.f32.xlu0 %v1017
    %v1023 = vpop.xlane.xlu0 %1022
    %v1024 = vmul.f32 %v1021, %v177
    %v1025 = vmul.f32 %v1023, %v177
    %v1026 = vsub.f32 %v1016, %v1024
    %v1027 = vsub.f32 %v1017, %v1025
    %v1028 = vmul.f32 %v1026, %v1026
    %v1029 = vmul.f32 %v1027, %v1027
    %1030 = vadd.xlane.f32.xlu0 %v1028
    %v1031 = vpop.xlane.xlu0 %1030
    %1032 = vadd.xlane.f32.xlu0 %v1029
    %v1033 = vpop.xlane.xlu0 %1032
    %v1034 = vmul.f32 %v1031, %v177
    %v1035 = vmul.f32 %v1033, %v177
    %v1036 = vadd.f32 %v1034, 1e-12
    %v1037 = vadd.f32 %v1035, 1e-12
    %v1038 = vrsqrt.pop %v1036
    %v1039 = vmul.f32 %v1038, %v1036
    %v1040 = vmul.f32 %v1039, %v1038
    %v1041 = vmul.f32 0.5, %v1040
    %v1042 = vsub.f32 1.5, %v1041
    %v1043 = vmul.f32 %v1038, %v1042
    %vm1044 = vweird.f32 %v1036
    %vm1045 = vweird.f32 %v1038
    %vm1046 = vmor %vm1044, %vm1045
    %v1047 = vsel %vm1046, %v1038, %v1043
    %v1048 = vrsqrt.pop %v1037
    %v1049 = vmul.f32 %v1048, %v1037
    %v1050 = vmul.f32 %v1049, %v1048
    %v1051 = vmul.f32 0.5, %v1050
    %v1052 = vsub.f32 1.5, %v1051
    %v1053 = vmul.f32 %v1048, %v1052
    %vm1054 = vweird.f32 %v1037
    %vm1055 = vweird.f32 %v1048
    %vm1056 = vmor %vm1054, %vm1055
    %v1057 = vsel %vm1056, %v1048, %v1053
    %v1058 = vmul.f32 %v1026, %v1047
    %v1059 = vmul.f32 %v1027, %v1057
    %v1061 = vperm.slane %v1018, 0
    %v1063 = vmul.f32 %v1058, %v1061
    %v1064 = vmul.f32 %v1059, %v1061
    %v1066 = vperm.slane %v1019, 0
    %v1068 = vadd.f32 %v1063, %v1066
    %v1069 = vadd.f32 %v1064, %v1066
    %v1070 = vpack.c.bf16 %v1069, %v1068
    %v1071 = vld [vmem:[#allocation6] sm:$0xff]
    %v1072 = vld [vmem:[#allocation6 + $0x8] sm:$0xff]
    %v1073 = vld [vmem:[#allocation6 + $0x10] sm:$0xff]
    %v1074 = vld [vmem:[#allocation6 + $0x18] sm:$0xff]
    %v1075 = vld [vmem:[#allocation6 + $0x20] sm:$0xff]
    %v1076 = vld [vmem:[#allocation6 + $0x28] sm:$0xff]
    %v1077 = vld [vmem:[#allocation6 + $0x30] sm:$0xff]
    %v1078 = vld [vmem:[#allocation6 + $0x38] sm:$0xff]
    %v1079 = vld [vmem:[#allocation6 + $0x40] sm:$0xff]
    %v1080 = vld [vmem:[#allocation6 + $0x48] sm:$0xff]
    %v1081 = vld [vmem:[#allocation6 + $0x50] sm:$0xff]
    %v1082 = vld [vmem:[#allocation6 + $0x58] sm:$0xff]
    %v1083 = vld [vmem:[#allocation6 + $0x60] sm:$0xff]
    %v1084 = vld [vmem:[#allocation6 + $0x68] sm:$0xff]
    %v1085 = vld [vmem:[#allocation6 + $0x70] sm:$0xff]
    %v1086 = vld [vmem:[#allocation6 + $0x78] sm:$0xff]
    %v1087 = vld [vmem:[%s11] sm:$0x3]
    %v1089 = vperm.slane %v1087, 0
    %v1090 = vperm.slane %v1087, 1
    %v1109 = vunpack.c.l.b16 %v1071
    %v1110 = vunpack.c.h.b16 %v1071
    %v1111 = vunpack.c.l.b16 %v1072
    %v1112 = vunpack.c.h.b16 %v1072
    %v1113 = vunpack.c.l.b16 %v1073
    %v1114 = vunpack.c.h.b16 %v1073
    %v1115 = vunpack.c.l.b16 %v1074
    %v1116 = vunpack.c.h.b16 %v1074
    %v1117 = vunpack.c.l.b16 %v1075
    %v1118 = vunpack.c.h.b16 %v1075
    %v1119 = vunpack.c.l.b16 %v1076
    %v1120 = vunpack.c.h.b16 %v1076
    %v1121 = vunpack.c.l.b16 %v1077
    %v1122 = vunpack.c.h.b16 %v1077
    %v1123 = vunpack.c.l.b16 %v1078
    %v1124 = vunpack.c.h.b16 %v1078
    %v1125 = vunpack.c.l.b16 %v1079
    %v1126 = vunpack.c.h.b16 %v1079
    %v1127 = vunpack.c.l.b16 %v1080
    %v1128 = vunpack.c.h.b16 %v1080
    %v1129 = vunpack.c.l.b16 %v1081
    %v1130 = vunpack.c.h.b16 %v1081
    %v1131 = vunpack.c.l.b16 %v1082
    %v1132 = vunpack.c.h.b16 %v1082
    %v1133 = vunpack.c.l.b16 %v1083
    %v1134 = vunpack.c.h.b16 %v1083
    %v1135 = vunpack.c.l.b16 %v1084
    %v1136 = vunpack.c.h.b16 %v1084
    %v1137 = vunpack.c.l.b16 %v1085
    %v1138 = vunpack.c.h.b16 %v1085
    %v1139 = vunpack.c.l.b16 %v1086
    %v1140 = vunpack.c.h.b16 %v1086
    %v1141 = vpack.c.b16 %v1111, %v1109
    %v1142 = vpack.c.b16 %v1112, %v1110
    %v1143 = vpack.c.b16 %v1115, %v1113
    %v1144 = vpack.c.b16 %v1116, %v1114
    %v1145 = vpack.c.b16 %v1119, %v1117
    %v1146 = vpack.c.b16 %v1120, %v1118
    %v1147 = vpack.c.b16 %v1123, %v1121
    %v1148 = vpack.c.b16 %v1124, %v1122
    %v1149 = vpack.c.b16 %v1127, %v1125
    %v1150 = vpack.c.b16 %v1128, %v1126
    %v1151 = vpack.c.b16 %v1131, %v1129
    %v1152 = vpack.c.b16 %v1132, %v1130
    %v1153 = vpack.c.b16 %v1135, %v1133
    %v1154 = vpack.c.b16 %v1136, %v1134
    %v1155 = vpack.c.b16 %v1139, %v1137
    %v1156 = vpack.c.b16 %v1140, %v1138
    %1173 = vmatpush.bf16.msra.mxu0 %v1155
    %1174 = vmatpush.bf16.msra.mxu0 %v1153
    %1175 = vmatpush.bf16.msra.mxu0 %v1151
    %1176 = vmatpush.bf16.msra.mxu0 %v1149
    %1177 = vmatpush.bf16.msra.mxu0 %v1147
    %1178 = vmatpush.bf16.msra.mxu0 %v1145
    %1179 = vmatpush.bf16.msra.mxu0 %v1143
    %1180 = vmatpush.bf16.msra.mxu0 %v1141
    %1181 = vmatmul.bf16.gmra.mxu0 %v1070
    %v1182 = vpop.f32.mrf.mxu0
    %v1183 = vadd.f32 %v1089, %v1182
    %v1184 = vpop.f32.mrf.mxu0
    %v1185 = vadd.f32 %v1089, %v1184
    %1186 = vdwg.mxu0
    %1187 = vmatpush.bf16.msra.mxu0 %v1156
    %1188 = vmatpush.bf16.msra.mxu0 %v1154
    %1189 = vmatpush.bf16.msra.mxu0 %v1152
    %1190 = vmatpush.bf16.msra.mxu0 %v1150
    %1191 = vmatpush.bf16.msra.mxu0 %v1148
    %1192 = vmatpush.bf16.msra.mxu0 %v1146
    %1193 = vmatpush.bf16.msra.mxu0 %v1144
    %1194 = vmatpush.bf16.msra.mxu0 %v1142
    %1195 = vmatmul.bf16.gmra.mxu0 %v1070
    %v1196 = vpop.f32.mrf.mxu0
    %v1197 = vadd.f32 %v1090, %v1196
    %v1198 = vpop.f32.mrf.mxu0
    %v1199 = vadd.f32 %v1090, %v1198
    %1200 = vdwg.mxu0
    %v1201 = vmul.f32 %v1183, %v1183
    %v1202 = vmul.f32 %v1197, %v1197
    %v1203 = vmul.f32 %v1185, %v1185
    %v1204 = vmul.f32 %v1199, %v1199
    %v1205 = vmul.f32 %v1183, %v1201
    %v1206 = vmul.f32 %v1197, %v1202
    %v1207 = vmul.f32 %v1185, %v1203
    %v1208 = vmul.f32 %v1199, %v1204
    %v1209 = vmul.f32 %v1205, 0.044715
    %v1210 = vmul.f32 %v1206, 0.044715
    %v1211 = vmul.f32 %v1207, 0.044715
    %v1212 = vmul.f32 %v1208, 0.044715
    %v1213 = vadd.f32 %v1183, %v1209
    %v1214 = vadd.f32 %v1197, %v1210
    %v1215 = vadd.f32 %v1185, %v1211
    %v1216 = vadd.f32 %v1199, %v1212
    %v1217 = vmul.f32 %v1213, 0.7978846
    %v1218 = vmul.f32 %v1214, 0.7978846
    %v1219 = vmul.f32 %v1215, 0.7978846
    %v1220 = vmul.f32 %v1216, 0.7978846
    %v1221 = vtanh.pop %v1217
    %v1222 = vtanh.pop %v1218
    %v1223 = vtanh.pop %v1219
    %v1224 = vtanh.pop %v1220
    %v1225 = vadd.f32 %v1221, 1.0
    %v1226 = vadd.f32 %v1222, 1.0
    %v1227 = vadd.f32 %v1223, 1.0
    %v1228 = vadd.f32 %v1224, 1.0
    %v1229 = vmul.f32 %v1225, 0.5
    %v1230 = vmul.f32 %v1226, 0.5
    %v1231 = vmul.f32 %v1227, 0.5
    %v1232 = vmul.f32 %v1228, 0.5
    %v1233 = vmul.f32 %v1183, %v1229
    %v1234 = vmul.f32 %v1197, %v1230
    %v1235 = vmul.f32 %v1185, %v1231
    %v1236 = vmul.f32 %v1199, %v1232
    %v1237 = vpack.c.bf16 %v1235, %v1233
    %v1238 = vpack.c.bf16 %v1236, %v1234
    %v1239 = vld [vmem:[#allocation7] sm:$0xf]
    %v1240 = vld [vmem:[#allocation7 + $0x4] sm:$0xf]
    %v1241 = vld [vmem:[#allocation7 + $0x8] sm:$0xf]
    %v1242 = vld [vmem:[#allocation7 + $0xc] sm:$0xf]
    %v1243 = vld [vmem:[#allocation7 + $0x10] sm:$0xf]
    %v1244 = vld [vmem:[#allocation7 + $0x14] sm:$0xf]
    %v1245 = vld [vmem:[#allocation7 + $0x18] sm:$0xf]
    %v1246 = vld [vmem:[#allocation7 + $0x1c] sm:$0xf]
    %v1247 = vld [vmem:[#allocation7 + $0x20] sm:$0xf]
    %v1248 = vld [vmem:[#allocation7 + $0x24] sm:$0xf]
    %v1249 = vld [vmem:[#allocation7 + $0x28] sm:$0xf]
    %v1250 = vld [vmem:[#allocation7 + $0x2c] sm:$0xf]
    %v1251 = vld [vmem:[#allocation7 + $0x30] sm:$0xf]
    %v1252 = vld [vmem:[#allocation7 + $0x34] sm:$0xf]
    %v1253 = vld [vmem:[#allocation7 + $0x38] sm:$0xf]
    %v1254 = vld [vmem:[#allocation7 + $0x3c] sm:$0xf]
    %v1255 = vld [vmem:[#allocation7 + $0x40] sm:$0xf]
    %v1256 = vld [vmem:[#allocation7 + $0x44] sm:$0xf]
    %v1257 = vld [vmem:[#allocation7 + $0x48] sm:$0xf]
    %v1258 = vld [vmem:[#allocation7 + $0x4c] sm:$0xf]
    %v1259 = vld [vmem:[#allocation7 + $0x50] sm:$0xf]
    %v1260 = vld [vmem:[#allocation7 + $0x54] sm:$0xf]
    %v1261 = vld [vmem:[#allocation7 + $0x58] sm:$0xf]
    %v1262 = vld [vmem:[#allocation7 + $0x5c] sm:$0xf]
    %v1263 = vld [vmem:[#allocation7 + $0x60] sm:$0xf]
    %v1264 = vld [vmem:[#allocation7 + $0x64] sm:$0xf]
    %v1265 = vld [vmem:[#allocation7 + $0x68] sm:$0xf]
    %v1266 = vld [vmem:[#allocation7 + $0x6c] sm:$0xf]
    %v1267 = vld [vmem:[#allocation7 + $0x70] sm:$0xf]
    %v1268 = vld [vmem:[#allocation7 + $0x74] sm:$0xf]
    %v1269 = vld [vmem:[#allocation7 + $0x78] sm:$0xf]
    %v1270 = vld [vmem:[#allocation7 + $0x7c] sm:$0xf]
    %v1271 = vld [vmem:[%s13] sm:$0x1]
    %v1273 = vperm.slane %v1271, 0
    %v1307 = vunpack.c.l.b16 %v1239
    %v1308 = vunpack.c.l.b16 %v1240
    %v1309 = vunpack.c.l.b16 %v1241
    %v1310 = vunpack.c.l.b16 %v1242
    %v1311 = vunpack.c.l.b16 %v1243
    %v1312 = vunpack.c.l.b16 %v1244
    %v1313 = vunpack.c.l.b16 %v1245
    %v1314 = vunpack.c.l.b16 %v1246
    %v1315 = vunpack.c.l.b16 %v1247
    %v1316 = vunpack.c.l.b16 %v1248
    %v1317 = vunpack.c.l.b16 %v1249
    %v1318 = vunpack.c.l.b16 %v1250
    %v1319 = vunpack.c.l.b16 %v1251
    %v1320 = vunpack.c.l.b16 %v1252
    %v1321 = vunpack.c.l.b16 %v1253
    %v1322 = vunpack.c.l.b16 %v1254
    %v1323 = vunpack.c.l.b16 %v1255
    %v1324 = vunpack.c.l.b16 %v1256
    %v1325 = vunpack.c.l.b16 %v1257
    %v1326 = vunpack.c.l.b16 %v1258
    %v1327 = vunpack.c.l.b16 %v1259
    %v1328 = vunpack.c.l.b16 %v1260
    %v1329 = vunpack.c.l.b16 %v1261
    %v1330 = vunpack.c.l.b16 %v1262
    %v1331 = vunpack.c.l.b16 %v1263
    %v1332 = vunpack.c.l.b16 %v1264
    %v1333 = vunpack.c.l.b16 %v1265
    %v1334 = vunpack.c.l.b16 %v1266
    %v1335 = vunpack.c.l.b16 %v1267
    %v1336 = vunpack.c.l.b16 %v1268
    %v1337 = vunpack.c.l.b16 %v1269
    %v1338 = vunpack.c.l.b16 %v1270
    %v1339 = vpack.c.b16 %v1308, %v1307
    %v1340 = vpack.c.b16 %v1310, %v1309
    %v1341 = vpack.c.b16 %v1312, %v1311
    %v1342 = vpack.c.b16 %v1314, %v1313
    %v1343 = vpack.c.b16 %v1316, %v1315
    %v1344 = vpack.c.b16 %v1318, %v1317
    %v1345 = vpack.c.b16 %v1320, %v1319
    %v1346 = vpack.c.b16 %v1322, %v1321
    %v1347 = vpack.c.b16 %v1324, %v1323
    %v1348 = vpack.c.b16 %v1326, %v1325
    %v1349 = vpack.c.b16 %v1328, %v1327
    %v1350 = vpack.c.b16 %v1330, %v1329
    %v1351 = vpack.c.b16 %v1332, %v1331
    %v1352 = vpack.c.b16 %v1334, %v1333
    %v1353 = vpack.c.b16 %v1336, %v1335
    %v1354 = vpack.c.b16 %v1338, %v1337
    %1371 = vmatpush.bf16.msra.mxu0 %v1346
    %1372 = vmatpush.bf16.msra.mxu0 %v1345
    %1373 = vmatpush.bf16.msra.mxu0 %v1344
    %1374 = vmatpush.bf16.msra.mxu0 %v1343
    %1375 = vmatpush.bf16.msra.mxu0 %v1342
    %1376 = vmatpush.bf16.msra.mxu0 %v1341
    %1377 = vmatpush.bf16.msra.mxu0 %v1340
    %1378 = vmatpush.bf16.msra.mxu0 %v1339
    %1379 = vmatmul.bf16.gmra.mxu0 %v1237
    %v1380 = vpop.f32.mrf.mxu0
    %v1381 = vadd.f32 %v1273, %v1380
    %v1382 = vpop.f32.mrf.mxu0
    %v1383 = vadd.f32 %v1273, %v1382
    %1384 = vdwg.mxu0
    %1385 = vmatpush.bf16.msra.mxu0 %v1354
    %1386 = vmatpush.bf16.msra.mxu0 %v1353
    %1387 = vmatpush.bf16.msra.mxu0 %v1352
    %1388 = vmatpush.bf16.msra.mxu0 %v1351
    %1389 = vmatpush.bf16.msra.mxu0 %v1350
    %1390 = vmatpush.bf16.msra.mxu0 %v1349
    %1391 = vmatpush.bf16.msra.mxu0 %v1348
    %1392 = vmatpush.bf16.msra.mxu0 %v1347
    %1393 = vmatmul.bf16.gmra.mxu0 %v1238
    %v1394 = vpop.f32.mrf.mxu0
    %v1395 = vadd.f32 %v1381, %v1394
    %v1396 = vpop.f32.mrf.mxu0
    %v1397 = vadd.f32 %v1383, %v1396
    %1398 = vdwg.mxu0
    %v1399 = vadd.f32 %v1395, %v1068
    %v1400 = vadd.f32 %v1397, %v1069
    %v1401 = vld [vmem:[%s14] sm:$0x1]
    %v1402 = vld [vmem:[%s15] sm:$0x1]
    %1403 = vadd.xlane.f32.xlu0 %v1399
    %v1404 = vpop.xlane.xlu0 %1403
    %1405 = vadd.xlane.f32.xlu0 %v1400
    %v1406 = vpop.xlane.xlu0 %1405
    %v1407 = vmul.f32 %v1404, %v177
    %v1408 = vmul.f32 %v1406, %v177
    %v1409 = vsub.f32 %v1399, %v1407
    %v1410 = vsub.f32 %v1400, %v1408
    %v1411 = vmul.f32 %v1409, %v1409
    %v1412 = vmul.f32 %v1410, %v1410
    %1413 = vadd.xlane.f32.xlu0 %v1411
    %v1414 = vpop.xlane.xlu0 %1413
    %1415 = vadd.xlane.f32.xlu0 %v1412
    %v1416 = vpop.xlane.xlu0 %1415
    %v1417 = vmul.f32 %v1414, %v177
    %v1418 = vmul.f32 %v1416, %v177
    %v1419 = vadd.f32 %v1417, 1e-12
    %v1420 = vadd.f32 %v1418, 1e-12
    %v1421 = vrsqrt.pop %v1419
    %v1422 = vmul.f32 %v1421, %v1419
    %v1423 = vmul.f32 %v1422, %v1421
    %v1424 = vmul.f32 0.5, %v1423
    %v1425 = vsub.f32 1.5, %v1424
    %v1426 = vmul.f32 %v1421, %v1425
    %vm1427 = vweird.f32 %v1419
    %vm1428 = vweird.f32 %v1421
    %vm1429 = vmor %vm1427, %vm1428
    %v1430 = vsel %vm1429, %v1421, %v1426
    %v1431 = vrsqrt.pop %v1420
    %v1432 = vmul.f32 %v1431, %v1420
    %v1433 = vmul.f32 %v1432, %v1431
    %v1434 = vmul.f32 0.5, %v1433
    %v1435 = vsub.f32 1.5, %v1434
    %v1436 = vmul.f32 %v1431, %v1435
    %vm1437 = vweird.f32 %v1420
    %vm1438 = vweird.f32 %v1431
    %vm1439 = vmor %vm1437, %vm1438
    %v1440 = vsel %vm1439, %v1431, %v1436
    %v1441 = vmul.f32 %v1409, %v1430
    %v1442 = vmul.f32 %v1410, %v1440
    %v1444 = vperm.slane %v1401, 0
    %v1446 = vmul.f32 %v1441, %v1444
    %v1447 = vmul.f32 %v1442, %v1444
    %v1449 = vperm.slane %v1402, 0
    %v1451 = vadd.f32 %v1446, %v1449
    %v1452 = vadd.f32 %v1447, %v1449
    %v1453 = vpack.c.bf16 %v1452, %v1451
    %s1454 = scalar_lea.vmem [#allocation2], 384
    %v1455 = vld [vmem:[%s1454] sm:$0xff]
    %v1456 = vld [vmem:[%s1454 + $0x8] sm:$0xf]
    %v1457 = vld [vmem:[%s1454 + $0xc] sm:$0xff]
    %v1458 = vld [vmem:[%s1454 + $0x14] sm:$0xf]
    %v1459 = vld [vmem:[%s1454 + $0x18] sm:$0xff]
    %v1460 = vld [vmem:[%s1454 + $0x20] sm:$0xf]
    %v1461 = vld [vmem:[%s1454 + $0x24] sm:$0xff]
    %v1462 = vld [vmem:[%s1454 + $0x2c] sm:$0xf]
    %v1463 = vld [vmem:[%s1454 + $0x30] sm:$0xff]
    %v1464 = vld [vmem:[%s1454 + $0x38] sm:$0xf]
    %v1465 = vld [vmem:[%s1454 + $0x3c] sm:$0xff]
    %v1466 = vld [vmem:[%s1454 + $0x44] sm:$0xf]
    %v1467 = vld [vmem:[%s1454 + $0x48] sm:$0xff]
    %v1468 = vld [vmem:[%s1454 + $0x50] sm:$0xf]
    %v1469 = vld [vmem:[%s1454 + $0x54] sm:$0xff]
    %v1470 = vld [vmem:[%s1454 + $0x5c] sm:$0xf]
    %v1471 = vld [vmem:[%s1454 + $0x60] sm:$0xff]
    %v1472 = vld [vmem:[%s1454 + $0x68] sm:$0xf]
    %v1473 = vld [vmem:[%s1454 + $0x6c] sm:$0xff]
    %v1474 = vld [vmem:[%s1454 + $0x74] sm:$0xf]
    %v1475 = vld [vmem:[%s1454 + $0x78] sm:$0xff]
    %v1476 = vld [vmem:[%s1454 + $0x80] sm:$0xf]
    %v1477 = vld [vmem:[%s1454 + $0x84] sm:$0xff]
    %v1478 = vld [vmem:[%s1454 + $0x8c] sm:$0xf]
    %v1479 = vld [vmem:[%s1454 + $0x90] sm:$0xff]
    %v1480 = vld [vmem:[%s1454 + $0x98] sm:$0xf]
    %v1481 = vld [vmem:[%s1454 + $0x9c] sm:$0xff]
    %v1482 = vld [vmem:[%s1454 + $0xa4] sm:$0xf]
    %v1483 = vld [vmem:[%s1454 + $0xa8] sm:$0xff]
    %v1484 = vld [vmem:[%s1454 + $0xb0] sm:$0xf]
    %v1485 = vld [vmem:[%s1454 + $0xb4] sm:$0xff]
    %v1486 = vld [vmem:[%s1454 + $0xbc] sm:$0xf]
    %s1487 = scalar_lea.vmem %s5, 6
    %v1488 = vld [vmem:[%s1487] sm:$0x7]
    %v1490 = vperm.slane %v1488, 0
    %v1491 = vperm.slane %v1488, 1
    %v1492 = vperm.slane %v1488, 2
    %v1528 = vunpack.c.l.b16 %v1455
    %v1529 = vunpack.c.h.b16 %v1455
    %v1530 = vunpack.c.l.b16 %v1456
    %v1531 = vunpack.c.l.b16 %v1457
    %v1532 = vunpack.c.h.b16 %v1457
    %v1533 = vunpack.c.l.b16 %v1458
    %v1534 = vunpack.c.l.b16 %v1459
    %v1535 = vunpack.c.h.b16 %v1459
    %v1536 = vunpack.c.l.b16 %v1460
    %v1537 = vunpack.c.l.b16 %v1461
    %v1538 = vunpack.c.h.b16 %v1461
    %v1539 = vunpack.c.l.b16 %v1462
    %v1540 = vunpack.c.l.b16 %v1463
    %v1541 = vunpack.c.h.b16 %v1463
    %v1542 = vunpack.c.l.b16 %v1464
    %v1543 = vunpack.c.l.b16 %v1465
    %v1544 = vunpack.c.h.b16 %v1465
    %v1545 = vunpack.c.l.b16 %v1466
    %v1546 = vunpack.c.l.b16 %v1467
    %v1547 = vunpack.c.h.b16 %v1467
    %v1548 = vunpack.c.l.b16 %v1468
    %v1549 = vunpack.c.l.b16 %v1469
    %v1550 = vunpack.c.h.b16 %v1469
    %v1551 = vunpack.c.l.b16 %v1470
    %v1552 = vunpack.c.l.b16 %v1471
    %v1553 = vunpack.c.h.b16 %v1471
    %v1554 = vunpack.c.l.b16 %v1472
    %v1555 = vunpack.c.l.b16 %v1473
    %v1556 = vunpack.c.h.b16 %v1473
    %v1557 = vunpack.c.l.b16 %v1474
    %v1558 = vunpack.c.l.b16 %v1475
    %v1559 = vunpack.c.h.b16 %v1475
    %v1560 = vunpack.c.l.b16 %v1476
    %v1561 = vunpack.c.l.b16 %v1477
    %v1562 = vunpack.c.h.b16 %v1477
    %v1563 = vunpack.c.l.b16 %v1478
    %v1564 = vunpack.c.l.b16 %v1479
    %v1565 = vunpack.c.h.b16 %v1479
    %v1566 = vunpack.c.l.b16 %v1480
    %v1567 = vunpack.c.l.b16 %v1481
    %v1568 = vunpack.c.h.b16 %v1481
    %v1569 = vunpack.c.l.b16 %v1482
    %v1570 = vunpack.c.l.b16 %v1483
    %v1571 = vunpack.c.h.b16 %v1483
    %v1572 = vunpack.c.l.b16 %v1484
    %v1573 = vunpack.c.l.b16 %v1485
    %v1574 = vunpack.c.h.b16 %v1485
    %v1575 = vunpack.c.l.b16 %v1486
    %v1576 = vpack.c.b16 %v1531, %v1528
    %v1577 = vpack.c.b16 %v1532, %v1529
    %v1578 = vpack.c.b16 %v1533, %v1530
    %v1579 = vpack.c.b16 %v1537, %v1534
    %v1580 = vpack.c.b16 %v1538, %v1535
    %v1581 = vpack.c.b16 %v1539, %v1536
    %v1582 = vpack.c.b16 %v1543, %v1540
    %v1583 = vpack.c.b16 %v1544, %v1541
    %v1584 = vpack.c.b16 %v1545, %v1542
    %v1585 = vpack.c.b16 %v1549, %v1546
    %v1586 = vpack.c.b16 %v1550, %v1547
    %v1587 = vpack.c.b16 %v1551, %v1548
    %v1588 = vpack.c.b16 %v1555, %v1552
    %v1589 = vpack.c.b16 %v1556, %v1553
    %v1590 = vpack.c.b16 %v1557, %v1554
    %v1591 = vpack.c.b16 %v1561, %v1558
    %v1592 = vpack.c.b16 %v1562, %v1559
    %v1593 = vpack.c.b16 %v1563, %v1560
    %v1594 = vpack.c.b16 %v1567, %v1564
    %v1595 = vpack.c.b16 %v1568, %v1565
    %v1596 = vpack.c.b16 %v1569, %v1566
    %v1597 = vpack.c.b16 %v1573, %v1570
    %v1598 = vpack.c.b16 %v1574, %v1571
    %v1599 = vpack.c.b16 %v1575, %v1572
    %1624 = vmatpush.bf16.msra.mxu0 %v1597
    %1625 = vmatpush.bf16.msra.mxu0 %v1594
    %1626 = vmatpush.bf16.msra.mxu0 %v1591
    %1627 = vmatpush.bf16.msra.mxu0 %v1588
    %1628 = vmatpush.bf16.msra.mxu0 %v1585
    %1629 = vmatpush.bf16.msra.mxu0 %v1582
    %1630 = vmatpush.bf16.msra.mxu0 %v1579
    %1631 = vmatpush.bf16.msra.mxu0 %v1576
    %1632 = vmatmul.bf16.gmra.mxu0 %v1453
    %v1633 = vpop.f32.mrf.mxu0
    %v1634 = vadd.f32 %v1490, %v1633
    %v1635 = vpop.f32.mrf.mxu0
    %v1636 = vadd.f32 %v1490, %v1635
    %1637 = vdwg.mxu0
    %1638 = vmatpush.bf16.msra.mxu0 %v1598
    %1639 = vmatpush.bf16.msra.mxu0 %v1595
    %1640 = vmatpush.bf16.msra.mxu0 %v1592
    %1641 = vmatpush.bf16.msra.mxu0 %v1589
    %1642 = vmatpush.bf16.msra.mxu0 %v1586
    %1643 = vmatpush.bf16.msra.mxu0 %v1583
    %1644 = vmatpush.bf16.msra.mxu0 %v1580
    %1645 = vmatpush.bf16.msra.mxu0 %v1577
    %1646 = vmatmul.bf16.gmra.mxu0 %v1453
    %v1647 = vpop.f32.mrf.mxu0
    %v1648 = vadd.f32 %v1491, %v1647
    %v1649 = vpop.f32.mrf.mxu0
    %v1650 = vadd.f32 %v1491, %v1649
    %1651 = vdwg.mxu0
    %1652 = vmatpush.bf16.msra.mxu0 %v1599
    %1653 = vmatpush.bf16.msra.mxu0 %v1596
    %1654 = vmatpush.bf16.msra.mxu0 %v1593
    %1655 = vmatpush.bf16.msra.mxu0 %v1590
    %1656 = vmatpush.bf16.msra.mxu0 %v1587
    %1657 = vmatpush.bf16.msra.mxu0 %v1584
    %1658 = vmatpush.bf16.msra.mxu0 %v1581
    %1659 = vmatpush.bf16.msra.mxu0 %v1578
    %1660 = vmatmul.bf16.gmra.mxu0 %v1453
    %v1661 = vpop.f32.mrf.mxu0
    %v1662 = vadd.f32 %v1492, %v1661
    %v1663 = vpop.f32.mrf.mxu0
    %v1664 = vadd.f32 %v1492, %v1663
    %1665 = vdwg.mxu0
    %v1666 = vpack.c.bf16 %v1648, %v1634
    %v1667 = vpack.c.bf16 %v1662, %v1662
    %v1668 = vpack.c.bf16 %v1650, %v1636
    %v1669 = vpack.c.bf16 %v1664, %v1664
    %1672 = vrot.lane.b32.xlu0 %v1666, 96
    %v1673 = vpop.permute.xlu0 %1672
    %1674 = vrot.lane.b32.xlu0 %v1668, 96
    %v1675 = vpop.permute.xlu0 %1674
    %1676 = vrot.lane.b32.xlu0 %v1666, 64
    %v1677 = vpop.permute.xlu0 %1676
    %1678 = vrot.lane.b32.xlu0 %v1668, 64
    %v1679 = vpop.permute.xlu0 %1678
    %1680 = vrot.lane.b32.xlu0 %v1666, 32
    %v1681 = vpop.permute.xlu0 %1680
    %1682 = vrot.lane.b32.xlu0 %v1668, 32
    %v1683 = vpop.permute.xlu0 %1682
    %v1684 = vrot.slane %v1666, 4
    %v1685 = vrot.slane %v1668, 4
    %v1686 = vrot.slane %v1673, 4
    %v1687 = vrot.slane %v1675, 4
    %v1688 = vrot.slane %v1677, 4
    %v1689 = vrot.slane %v1679, 4
    %v1690 = vrot.slane %v1681, 4
    %v1691 = vrot.slane %v1683, 4
    %1694 = vrot.lane.b32.xlu0 %v1667, 96
    %v1695 = vpop.permute.xlu0 %1694
    %1696 = vrot.lane.b32.xlu0 %v1669, 96
    %v1697 = vpop.permute.xlu0 %1696
    %1698 = vrot.lane.b32.xlu0 %v1667, 64
    %v1699 = vpop.permute.xlu0 %1698
    %1700 = vrot.lane.b32.xlu0 %v1669, 64
    %v1701 = vpop.permute.xlu0 %1700
    %1702 = vrot.lane.b32.xlu0 %v1667, 32
    %v1703 = vpop.permute.xlu0 %1702
    %1704 = vrot.lane.b32.xlu0 %v1669, 32
    %v1705 = vpop.permute.xlu0 %1704
    %v1707 = vsel %vm499, %v1666, 0
    %v1710 = vsel %vm499, %v1684, 0
    %1712 = vmatpush.bf16.xpose.msra.mxu0 0
    %1713 = vmatpush.bf16.xpose.msra.mxu0 0
    %1714 = vmatpush.bf16.xpose.msra.mxu0 0
    %1715 = vmatpush.bf16.xpose.msra.mxu0 0
    %1716 = vmatpush.bf16.xpose.msra.mxu0 0
    %1717 = vmatpush.bf16.xpose.msra.mxu0 0
    %1718 = vmatpush.bf16.xpose.msra.mxu0 0
    %1719 = vmatpush.bf16.xpose.msra.mxu0 %v1710
    %1720 = vmatmul.bf16.gmra.mxu0 %v1707
    %v1721 = vpop.f32.mrf.mxu0
    %v1722 = vadd.f32 %v483, %v1721
    %v1723 = vpop.f32.mrf.mxu0
    %1724 = vdwg.mxu0
    %v1726 = vsel %vm499, %v1668, 0
    %v1729 = vsel %vm499, %v1685, 0
    %1731 = vmatpush.bf16.xpose.msra.mxu0 0
    %1732 = vmatpush.bf16.xpose.msra.mxu0 0
    %1733 = vmatpush.bf16.xpose.msra.mxu0 0
    %1734 = vmatpush.bf16.xpose.msra.mxu0 0
    %1735 = vmatpush.bf16.xpose.msra.mxu0 0
    %1736 = vmatpush.bf16.xpose.msra.mxu0 0
    %1737 = vmatpush.bf16.xpose.msra.mxu0 0
    %1738 = vmatpush.bf16.xpose.msra.mxu0 %v1729
    %1739 = vmatmul.bf16.gmra.mxu0 %v1726
    %v1740 = vpop.f32.mrf.mxu0
    %v1741 = vadd.f32 %v484, %v1740
    %v1742 = vpop.f32.mrf.mxu0
    %1743 = vdwg.mxu0
    %v1745 = vsel %vm499, %v1673, 0
    %v1748 = vsel %vm499, %v1686, 0
    %1750 = vmatpush.bf16.xpose.msra.mxu0 0
    %1751 = vmatpush.bf16.xpose.msra.mxu0 0
    %1752 = vmatpush.bf16.xpose.msra.mxu0 0
    %1753 = vmatpush.bf16.xpose.msra.mxu0 0
    %1754 = vmatpush.bf16.xpose.msra.mxu0 0
    %1755 = vmatpush.bf16.xpose.msra.mxu0 0
    %1756 = vmatpush.bf16.xpose.msra.mxu0 0
    %1757 = vmatpush.bf16.xpose.msra.mxu0 %v1748
    %1758 = vmatmul.bf16.gmra.mxu0 %v1745
    %v1759 = vpop.f32.mrf.mxu0
    %v1760 = vadd.f32 %v485, %v1759
    %v1761 = vpop.f32.mrf.mxu0
    %1762 = vdwg.mxu0
    %v1764 = vsel %vm499, %v1675, 0
    %v1767 = vsel %vm499, %v1687, 0
    %1769 = vmatpush.bf16.xpose.msra.mxu0 0
    %1770 = vmatpush.bf16.xpose.msra.mxu0 0
    %1771 = vmatpush.bf16.xpose.msra.mxu0 0
    %1772 = vmatpush.bf16.xpose.msra.mxu0 0
    %1773 = vmatpush.bf16.xpose.msra.mxu0 0
    %1774 = vmatpush.bf16.xpose.msra.mxu0 0
    %1775 = vmatpush.bf16.xpose.msra.mxu0 0
    %1776 = vmatpush.bf16.xpose.msra.mxu0 %v1767
    %1777 = vmatmul.bf16.gmra.mxu0 %v1764
    %v1778 = vpop.f32.mrf.mxu0
    %v1779 = vadd.f32 %v486, %v1778
    %v1780 = vpop.f32.mrf.mxu0
    %1781 = vdwg.mxu0
    %v1783 = vsel %vm499, %v1677, 0
    %v1786 = vsel %vm499, %v1688, 0
    %1788 = vmatpush.bf16.xpose.msra.mxu0 0
    %1789 = vmatpush.bf16.xpose.msra.mxu0 0
    %1790 = vmatpush.bf16.xpose.msra.mxu0 0
    %1791 = vmatpush.bf16.xpose.msra.mxu0 0
    %1792 = vmatpush.bf16.xpose.msra.mxu0 0
    %1793 = vmatpush.bf16.xpose.msra.mxu0 0
    %1794 = vmatpush.bf16.xpose.msra.mxu0 0
    %1795 = vmatpush.bf16.xpose.msra.mxu0 %v1786
    %1796 = vmatmul.bf16.gmra.mxu0 %v1783
    %v1797 = vpop.f32.mrf.mxu0
    %v1798 = vadd.f32 %v487, %v1797
    %v1799 = vpop.f32.mrf.mxu0
    %1800 = vdwg.mxu0
    %v1802 = vsel %vm499, %v1679, 0
    %v1805 = vsel %vm499, %v1689, 0
    %1807 = vmatpush.bf16.xpose.msra.mxu0 0
    %1808 = vmatpush.bf16.xpose.msra.mxu0 0
    %1809 = vmatpush.bf16.xpose.msra.mxu0 0
    %1810 = vmatpush.bf16.xpose.msra.mxu0 0
    %1811 = vmatpush.bf16.xpose.msra.mxu0 0
    %1812 = vmatpush.bf16.xpose.msra.mxu0 0
    %1813 = vmatpush.bf16.xpose.msra.mxu0 0
    %1814 = vmatpush.bf16.xpose.msra.mxu0 %v1805
    %1815 = vmatmul.bf16.gmra.mxu0 %v1802
    %v1816 = vpop.f32.mrf.mxu0
    %v1817 = vadd.f32 %v488, %v1816
    %v1818 = vpop.f32.mrf.mxu0
    %1819 = vdwg.mxu0
    %v1821 = vsel %vm499, %v1681, 0
    %v1824 = vsel %vm499, %v1690, 0
    %1826 = vmatpush.bf16.xpose.msra.mxu0 0
    %1827 = vmatpush.bf16.xpose.msra.mxu0 0
    %1828 = vmatpush.bf16.xpose.msra.mxu0 0
    %1829 = vmatpush.bf16.xpose.msra.mxu0 0
    %1830 = vmatpush.bf16.xpose.msra.mxu0 0
    %1831 = vmatpush.bf16.xpose.msra.mxu0 0
    %1832 = vmatpush.bf16.xpose.msra.mxu0 0
    %1833 = vmatpush.bf16.xpose.msra.mxu0 %v1824
    %1834 = vmatmul.bf16.gmra.mxu0 %v1821
    %v1835 = vpop.f32.mrf.mxu0
    %v1836 = vadd.f32 %v489, %v1835
    %v1837 = vpop.f32.mrf.mxu0
    %1838 = vdwg.mxu0
    %v1840 = vsel %vm499, %v1683, 0
    %v1843 = vsel %vm499, %v1691, 0
    %1845 = vmatpush.bf16.xpose.msra.mxu0 0
    %1846 = vmatpush.bf16.xpose.msra.mxu0 0
    %1847 = vmatpush.bf16.xpose.msra.mxu0 0
    %1848 = vmatpush.bf16.xpose.msra.mxu0 0
    %1849 = vmatpush.bf16.xpose.msra.mxu0 0
    %1850 = vmatpush.bf16.xpose.msra.mxu0 0
    %1851 = vmatpush.bf16.xpose.msra.mxu0 0
    %1852 = vmatpush.bf16.xpose.msra.mxu0 %v1843
    %1853 = vmatmul.bf16.gmra.mxu0 %v1840
    %v1854 = vpop.f32.mrf.mxu0
    %v1855 = vadd.f32 %v490, %v1854
    %v1856 = vpop.f32.mrf.mxu0
    %1857 = vdwg.mxu0
    %v1858 = vsel %vm652, %v1722, -inf
    %1859 = vmax.xlane.f32.xlu0 %v1858
    %v1860 = vpop.xlane.xlu0 %1859
    %v1861 = vsel %vm652, %v1741, -inf
    %1862 = vmax.xlane.f32.xlu0 %v1861
    %v1863 = vpop.xlane.xlu0 %1862
    %v1864 = vsel %vm652, %v1760, -inf
    %1865 = vmax.xlane.f32.xlu0 %v1864
    %v1866 = vpop.xlane.xlu0 %1865
    %v1867 = vsel %vm652, %v1779, -inf
    %1868 = vmax.xlane.f32.xlu0 %v1867
    %v1869 = vpop.xlane.xlu0 %1868
    %v1870 = vsel %vm652, %v1798, -inf
    %1871 = vmax.xlane.f32.xlu0 %v1870
    %v1872 = vpop.xlane.xlu0 %1871
    %v1873 = vsel %vm652, %v1817, -inf
    %1874 = vmax.xlane.f32.xlu0 %v1873
    %v1875 = vpop.xlane.xlu0 %1874
    %v1876 = vsel %vm652, %v1836, -inf
    %1877 = vmax.xlane.f32.xlu0 %v1876
    %v1878 = vpop.xlane.xlu0 %1877
    %v1879 = vsel %vm652, %v1855, -inf
    %1880 = vmax.xlane.f32.xlu0 %v1879
    %v1881 = vpop.xlane.xlu0 %1880
    %v1882 = vsub.f32 %v1722, %v1860
    %v1883 = vsub.f32 %v1741, %v1863
    %v1884 = vsub.f32 %v1760, %v1866
    %v1885 = vsub.f32 %v1779, %v1869
    %v1886 = vsub.f32 %v1798, %v1872
    %v1887 = vsub.f32 %v1817, %v1875
    %v1888 = vsub.f32 %v1836, %v1878
    %v1889 = vsub.f32 %v1855, %v1881
    %v1890 = vmul.f32 %v1882, 1.442695
    %v1891 = vpow.pop %v1890
    %v1892 = vmul.f32 %v1883, 1.442695
    %v1893 = vpow.pop %v1892
    %v1894 = vmul.f32 %v1884, 1.442695
    %v1895 = vpow.pop %v1894
    %v1896 = vmul.f32 %v1885, 1.442695
    %v1897 = vpow.pop %v1896
    %v1898 = vmul.f32 %v1886, 1.442695
    %v1899 = vpow.pop %v1898
    %v1900 = vmul.f32 %v1887, 1.442695
    %v1901 = vpow.pop %v1900
    %v1902 = vmul.f32 %v1888, 1.442695
    %v1903 = vpow.pop %v1902
    %v1904 = vmul.f32 %v1889, 1.442695
    %v1905 = vpow.pop %v1904
    %v1906 = vsel %vm652, %v1891, 0.0
    %1907 = vadd.xlane.f32.xlu0 %v1906
    %v1908 = vpop.xlane.xlu0 %1907
    %v1909 = vsel %vm652, %v1893, 0.0
    %1910 = vadd.xlane.f32.xlu0 %v1909
    %v1911 = vpop.xlane.xlu0 %1910
    %v1912 = vsel %vm652, %v1895, 0.0
    %1913 = vadd.xlane.f32.xlu0 %v1912
    %v1914 = vpop.xlane.xlu0 %1913
    %v1915 = vsel %vm652, %v1897, 0.0
    %1916 = vadd.xlane.f32.xlu0 %v1915
    %v1917 = vpop.xlane.xlu0 %1916
    %v1918 = vsel %vm652, %v1899, 0.0
    %1919 = vadd.xlane.f32.xlu0 %v1918
    %v1920 = vpop.xlane.xlu0 %1919
    %v1921 = vsel %vm652, %v1901, 0.0
    %1922 = vadd.xlane.f32.xlu0 %v1921
    %v1923 = vpop.xlane.xlu0 %1922
    %v1924 = vsel %vm652, %v1903, 0.0
    %1925 = vadd.xlane.f32.xlu0 %v1924
    %v1926 = vpop.xlane.xlu0 %1925
    %v1927 = vsel %vm652, %v1905, 0.0
    %1928 = vadd.xlane.f32.xlu0 %v1927
    %v1929 = vpop.xlane.xlu0 %1928
    %v1930 = vrcp.pop %v1908
    %v1931 = vrcp.pop %v1911
    %v1932 = vrcp.pop %v1914
    %v1933 = vrcp.pop %v1917
    %v1934 = vrcp.pop %v1920
    %v1935 = vrcp.pop %v1923
    %v1936 = vrcp.pop %v1926
    %v1937 = vrcp.pop %v1929
    %v1938 = vmul.f32 %v1891, %v1930
    %v1939 = vmul.f32 %v1893, %v1931
    %v1940 = vmul.f32 %v1895, %v1932
    %v1941 = vmul.f32 %v1897, %v1933
    %v1942 = vmul.f32 %v1899, %v1934
    %v1943 = vmul.f32 %v1901, %v1935
    %v1944 = vmul.f32 %v1903, %v1936
    %v1945 = vmul.f32 %v1905, %v1937
    %v1946 = vpack.c.bf16 %v1938, %v1938
    %v1947 = vpack.c.bf16 %v1939, %v1939
    %v1948 = vpack.c.bf16 %v1940, %v1940
    %v1949 = vpack.c.bf16 %v1941, %v1941
    %v1950 = vpack.c.bf16 %v1942, %v1942
    %v1951 = vpack.c.bf16 %v1943, %v1943
    %v1952 = vpack.c.bf16 %v1944, %v1944
    %v1953 = vpack.c.bf16 %v1945, %v1945
    %v1955 = vsel %vm652, %v1946, 0
    %v1958 = vsel %vm159, %v1667, 0
    %1960 = vmatpush.bf16.msra.mxu0 0
    %1961 = vmatpush.bf16.msra.mxu0 0
    %1962 = vmatpush.bf16.msra.mxu0 0
    %1963 = vmatpush.bf16.msra.mxu0 0
    %1964 = vmatpush.bf16.msra.mxu0 0
    %1965 = vmatpush.bf16.msra.mxu0 0
    %1966 = vmatpush.bf16.msra.mxu0 0
    %1967 = vmatpush.bf16.msra.mxu0 %v1958
    %1968 = vmatmul.bf16.gmra.mxu0 %v1955
    %v1969 = vpop.f32.mrf.mxu0
    %v1970 = vadd.f32 0.0, %v1969
    %v1971 = vpop.f32.mrf.mxu0
    %1972 = vdwg.mxu0
    %v1974 = vsel %vm652, %v1947, 0
    %v1977 = vsel %vm159, %v1669, 0
    %1979 = vmatpush.bf16.msra.mxu0 0
    %1980 = vmatpush.bf16.msra.mxu0 0
    %1981 = vmatpush.bf16.msra.mxu0 0
    %1982 = vmatpush.bf16.msra.mxu0 0
    %1983 = vmatpush.bf16.msra.mxu0 0
    %1984 = vmatpush.bf16.msra.mxu0 0
    %1985 = vmatpush.bf16.msra.mxu0 0
    %1986 = vmatpush.bf16.msra.mxu0 %v1977
    %1987 = vmatmul.bf16.gmra.mxu0 %v1974
    %v1988 = vpop.f32.mrf.mxu0
    %v1989 = vadd.f32 0.0, %v1988
    %v1990 = vpop.f32.mrf.mxu0
    %1991 = vdwg.mxu0
    %v1993 = vsel %vm652, %v1948, 0
    %v1996 = vsel %vm159, %v1695, 0
    %1998 = vmatpush.bf16.msra.mxu0 0
    %1999 = vmatpush.bf16.msra.mxu0 0
    %2000 = vmatpush.bf16.msra.mxu0 0
    %2001 = vmatpush.bf16.msra.mxu0 0
    %2002 = vmatpush.bf16.msra.mxu0 0
    %2003 = vmatpush.bf16.msra.mxu0 0
    %2004 = vmatpush.bf16.msra.mxu0 0
    %2005 = vmatpush.bf16.msra.mxu0 %v1996
    %2006 = vmatmul.bf16.gmra.mxu0 %v1993
    %v2007 = vpop.f32.mrf.mxu0
    %v2008 = vadd.f32 0.0, %v2007
    %v2009 = vpop.f32.mrf.mxu0
    %2010 = vdwg.mxu0
    %v2012 = vsel %vm652, %v1949, 0
    %v2015 = vsel %vm159, %v1697, 0
    %2017 = vmatpush.bf16.msra.mxu0 0
    %2018 = vmatpush.bf16.msra.mxu0 0
    %2019 = vmatpush.bf16.msra.mxu0 0
    %2020 = vmatpush.bf16.msra.mxu0 0
    %2021 = vmatpush.bf16.msra.mxu0 0
    %2022 = vmatpush.bf16.msra.mxu0 0
    %2023 = vmatpush.bf16.msra.mxu0 0
    %2024 = vmatpush.bf16.msra.mxu0 %v2015
    %2025 = vmatmul.bf16.gmra.mxu0 %v2012
    %v2026 = vpop.f32.mrf.mxu0
    %v2027 = vadd.f32 0.0, %v2026
    %v2028 = vpop.f32.mrf.mxu0
    %2029 = vdwg.mxu0
    %v2031 = vsel %vm652, %v1950, 0
    %v2034 = vsel %vm159, %v1699, 0
    %2036 = vmatpush.bf16.msra.mxu0 0
    %2037 = vmatpush.bf16.msra.mxu0 0
    %2038 = vmatpush.bf16.msra.mxu0 0
    %2039 = vmatpush.bf16.msra.mxu0 0
    %2040 = vmatpush.bf16.msra.mxu0 0
    %2041 = vmatpush.bf16.msra.mxu0 0
    %2042 = vmatpush.bf16.msra.mxu0 0
    %2043 = vmatpush.bf16.msra.mxu0 %v2034
    %2044 = vmatmul.bf16.gmra.mxu0 %v2031
    %v2045 = vpop.f32.mrf.mxu0
    %v2046 = vadd.f32 0.0, %v2045
    %v2047 = vpop.f32.mrf.mxu0
    %2048 = vdwg.mxu0
    %v2050 = vsel %vm652, %v1951, 0
    %v2053 = vsel %vm159, %v1701, 0
    %2055 = vmatpush.bf16.msra.mxu0 0
    %2056 = vmatpush.bf16.msra.mxu0 0
    %2057 = vmatpush.bf16.msra.mxu0 0
    %2058 = vmatpush.bf16.msra.mxu0 0
    %2059 = vmatpush.bf16.msra.mxu0 0
    %2060 = vmatpush.bf16.msra.mxu0 0
    %2061 = vmatpush.bf16.msra.mxu0 0
    %2062 = vmatpush.bf16.msra.mxu0 %v2053
    %2063 = vmatmul.bf16.gmra.mxu0 %v2050
    %v2064 = vpop.f32.mrf.mxu0
    %v2065 = vadd.f32 0.0, %v2064
    %v2066 = vpop.f32.mrf.mxu0
    %2067 = vdwg.mxu0
    %v2069 = vsel %vm652, %v1952, 0
    %v2072 = vsel %vm159, %v1703, 0
    %2074 = vmatpush.bf16.msra.mxu0 0
    %2075 = vmatpush.bf16.msra.mxu0 0
    %2076 = vmatpush.bf16.msra.mxu0 0
    %2077 = vmatpush.bf16.msra.mxu0 0
    %2078 = vmatpush.bf16.msra.mxu0 0
    %2079 = vmatpush.bf16.msra.mxu0 0
    %2080 = vmatpush.bf16.msra.mxu0 0
    %2081 = vmatpush.bf16.msra.mxu0 %v2072
    %2082 = vmatmul.bf16.gmra.mxu0 %v2069
    %v2083 = vpop.f32.mrf.mxu0
    %v2084 = vadd.f32 0.0, %v2083
    %v2085 = vpop.f32.mrf.mxu0
    %2086 = vdwg.mxu0
    %v2088 = vsel %vm652, %v1953, 0
    %v2091 = vsel %vm159, %v1705, 0
    %2093 = vmatpush.bf16.msra.mxu0 0
    %2094 = vmatpush.bf16.msra.mxu0 0
    %2095 = vmatpush.bf16.msra.mxu0 0
    %2096 = vmatpush.bf16.msra.mxu0 0
    %2097 = vmatpush.bf16.msra.mxu0 0
    %2098 = vmatpush.bf16.msra.mxu0 0
    %2099 = vmatpush.bf16.msra.mxu0 0
    %2100 = vmatpush.bf16.msra.mxu0 %v2091
    %2101 = vmatmul.bf16.gmra.mxu0 %v2088
    %v2102 = vpop.f32.mrf.mxu0
    %v2103 = vadd.f32 0.0, %v2102
    %v2104 = vpop.f32.mrf.mxu0
    %2105 = vdwg.mxu0
    %2108 = vrot.lane.b32.xlu0 %v2008, 32
    %v2109 = vpop.permute.xlu0 %2108
    %2110 = vrot.lane.b32.xlu0 %v2027, 32
    %v2111 = vpop.permute.xlu0 %2110
    %2116 = vrot.lane.b32.xlu0 %v2046, 64
    %v2117 = vpop.permute.xlu0 %2116
    %2118 = vrot.lane.b32.xlu0 %v2065, 64
    %v2119 = vpop.permute.xlu0 %2118
    %2124 = vrot.lane.b32.xlu0 %v2084, 96
    %v2125 = vpop.permute.xlu0 %2124
    %2126 = vrot.lane.b32.xlu0 %v2103, 96
    %v2127 = vpop.permute.xlu0 %2126
    %v2130 = vsel %vm499, %v1970, %v2109
    %v2131 = vsel %vm499, %v1989, %v2111
    %v2132 = vsel %vm927, %v2130, %v2117
    %v2133 = vsel %vm927, %v2131, %v2119
    %v2134 = vsel %vm930, %v2132, %v2125
    %v2135 = vsel %vm930, %v2133, %v2127
    %v2136 = vpack.c.bf16 %v2135, %v2134
    %s2137 = scalar_lea.vmem [#allocation4], 128
    %v2138 = vld [vmem:[%s2137] sm:$0xf]
    %v2139 = vld [vmem:[%s2137 + $0x4] sm:$0xf]
    %v2140 = vld [vmem:[%s2137 + $0x8] sm:$0xf]
    %v2141 = vld [vmem:[%s2137 + $0xc] sm:$0xf]
    %v2142 = vld [vmem:[%s2137 + $0x10] sm:$0xf]
    %v2143 = vld [vmem:[%s2137 + $0x14] sm:$0xf]
    %v2144 = vld [vmem:[%s2137 + $0x18] sm:$0xf]
    %v2145 = vld [vmem:[%s2137 + $0x1c] sm:$0xf]
    %v2146 = vld [vmem:[%s2137 + $0x20] sm:$0xf]
    %v2147 = vld [vmem:[%s2137 + $0x24] sm:$0xf]
    %v2148 = vld [vmem:[%s2137 + $0x28] sm:$0xf]
    %v2149 = vld [vmem:[%s2137 + $0x2c] sm:$0xf]
    %v2150 = vld [vmem:[%s2137 + $0x30] sm:$0xf]
    %v2151 = vld [vmem:[%s2137 + $0x34] sm:$0xf]
    %v2152 = vld [vmem:[%s2137 + $0x38] sm:$0xf]
    %v2153 = vld [vmem:[%s2137 + $0x3c] sm:$0xf]
    %s2154 = scalar_lea.vmem %s7, 2
    %v2155 = vld [vmem:[%s2154] sm:$0x1]
    %v2157 = vperm.slane %v2155, 0
    %v2175 = vunpack.c.l.b16 %v2138
    %v2176 = vunpack.c.l.b16 %v2139
    %v2177 = vunpack.c.l.b16 %v2140
    %v2178 = vunpack.c.l.b16 %v2141
    %v2179 = vunpack.c.l.b16 %v2142
    %v2180 = vunpack.c.l.b16 %v2143
    %v2181 = vunpack.c.l.b16 %v2144
    %v2182 = vunpack.c.l.b16 %v2145
    %v2183 = vunpack.c.l.b16 %v2146
    %v2184 = vunpack.c.l.b16 %v2147
    %v2185 = vunpack.c.l.b16 %v2148
    %v2186 = vunpack.c.l.b16 %v2149
    %v2187 = vunpack.c.l.b16 %v2150
    %v2188 = vunpack.c.l.b16 %v2151
    %v2189 = vunpack.c.l.b16 %v2152
    %v2190 = vunpack.c.l.b16 %v2153
    %v2191 = vpack.c.b16 %v2176, %v2175
    %v2192 = vpack.c.b16 %v2178, %v2177
    %v2193 = vpack.c.b16 %v2180, %v2179
    %v2194 = vpack.c.b16 %v2182, %v2181
    %v2195 = vpack.c.b16 %v2184, %v2183
    %v2196 = vpack.c.b16 %v2186, %v2185
    %v2197 = vpack.c.b16 %v2188, %v2187
    %v2198 = vpack.c.b16 %v2190, %v2189
    %2207 = vmatpush.bf16.msra.mxu0 %v2198
    %2208 = vmatpush.bf16.msra.mxu0 %v2197
    %2209 = vmatpush.bf16.msra.mxu0 %v2196
    %2210 = vmatpush.bf16.msra.mxu0 %v2195
    %2211 = vmatpush.bf16.msra.mxu0 %v2194
    %2212 = vmatpush.bf16.msra.mxu0 %v2193
    %2213 = vmatpush.bf16.msra.mxu0 %v2192
    %2214 = vmatpush.bf16.msra.mxu0 %v2191
    %2215 = vmatmul.bf16.gmra.mxu0 %v2136
    %v2216 = vpop.f32.mrf.mxu0
    %v2217 = vadd.f32 %v2157, %v2216
    %v2218 = vpop.f32.mrf.mxu0
    %v2219 = vadd.f32 %v2157, %v2218
    %2220 = vdwg.mxu0
    %v2221 = vadd.f32 %v2217, %v1451
    %v2222 = vadd.f32 %v2219, %v1452
    %s2223 = scalar_lea.vmem %s8, 2
    %v2224 = vld [vmem:[%s2223] sm:$0x1]
    %s2225 = scalar_lea.vmem %s9, 2
    %v2226 = vld [vmem:[%s2225] sm:$0x1]
    %2227 = vadd.xlane.f32.xlu0 %v2221
    %v2228 = vpop.xlane.xlu0 %2227
    %2229 = vadd.xlane.f32.xlu0 %v2222
    %v2230 = vpop.xlane.xlu0 %2229
    %v2231 = vmul.f32 %v2228, %v177
    %v2232 = vmul.f32 %v2230, %v177
    %v2233 = vsub.f32 %v2221, %v2231
    %v2234 = vsub.f32 %v2222, %v2232
    %v2235 = vmul.f32 %v2233, %v2233
    %v2236 = vmul.f32 %v2234, %v2234
    %2237 = vadd.xlane.f32.xlu0 %v2235
    %v2238 = vpop.xlane.xlu0 %2237
    %2239 = vadd.xlane.f32.xlu0 %v2236
    %v2240 = vpop.xlane.xlu0 %2239
    %v2241 = vmul.f32 %v2238, %v177
    %v2242 = vmul.f32 %v2240, %v177
    %v2243 = vadd.f32 %v2241, 1e-12
    %v2244 = vadd.f32 %v2242, 1e-12
    %v2245 = vrsqrt.pop %v2243
    %v2246 = vmul.f32 %v2245, %v2243
    %v2247 = vmul.f32 %v2246, %v2245
    %v2248 = vmul.f32 0.5, %v2247
    %v2249 = vsub.f32 1.5, %v2248
    %v2250 = vmul.f32 %v2245, %v2249
    %vm2251 = vweird.f32 %v2243
    %vm2252 = vweird.f32 %v2245
    %vm2253 = vmor %vm2251, %vm2252
    %v2254 = vsel %vm2253, %v2245, %v2250
    %v2255 = vrsqrt.pop %v2244
    %v2256 = vmul.f32 %v2255, %v2244
    %v2257 = vmul.f32 %v2256, %v2255
    %v2258 = vmul.f32 0.5, %v2257
    %v2259 = vsub.f32 1.5, %v2258
    %v2260 = vmul.f32 %v2255, %v2259
    %vm2261 = vweird.f32 %v2244
    %vm2262 = vweird.f32 %v2255
    %vm2263 = vmor %vm2261, %vm2262
    %v2264 = vsel %vm2263, %v2255, %v2260
    %v2265 = vmul.f32 %v2233, %v2254
    %v2266 = vmul.f32 %v2234, %v2264
    %v2268 = vperm.slane %v2224, 0
    %v2270 = vmul.f32 %v2265, %v2268
    %v2271 = vmul.f32 %v2266, %v2268
    %v2273 = vperm.slane %v2226, 0
    %v2275 = vadd.f32 %v2270, %v2273
    %v2276 = vadd.f32 %v2271, %v2273
    %v2277 = vpack.c.bf16 %v2276, %v2275
    %s2278 = scalar_lea.vmem [#allocation6], 256
    %v2279 = vld [vmem:[%s2278] sm:$0xff]
    %v2280 = vld [vmem:[%s2278 + $0x8] sm:$0xff]
    %v2281 = vld [vmem:[%s2278 + $0x10] sm:$0xff]
    %v2282 = vld [vmem:[%s2278 + $0x18] sm:$0xff]
    %v2283 = vld [vmem:[%s2278 + $0x20] sm:$0xff]
    %v2284 = vld [vmem:[%s2278 + $0x28] sm:$0xff]
    %v2285 = vld [vmem:[%s2278 + $0x30] sm:$0xff]
    %v2286 = vld [vmem:[%s2278 + $0x38] sm:$0xff]
    %v2287 = vld [vmem:[%s2278 + $0x40] sm:$0xff]
    %v2288 = vld [vmem:[%s2278 + $0x48] sm:$0xff]
    %v2289 = vld [vmem:[%s2278 + $0x50] sm:$0xff]
    %v2290 = vld [vmem:[%s2278 + $0x58] sm:$0xff]
    %v2291 = vld [vmem:[%s2278 + $0x60] sm:$0xff]
    %v2292 = vld [vmem:[%s2278 + $0x68] sm:$0xff]
    %v2293 = vld [vmem:[%s2278 + $0x70] sm:$0xff]
    %v2294 = vld [vmem:[%s2278 + $0x78] sm:$0xff]
    %s2295 = scalar_lea.vmem %s11, 4
    %v2296 = vld [vmem:[%s2295] sm:$0x3]
    %v2298 = vperm.slane %v2296, 0
    %v2299 = vperm.slane %v2296, 1
    %v2318 = vunpack.c.l.b16 %v2279
    %v2319 = vunpack.c.h.b16 %v2279
    %v2320 = vunpack.c.l.b16 %v2280
    %v2321 = vunpack.c.h.b16 %v2280
    %v2322 = vunpack.c.l.b16 %v2281
    %v2323 = vunpack.c.h.b16 %v2281
    %v2324 = vunpack.c.l.b16 %v2282
    %v2325 = vunpack.c.h.b16 %v2282
    %v2326 = vunpack.c.l.b16 %v2283
    %v2327 = vunpack.c.h.b16 %v2283
    %v2328 = vunpack.c.l.b16 %v2284
    %v2329 = vunpack.c.h.b16 %v2284
    %v2330 = vunpack.c.l.b16 %v2285
    %v2331 = vunpack.c.h.b16 %v2285
    %v2332 = vunpack.c.l.b16 %v2286
    %v2333 = vunpack.c.h.b16 %v2286
    %v2334 = vunpack.c.l.b16 %v2287
    %v2335 = vunpack.c.h.b16 %v2287
    %v2336 = vunpack.c.l.b16 %v2288
    %v2337 = vunpack.c.h.b16 %v2288
    %v2338 = vunpack.c.l.b16 %v2289
    %v2339 = vunpack.c.h.b16 %v2289
    %v2340 = vunpack.c.l.b16 %v2290
    %v2341 = vunpack.c.h.b16 %v2290
    %v2342 = vunpack.c.l.b16 %v2291
    %v2343 = vunpack.c.h.b16 %v2291
    %v2344 = vunpack.c.l.b16 %v2292
    %v2345 = vunpack.c.h.b16 %v2292
    %v2346 = vunpack.c.l.b16 %v2293
    %v2347 = vunpack.c.h.b16 %v2293
    %v2348 = vunpack.c.l.b16 %v2294
    %v2349 = vunpack.c.h.b16 %v2294
    %v2350 = vpack.c.b16 %v2320, %v2318
    %v2351 = vpack.c.b16 %v2321, %v2319
    %v2352 = vpack.c.b16 %v2324, %v2322
    %v2353 = vpack.c.b16 %v2325, %v2323
    %v2354 = vpack.c.b16 %v2328, %v2326
    %v2355 = vpack.c.b16 %v2329, %v2327
    %v2356 = vpack.c.b16 %v2332, %v2330
    %v2357 = vpack.c.b16 %v2333, %v2331
    %v2358 = vpack.c.b16 %v2336, %v2334
    %v2359 = vpack.c.b16 %v2337, %v2335
    %v2360 = vpack.c.b16 %v2340, %v2338
    %v2361 = vpack.c.b16 %v2341, %v2339
    %v2362 = vpack.c.b16 %v2344, %v2342
    %v2363 = vpack.c.b16 %v2345, %v2343
    %v2364 = vpack.c.b16 %v2348, %v2346
    %v2365 = vpack.c.b16 %v2349, %v2347
    %2382 = vmatpush.bf16.msra.mxu0 %v2364
    %2383 = vmatpush.bf16.msra.mxu0 %v2362
    %2384 = vmatpush.bf16.msra.mxu0 %v2360
    %2385 = vmatpush.bf16.msra.mxu0 %v2358
    %2386 = vmatpush.bf16.msra.mxu0 %v2356
    %2387 = vmatpush.bf16.msra.mxu0 %v2354
    %2388 = vmatpush.bf16.msra.mxu0 %v2352
    %2389 = vmatpush.bf16.msra.mxu0 %v2350
    %2390 = vmatmul.bf16.gmra.mxu0 %v2277
    %v2391 = vpop.f32.mrf.mxu0
    %v2392 = vadd.f32 %v2298, %v2391
    %v2393 = vpop.f32.mrf.mxu0
    %v2394 = vadd.f32 %v2298, %v2393
    %2395 = vdwg.mxu0
    %2396 = vmatpush.bf16.msra.mxu0 %v2365
    %2397 = vmatpush.bf16.msra.mxu0 %v2363
    %2398 = vmatpush.bf16.msra.mxu0 %v2361
    %2399 = vmatpush.bf16.msra.mxu0 %v2359
    %2400 = vmatpush.bf16.msra.mxu0 %v2357
    %2401 = vmatpush.bf16.msra.mxu0 %v2355
    %2402 = vmatpush.bf16.msra.mxu0 %v2353
    %2403 = vmatpush.bf16.msra.mxu0 %v2351
    %2404 = vmatmul.bf16.gmra.mxu0 %v2277
    %v2405 = vpop.f32.mrf.mxu0
    %v2406 = vadd.f32 %v2299, %v2405
    %v2407 = vpop.f32.mrf.mxu0
    %v2408 = vadd.f32 %v2299, %v2407
    %2409 = vdwg.mxu0
    %v2410 = vmul.f32 %v2392, %v2392
    %v2411 = vmul.f32 %v2406, %v2406
    %v2412 = vmul.f32 %v2394, %v2394
    %v2413 = vmul.f32 %v2408, %v2408
    %v2414 = vmul.f32 %v2392, %v2410
    %v2415 = vmul.f32 %v2406, %v2411
    %v2416 = vmul.f32 %v2394, %v2412
    %v2417 = vmul.f32 %v2408, %v2413
    %v2418 = vmul.f32 %v2414, 0.044715
    %v2419 = vmul.f32 %v2415, 0.044715
    %v2420 = vmul.f32 %v2416, 0.044715
    %v2421 = vmul.f32 %v2417, 0.044715
    %v2422 = vadd.f32 %v2392, %v2418
    %v2423 = vadd.f32 %v2406, %v2419
    %v2424 = vadd.f32 %v2394, %v2420
    %v2425 = vadd.f32 %v2408, %v2421
    %v2426 = vmul.f32 %v2422, 0.7978846
    %v2427 = vmul.f32 %v2423, 0.7978846
    %v2428 = vmul.f32 %v2424, 0.7978846
    %v2429 = vmul.f32 %v2425, 0.7978846
    %v2430 = vtanh.pop %v2426
    %v2431 = vtanh.pop %v2427
    %v2432 = vtanh.pop %v2428
    %v2433 = vtanh.pop %v2429
    %v2434 = vadd.f32 %v2430, 1.0
    %v2435 = vadd.f32 %v2431, 1.0
    %v2436 = vadd.f32 %v2432, 1.0
    %v2437 = vadd.f32 %v2433, 1.0
    %v2438 = vmul.f32 %v2434, 0.5
    %v2439 = vmul.f32 %v2435, 0.5
    %v2440 = vmul.f32 %v2436, 0.5
    %v2441 = vmul.f32 %v2437, 0.5
    %v2442 = vmul.f32 %v2392, %v2438
    %v2443 = vmul.f32 %v2406, %v2439
    %v2444 = vmul.f32 %v2394, %v2440
    %v2445 = vmul.f32 %v2408, %v2441
    %v2446 = vpack.c.bf16 %v2444, %v2442
    %v2447 = vpack.c.bf16 %v2445, %v2443
    %s2448 = scalar_lea.vmem [#allocation7], 256
    %v2449 = vld [vmem:[%s2448] sm:$0xf]
    %v2450 = vld [vmem:[%s2448 + $0x4] sm:$0xf]
    %v2451 = vld [vmem:[%s2448 + $0x8] sm:$0xf]
    %v2452 = vld [vmem:[%s2448 + $0xc] sm:$0xf]
    %v2453 = vld [vmem:[%s2448 + $0x10] sm:$0xf]
    %v2454 = vld [vmem:[%s2448 + $0x14] sm:$0xf]
    %v2455 = vld [vmem:[%s2448 + $0x18] sm:$0xf]
    %v2456 = vld [vmem:[%s2448 + $0x1c] sm:$0xf]
    %v2457 = vld [vmem:[%s2448 + $0x20] sm:$0xf]
    %v2458 = vld [vmem:[%s2448 + $0x24] sm:$0xf]
    %v2459 = vld [vmem:[%s2448 + $0x28] sm:$0xf]
    %v2460 = vld [vmem:[%s2448 + $0x2c] sm:$0xf]
    %v2461 = vld [vmem:[%s2448 + $0x30] sm:$0xf]
    %v2462 = vld [vmem:[%s2448 + $0x34] sm:$0xf]
    %v2463 = vld [vmem:[%s2448 + $0x38] sm:$0xf]
    %v2464 = vld [vmem:[%s2448 + $0x3c] sm:$0xf]
    %v2465 = vld [vmem:[%s2448 + $0x40] sm:$0xf]
    %v2466 = vld [vmem:[%s2448 + $0x44] sm:$0xf]
    %v2467 = vld [vmem:[%s2448 + $0x48] sm:$0xf]
    %v2468 = vld [vmem:[%s2448 + $0x4c] sm:$0xf]
    %v2469 = vld [vmem:[%s2448 + $0x50] sm:$0xf]
    %v2470 = vld [vmem:[%s2448 + $0x54] sm:$0xf]
    %v2471 = vld [vmem:[%s2448 + $0x58] sm:$0xf]
    %v2472 = vld [vmem:[%s2448 + $0x5c] sm:$0xf]
    %v2473 = vld [vmem:[%s2448 + $0x60] sm:$0xf]
    %v2474 = vld [vmem:[%s2448 + $0x64] sm:$0xf]
    %v2475 = vld [vmem:[%s2448 + $0x68] sm:$0xf]
    %v2476 = vld [vmem:[%s2448 + $0x6c] sm:$0xf]
    %v2477 = vld [vmem:[%s2448 + $0x70] sm:$0xf]
    %v2478 = vld [vmem:[%s2448 + $0x74] sm:$0xf]
    %v2479 = vld [vmem:[%s2448 + $0x78] sm:$0xf]
    %v2480 = vld [vmem:[%s2448 + $0x7c] sm:$0xf]
    %s2481 = scalar_lea.vmem %s13, 2
    %v2482 = vld [vmem:[%s2481] sm:$0x1]
    %v2484 = vperm.slane %v2482, 0
    %v2518 = vunpack.c.l.b16 %v2449
    %v2519 = vunpack.c.l.b16 %v2450
    %v2520 = vunpack.c.l.b16 %v2451
    %v2521 = vunpack.c.l.b16 %v2452
    %v2522 = vunpack.c.l.b16 %v2453
    %v2523 = vunpack.c.l.b16 %v2454
    %v2524 = vunpack.c.l.b16 %v2455
    %v2525 = vunpack.c.l.b16 %v2456
    %v2526 = vunpack.c.l.b16 %v2457
    %v2527 = vunpack.c.l.b16 %v2458
    %v2528 = vunpack.c.l.b16 %v2459
    %v2529 = vunpack.c.l.b16 %v2460
    %v2530 = vunpack.c.l.b16 %v2461
    %v2531 = vunpack.c.l.b16 %v2462
    %v2532 = vunpack.c.l.b16 %v2463
    %v2533 = vunpack.c.l.b16 %v2464
    %v2534 = vunpack.c.l.b16 %v2465
    %v2535 = vunpack.c.l.b16 %v2466
    %v2536 = vunpack.c.l.b16 %v2467
    %v2537 = vunpack.c.l.b16 %v2468
    %v2538 = vunpack.c.l.b16 %v2469
    %v2539 = vunpack.c.l.b16 %v2470
    %v2540 = vunpack.c.l.b16 %v2471
    %v2541 = vunpack.c.l.b16 %v2472
    %v2542 = vunpack.c.l.b16 %v2473
    %v2543 = vunpack.c.l.b16 %v2474
    %v2544 = vunpack.c.l.b16 %v2475
    %v2545 = vunpack.c.l.b16 %v2476
    %v2546 = vunpack.c.l.b16 %v2477
    %v2547 = vunpack.c.l.b16 %v2478
    %v2548 = vunpack.c.l.b16 %v2479
    %v2549 = vunpack.c.l.b16 %v2480
    %v2550 = vpack.c.b16 %v2519, %v2518
    %v2551 = vpack.c.b16 %v2521, %v2520
    %v2552 = vpack.c.b16 %v2523, %v2522
    %v2553 = vpack.c.b16 %v2525, %v2524
    %v2554 = vpack.c.b16 %v2527, %v2526
    %v2555 = vpack.c.b16 %v2529, %v2528
    %v2556 = vpack.c.b16 %v2531, %v2530
    %v2557 = vpack.c.b16 %v2533, %v2532
    %v2558 = vpack.c.b16 %v2535, %v2534
    %v2559 = vpack.c.b16 %v2537, %v2536
    %v2560 = vpack.c.b16 %v2539, %v2538
    %v2561 = vpack.c.b16 %v2541, %v2540
    %v2562 = vpack.c.b16 %v2543, %v2542
    %v2563 = vpack.c.b16 %v2545, %v2544
    %v2564 = vpack.c.b16 %v2547, %v2546
    %v2565 = vpack.c.b16 %v2549, %v2548
    %2582 = vmatpush.bf16.msra.mxu0 %v2557
    %2583 = vmatpush.bf16.msra.mxu0 %v2556
    %2584 = vmatpush.bf16.msra.mxu0 %v2555
    %2585 = vmatpush.bf16.msra.mxu0 %v2554
    %2586 = vmatpush.bf16.msra.mxu0 %v2553
    %2587 = vmatpush.bf16.msra.mxu0 %v2552
    %2588 = vmatpush.bf16.msra.mxu0 %v2551
    %2589 = vmatpush.bf16.msra.mxu0 %v2550
    %2590 = vmatmul.bf16.gmra.mxu0 %v2446
    %v2591 = vpop.f32.mrf.mxu0
    %v2592 = vadd.f32 %v2484, %v2591
    %v2593 = vpop.f32.mrf.mxu0
    %v2594 = vadd.f32 %v2484, %v2593
    %2595 = vdwg.mxu0
    %2596 = vmatpush.bf16.msra.mxu0 %v2565
    %2597 = vmatpush.bf16.msra.mxu0 %v2564
    %2598 = vmatpush.bf16.msra.mxu0 %v2563
    %2599 = vmatpush.bf16.msra.mxu0 %v2562
    %2600 = vmatpush.bf16.msra.mxu0 %v2561
    %2601 = vmatpush.bf16.msra.mxu0 %v2560
    %2602 = vmatpush.bf16.msra.mxu0 %v2559
    %2603 = vmatpush.bf16.msra.mxu0 %v2558
    %2604 = vmatmul.bf16.gmra.mxu0 %v2447
    %v2605 = vpop.f32.mrf.mxu0
    %v2606 = vadd.f32 %v2592, %v2605
    %v2607 = vpop.f32.mrf.mxu0
    %v2608 = vadd.f32 %v2594, %v2607
    %2609 = vdwg.mxu0
    %v2610 = vadd.f32 %v2606, %v2275
    %v2611 = vadd.f32 %v2608, %v2276
    %s2612 = scalar_lea.vmem %s14, 2
    %v2613 = vld [vmem:[%s2612] sm:$0x1]
    %s2614 = scalar_lea.vmem %s15, 2
    %v2615 = vld [vmem:[%s2614] sm:$0x1]
    %2616 = vadd.xlane.f32.xlu0 %v2610
    %v2617 = vpop.xlane.xlu0 %2616
    %2618 = vadd.xlane.f32.xlu0 %v2611
    %v2619 = vpop.xlane.xlu0 %2618
    %v2620 = vmul.f32 %v2617, %v177
    %v2621 = vmul.f32 %v2619, %v177
    %v2622 = vsub.f32 %v2610, %v2620
    %v2623 = vsub.f32 %v2611, %v2621
    %v2624 = vmul.f32 %v2622, %v2622
    %v2625 = vmul.f32 %v2623, %v2623
    %2626 = vadd.xlane.f32.xlu0 %v2624
    %v2627 = vpop.xlane.xlu0 %2626
    %2628 = vadd.xlane.f32.xlu0 %v2625
    %v2629 = vpop.xlane.xlu0 %2628
    %v2630 = vmul.f32 %v2627, %v177
    %v2631 = vmul.f32 %v2629, %v177
    %v2632 = vadd.f32 %v2630, 1e-12
    %v2633 = vadd.f32 %v2631, 1e-12
    %v2634 = vrsqrt.pop %v2632
    %v2635 = vmul.f32 %v2634, %v2632
    %v2636 = vmul.f32 %v2635, %v2634
    %v2637 = vmul.f32 0.5, %v2636
    %v2638 = vsub.f32 1.5, %v2637
    %v2639 = vmul.f32 %v2634, %v2638
    %vm2640 = vweird.f32 %v2632
    %vm2641 = vweird.f32 %v2634
    %vm2642 = vmor %vm2640, %vm2641
    %v2643 = vsel %vm2642, %v2634, %v2639
    %v2644 = vrsqrt.pop %v2633
    %v2645 = vmul.f32 %v2644, %v2633
    %v2646 = vmul.f32 %v2645, %v2644
    %v2647 = vmul.f32 0.5, %v2646
    %v2648 = vsub.f32 1.5, %v2647
    %v2649 = vmul.f32 %v2644, %v2648
    %vm2650 = vweird.f32 %v2633
    %vm2651 = vweird.f32 %v2644
    %vm2652 = vmor %vm2650, %vm2651
    %v2653 = vsel %vm2652, %v2644, %v2649
    %v2654 = vmul.f32 %v2622, %v2643
    %v2655 = vmul.f32 %v2623, %v2653
    %v2657 = vperm.slane %v2613, 0
    %v2659 = vmul.f32 %v2654, %v2657
    %v2660 = vmul.f32 %v2655, %v2657
    %v2662 = vperm.slane %v2615, 0
    %v2664 = vadd.f32 %v2659, %v2662
    %v2665 = vadd.f32 %v2660, %v2662
    %v2667 = vrot.slane %v2665, 7
    %vm2669 = vcmask 1040384
    %v2670 = vsel %vm2669, %v2664, %v2667
    %v2671 = vpack.c.bf16 %v2670, %v2670
    %v2672 = vld [vmem:[#allocation9] sm:$0xf]
    %v2673 = vld [vmem:[#allocation9 + $0x4] sm:$0xf]
    %v2674 = vld [vmem:[#allocation9 + $0x8] sm:$0xf]
    %v2675 = vld [vmem:[#allocation9 + $0xc] sm:$0xf]
    %v2676 = vld [vmem:[#allocation9 + $0x10] sm:$0xf]
    %v2677 = vld [vmem:[#allocation9 + $0x14] sm:$0xf]
    %v2678 = vld [vmem:[#allocation9 + $0x18] sm:$0xf]
    %v2679 = vld [vmem:[#allocation9 + $0x1c] sm:$0xf]
    %v2680 = vld [vmem:[#allocation9 + $0x20] sm:$0xf]
    %v2681 = vld [vmem:[#allocation9 + $0x24] sm:$0xf]
    %v2682 = vld [vmem:[#allocation9 + $0x28] sm:$0xf]
    %v2683 = vld [vmem:[#allocation9 + $0x2c] sm:$0xf]
    %v2684 = vld [vmem:[#allocation9 + $0x30] sm:$0xf]
    %v2685 = vld [vmem:[#allocation9 + $0x34] sm:$0xf]
    %v2686 = vld [vmem:[#allocation9 + $0x38] sm:$0xf]
    %v2687 = vld [vmem:[#allocation9 + $0x3c] sm:$0xf]
    %v2688 = vld [vmem:[%s17] sm:$0x1]
    %v2690 = vperm.slane %v2688, 0
    %v2708 = vunpack.c.l.b16 %v2672
    %v2709 = vunpack.c.l.b16 %v2673
    %v2710 = vunpack.c.l.b16 %v2674
    %v2711 = vunpack.c.l.b16 %v2675
    %v2712 = vunpack.c.l.b16 %v2676
    %v2713 = vunpack.c.l.b16 %v2677
    %v2714 = vunpack.c.l.b16 %v2678
    %v2715 = vunpack.c.l.b16 %v2679
    %v2716 = vunpack.c.l.b16 %v2680
    %v2717 = vunpack.c.l.b16 %v2681
    %v2718 = vunpack.c.l.b16 %v2682
    %v2719 = vunpack.c.l.b16 %v2683
    %v2720 = vunpack.c.l.b16 %v2684
    %v2721 = vunpack.c.l.b16 %v2685
    %v2722 = vunpack.c.l.b16 %v2686
    %v2723 = vunpack.c.l.b16 %v2687
    %v2724 = vpack.c.b16 %v2709, %v2708
    %v2725 = vpack.c.b16 %v2711, %v2710
    %v2726 = vpack.c.b16 %v2713, %v2712
    %v2727 = vpack.c.b16 %v2715, %v2714
    %v2728 = vpack.c.b16 %v2717, %v2716
    %v2729 = vpack.c.b16 %v2719, %v2718
    %v2730 = vpack.c.b16 %v2721, %v2720
    %v2731 = vpack.c.b16 %v2723, %v2722
    %2740 = vmatpush.bf16.msra.mxu0 %v2731
    %2741 = vmatpush.bf16.msra.mxu0 %v2730
    %2742 = vmatpush.bf16.msra.mxu0 %v2729
    %2743 = vmatpush.bf16.msra.mxu0 %v2728
    %2744 = vmatpush.bf16.msra.mxu0 %v2727
    %2745 = vmatpush.bf16.msra.mxu0 %v2726
    %2746 = vmatpush.bf16.msra.mxu0 %v2725
    %2747 = vmatpush.bf16.msra.mxu0 %v2724
    %2748 = vmatmul.bf16.gmra.mxu0 %v2671
    %v2749 = vpop.f32.mrf.mxu0
    %v2750 = vadd.f32 %v2690, %v2749
    %v2751 = vpop.f32.mrf.mxu0
    %2752 = vdwg.mxu0
    %v2753 = vtanh.pop %v2750
    %s2754 = scalar_lea.vmem %s0, 16
    %v2755 = vld [vmem:[%s2754] sm:$0xff]
    %v2756 = vld [vmem:[%s2754 + $0x8] sm:$0xff]
    %s2757 = scalar_lea.vmem %s2, 1
    %v2758 = vld [vmem:[%s2757] sm:$0x1]
    %s2759 = scalar_lea.vmem %s3, 1
    %v2760 = vld [vmem:[%s2759] sm:$0x1]
    %2761 = vadd.xlane.f32.xlu0 %v2755
    %v2762 = vpop.xlane.xlu0 %2761
    %2763 = vadd.xlane.f32.xlu0 %v2756
    %v2764 = vpop.xlane.xlu0 %2763
    %v2765 = vmul.f32 %v2762, %v177
    %v2766 = vmul.f32 %v2764, %v177
    %v2767 = vsub.f32 %v2755, %v2765
    %v2768 = vsub.f32 %v2756, %v2766
    %v2769 = vmul.f32 %v2767, %v2767
    %v2770 = vmul.f32 %v2768, %v2768
    %2771 = vadd.xlane.f32.xlu0 %v2769
    %v2772 = vpop.xlane.xlu0 %2771
    %2773 = vadd.xlane.f32.xlu0 %v2770
    %v2774 = vpop.xlane.xlu0 %2773
    %v2775 = vmul.f32 %v2772, %v177
    %v2776 = vmul.f32 %v2774, %v177
    %v2777 = vadd.f32 %v2775, 1e-12
    %v2778 = vadd.f32 %v2776, 1e-12
    %v2779 = vrsqrt.pop %v2777
    %v2780 = vmul.f32 %v2779, %v2777
    %v2781 = vmul.f32 %v2780, %v2779
    %v2782 = vmul.f32 0.5, %v2781
    %v2783 = vsub.f32 1.5, %v2782
    %v2784 = vmul.f32 %v2779, %v2783
    %vm2785 = vweird.f32 %v2777
    %vm2786 = vweird.f32 %v2779
    %vm2787 = vmor %vm2785, %vm2786
    %v2788 = vsel %vm2787, %v2779, %v2784
    %v2789 = vrsqrt.pop %v2778
    %v2790 = vmul.f32 %v2789, %v2778
    %v2791 = vmul.f32 %v2790, %v2789
    %v2792 = vmul.f32 0.5, %v2791
    %v2793 = vsub.f32 1.5, %v2792
    %v2794 = vmul.f32 %v2789, %v2793
    %vm2795 = vweird.f32 %v2778
    %vm2796 = vweird.f32 %v2789
    %vm2797 = vmor %vm2795, %vm2796
    %v2798 = vsel %vm2797, %v2789, %v2794
    %v2799 = vmul.f32 %v2767, %v2788
    %v2800 = vmul.f32 %v2768, %v2798
    %v2802 = vperm.slane %v2758, 0
    %v2804 = vmul.f32 %v2799, %v2802
    %v2805 = vmul.f32 %v2800, %v2802
    %v2807 = vperm.slane %v2760, 0
    %v2809 = vadd.f32 %v2804, %v2807
    %v2810 = vadd.f32 %v2805, %v2807
    %v2811 = vpack.c.bf16 %v2810, %v2809
    %s2812 = scalar_lea.vmem [#allocation2], 192
    %v2813 = vld [vmem:[%s2812] sm:$0xff]
    %v2814 = vld [vmem:[%s2812 + $0x8] sm:$0xf]
    %v2815 = vld [vmem:[%s2812 + $0xc] sm:$0xff]
    %v2816 = vld [vmem:[%s2812 + $0x14] sm:$0xf]
    %v2817 = vld [vmem:[%s2812 + $0x18] sm:$0xff]
    %v2818 = vld [vmem:[%s2812 + $0x20] sm:$0xf]
    %v2819 = vld [vmem:[%s2812 + $0x24] sm:$0xff]
    %v2820 = vld [vmem:[%s2812 + $0x2c] sm:$0xf]
    %v2821 = vld [vmem:[%s2812 + $0x30] sm:$0xff]
    %v2822 = vld [vmem:[%s2812 + $0x38] sm:$0xf]
    %v2823 = vld [vmem:[%s2812 + $0x3c] sm:$0xff]
    %v2824 = vld [vmem:[%s2812 + $0x44] sm:$0xf]
    %v2825 = vld [vmem:[%s2812 + $0x48] sm:$0xff]
    %v2826 = vld [vmem:[%s2812 + $0x50] sm:$0xf]
    %v2827 = vld [vmem:[%s2812 + $0x54] sm:$0xff]
    %v2828 = vld [vmem:[%s2812 + $0x5c] sm:$0xf]
    %v2829 = vld [vmem:[%s2812 + $0x60] sm:$0xff]
    %v2830 = vld [vmem:[%s2812 + $0x68] sm:$0xf]
    %v2831 = vld [vmem:[%s2812 + $0x6c] sm:$0xff]
    %v2832 = vld [vmem:[%s2812 + $0x74] sm:$0xf]
    %v2833 = vld [vmem:[%s2812 + $0x78] sm:$0xff]
    %v2834 = vld [vmem:[%s2812 + $0x80] sm:$0xf]
    %v2835 = vld [vmem:[%s2812 + $0x84] sm:$0xff]
    %v2836 = vld [vmem:[%s2812 + $0x8c] sm:$0xf]
    %v2837 = vld [vmem:[%s2812 + $0x90] sm:$0xff]
    %v2838 = vld [vmem:[%s2812 + $0x98] sm:$0xf]
    %v2839 = vld [vmem:[%s2812 + $0x9c] sm:$0xff]
    %v2840 = vld [vmem:[%s2812 + $0xa4] sm:$0xf]
    %v2841 = vld [vmem:[%s2812 + $0xa8] sm:$0xff]
    %v2842 = vld [vmem:[%s2812 + $0xb0] sm:$0xf]
    %v2843 = vld [vmem:[%s2812 + $0xb4] sm:$0xff]
    %v2844 = vld [vmem:[%s2812 + $0xbc] sm:$0xf]
    %s2845 = scalar_lea.vmem %s5, 3
    %v2846 = vld [vmem:[%s2845] sm:$0x7]
    %v2848 = vperm.slane %v2846, 0
    %v2849 = vperm.slane %v2846, 1
    %v2850 = vperm.slane %v2846, 2
    %v2886 = vunpack.c.l.b16 %v2813
    %v2887 = vunpack.c.h.b16 %v2813
    %v2888 = vunpack.c.l.b16 %v2814
    %v2889 = vunpack.c.l.b16 %v2815
    %v2890 = vunpack.c.h.b16 %v2815
    %v2891 = vunpack.c.l.b16 %v2816
    %v2892 = vunpack.c.l.b16 %v2817
    %v2893 = vunpack.c.h.b16 %v2817
    %v2894 = vunpack.c.l.b16 %v2818
    %v2895 = vunpack.c.l.b16 %v2819
    %v2896 = vunpack.c.h.b16 %v2819
    %v2897 = vunpack.c.l.b16 %v2820
    %v2898 = vunpack.c.l.b16 %v2821
    %v2899 = vunpack.c.h.b16 %v2821
    %v2900 = vunpack.c.l.b16 %v2822
    %v2901 = vunpack.c.l.b16 %v2823
    %v2902 = vunpack.c.h.b16 %v2823
    %v2903 = vunpack.c.l.b16 %v2824
    %v2904 = vunpack.c.l.b16 %v2825
    %v2905 = vunpack.c.h.b16 %v2825
    %v2906 = vunpack.c.l.b16 %v2826
    %v2907 = vunpack.c.l.b16 %v2827
    %v2908 = vunpack.c.h.b16 %v2827
    %v2909 = vunpack.c.l.b16 %v2828
    %v2910 = vunpack.c.l.b16 %v2829
    %v2911 = vunpack.c.h.b16 %v2829
    %v2912 = vunpack.c.l.b16 %v2830
    %v2913 = vunpack.c.l.b16 %v2831
    %v2914 = vunpack.c.h.b16 %v2831
    %v2915 = vunpack.c.l.b16 %v2832
    %v2916 = vunpack.c.l.b16 %v2833
    %v2917 = vunpack.c.h.b16 %v2833
    %v2918 = vunpack.c.l.b16 %v2834
    %v2919 = vunpack.c.l.b16 %v2835
    %v2920 = vunpack.c.h.b16 %v2835
    %v2921 = vunpack.c.l.b16 %v2836
    %v2922 = vunpack.c.l.b16 %v2837
    %v2923 = vunpack.c.h.b16 %v2837
    %v2924 = vunpack.c.l.b16 %v2838
    %v2925 = vunpack.c.l.b16 %v2839
    %v2926 = vunpack.c.h.b16 %v2839
    %v2927 = vunpack.c.l.b16 %v2840
    %v2928 = vunpack.c.l.b16 %v2841
    %v2929 = vunpack.c.h.b16 %v2841
    %v2930 = vunpack.c.l.b16 %v2842
    %v2931 = vunpack.c.l.b16 %v2843
    %v2932 = vunpack.c.h.b16 %v2843
    %v2933 = vunpack.c.l.b16 %v2844
    %v2934 = vpack.c.b16 %v2889, %v2886
    %v2935 = vpack.c.b16 %v2890, %v2887
    %v2936 = vpack.c.b16 %v2891, %v2888
    %v2937 = vpack.c.b16 %v2895, %v2892
    %v2938 = vpack.c.b16 %v2896, %v2893
    %v2939 = vpack.c.b16 %v2897, %v2894
    %v2940 = vpack.c.b16 %v2901, %v2898
    %v2941 = vpack.c.b16 %v2902, %v2899
    %v2942 = vpack.c.b16 %v2903, %v2900
    %v2943 = vpack.c.b16 %v2907, %v2904
    %v2944 = vpack.c.b16 %v2908, %v2905
    %v2945 = vpack.c.b16 %v2909, %v2906
    %v2946 = vpack.c.b16 %v2913, %v2910
    %v2947 = vpack.c.b16 %v2914, %v2911
    %v2948 = vpack.c.b16 %v2915, %v2912
    %v2949 = vpack.c.b16 %v2919, %v2916
    %v2950 = vpack.c.b16 %v2920, %v2917
    %v2951 = vpack.c.b16 %v2921, %v2918
    %v2952 = vpack.c.b16 %v2925, %v2922
    %v2953 = vpack.c.b16 %v2926, %v2923
    %v2954 = vpack.c.b16 %v2927, %v2924
    %v2955 = vpack.c.b16 %v2931, %v2928
    %v2956 = vpack.c.b16 %v2932, %v2929
    %v2957 = vpack.c.b16 %v2933, %v2930
    %2982 = vmatpush.bf16.msra.mxu0 %v2955
    %2983 = vmatpush.bf16.msra.mxu0 %v2952
    %2984 = vmatpush.bf16.msra.mxu0 %v2949
    %2985 = vmatpush.bf16.msra.mxu0 %v2946
    %2986 = vmatpush.bf16.msra.mxu0 %v2943
    %2987 = vmatpush.bf16.msra.mxu0 %v2940
    %2988 = vmatpush.bf16.msra.mxu0 %v2937
    %2989 = vmatpush.bf16.msra.mxu0 %v2934
    %2990 = vmatmul.bf16.gmra.mxu0 %v2811
    %v2991 = vpop.f32.mrf.mxu0
    %v2992 = vadd.f32 %v2848, %v2991
    %v2993 = vpop.f32.mrf.mxu0
    %v2994 = vadd.f32 %v2848, %v2993
    %2995 = vdwg.mxu0
    %2996 = vmatpush.bf16.msra.mxu0 %v2956
    %2997 = vmatpush.bf16.msra.mxu0 %v2953
    %2998 = vmatpush.bf16.msra.mxu0 %v2950
    %2999 = vmatpush.bf16.msra.mxu0 %v2947
    %3000 = vmatpush.bf16.msra.mxu0 %v2944
    %3001 = vmatpush.bf16.msra.mxu0 %v2941
    %3002 = vmatpush.bf16.msra.mxu0 %v2938
    %3003 = vmatpush.bf16.msra.mxu0 %v2935
    %3004 = vmatmul.bf16.gmra.mxu0 %v2811
    %v3005 = vpop.f32.mrf.mxu0
    %v3006 = vadd.f32 %v2849, %v3005
    %v3007 = vpop.f32.mrf.mxu0
    %v3008 = vadd.f32 %v2849, %v3007
    %3009 = vdwg.mxu0
    %3010 = vmatpush.bf16.msra.mxu0 %v2957
    %3011 = vmatpush.bf16.msra.mxu0 %v2954
    %3012 = vmatpush.bf16.msra.mxu0 %v2951
    %3013 = vmatpush.bf16.msra.mxu0 %v2948
    %3014 = vmatpush.bf16.msra.mxu0 %v2945
    %3015 = vmatpush.bf16.msra.mxu0 %v2942
    %3016 = vmatpush.bf16.msra.mxu0 %v2939
    %3017 = vmatpush.bf16.msra.mxu0 %v2936
    %3018 = vmatmul.bf16.gmra.mxu0 %v2811
    %v3019 = vpop.f32.mrf.mxu0
    %v3020 = vadd.f32 %v2850, %v3019
    %v3021 = vpop.f32.mrf.mxu0
    %v3022 = vadd.f32 %v2850, %v3021
    %3023 = vdwg.mxu0
    %v3024 = vpack.c.bf16 %v3006, %v2992
    %v3025 = vpack.c.bf16 %v3020, %v3020
    %v3026 = vpack.c.bf16 %v3008, %v2994
    %v3027 = vpack.c.bf16 %v3022, %v3022
    %3030 = vrot.lane.b32.xlu0 %v3024, 96
    %v3031 = vpop.permute.xlu0 %3030
    %3032 = vrot.lane.b32.xlu0 %v3026, 96
    %v3033 = vpop.permute.xlu0 %3032
    %3034 = vrot.lane.b32.xlu0 %v3024, 64
    %v3035 = vpop.permute.xlu0 %3034
    %3036 = vrot.lane.b32.xlu0 %v3026, 64
    %v3037 = vpop.permute.xlu0 %3036
    %3038 = vrot.lane.b32.xlu0 %v3024, 32
    %v3039 = vpop.permute.xlu0 %3038
    %3040 = vrot.lane.b32.xlu0 %v3026, 32
    %v3041 = vpop.permute.xlu0 %3040
    %v3042 = vrot.slane %v3024, 4
    %v3043 = vrot.slane %v3026, 4
    %v3044 = vrot.slane %v3031, 4
    %v3045 = vrot.slane %v3033, 4
    %v3046 = vrot.slane %v3035, 4
    %v3047 = vrot.slane %v3037, 4
    %v3048 = vrot.slane %v3039, 4
    %v3049 = vrot.slane %v3041, 4
    %3052 = vrot.lane.b32.xlu0 %v3025, 96
    %v3053 = vpop.permute.xlu0 %3052
    %3054 = vrot.lane.b32.xlu0 %v3027, 96
    %v3055 = vpop.permute.xlu0 %3054
    %3056 = vrot.lane.b32.xlu0 %v3025, 64
    %v3057 = vpop.permute.xlu0 %3056
    %3058 = vrot.lane.b32.xlu0 %v3027, 64
    %v3059 = vpop.permute.xlu0 %3058
    %3060 = vrot.lane.b32.xlu0 %v3025, 32
    %v3061 = vpop.permute.xlu0 %3060
    %3062 = vrot.lane.b32.xlu0 %v3027, 32
    %v3063 = vpop.permute.xlu0 %3062
    %v3065 = vsel %vm499, %v3024, 0
    %v3068 = vsel %vm499, %v3042, 0
    %3070 = vmatpush.bf16.xpose.msra.mxu0 0
    %3071 = vmatpush.bf16.xpose.msra.mxu0 0
    %3072 = vmatpush.bf16.xpose.msra.mxu0 0
    %3073 = vmatpush.bf16.xpose.msra.mxu0 0
    %3074 = vmatpush.bf16.xpose.msra.mxu0 0
    %3075 = vmatpush.bf16.xpose.msra.mxu0 0
    %3076 = vmatpush.bf16.xpose.msra.mxu0 0
    %3077 = vmatpush.bf16.xpose.msra.mxu0 %v3068
    %3078 = vmatmul.bf16.gmra.mxu0 %v3065
    %v3079 = vpop.f32.mrf.mxu0
    %v3080 = vadd.f32 %v483, %v3079
    %v3081 = vpop.f32.mrf.mxu0
    %3082 = vdwg.mxu0
    %v3084 = vsel %vm499, %v3026, 0
    %v3087 = vsel %vm499, %v3043, 0
    %3089 = vmatpush.bf16.xpose.msra.mxu0 0
    %3090 = vmatpush.bf16.xpose.msra.mxu0 0
    %3091 = vmatpush.bf16.xpose.msra.mxu0 0
    %3092 = vmatpush.bf16.xpose.msra.mxu0 0
    %3093 = vmatpush.bf16.xpose.msra.mxu0 0
    %3094 = vmatpush.bf16.xpose.msra.mxu0 0
    %3095 = vmatpush.bf16.xpose.msra.mxu0 0
    %3096 = vmatpush.bf16.xpose.msra.mxu0 %v3087
    %3097 = vmatmul.bf16.gmra.mxu0 %v3084
    %v3098 = vpop.f32.mrf.mxu0
    %v3099 = vadd.f32 %v484, %v3098
    %v3100 = vpop.f32.mrf.mxu0
    %3101 = vdwg.mxu0
    %v3103 = vsel %vm499, %v3031, 0
    %v3106 = vsel %vm499, %v3044, 0
    %3108 = vmatpush.bf16.xpose.msra.mxu0 0
    %3109 = vmatpush.bf16.xpose.msra.mxu0 0
    %3110 = vmatpush.bf16.xpose.msra.mxu0 0
    %3111 = vmatpush.bf16.xpose.msra.mxu0 0
    %3112 = vmatpush.bf16.xpose.msra.mxu0 0
    %3113 = vmatpush.bf16.xpose.msra.mxu0 0
    %3114 = vmatpush.bf16.xpose.msra.mxu0 0
    %3115 = vmatpush.bf16.xpose.msra.mxu0 %v3106
    %3116 = vmatmul.bf16.gmra.mxu0 %v3103
    %v3117 = vpop.f32.mrf.mxu0
    %v3118 = vadd.f32 %v485, %v3117
    %v3119 = vpop.f32.mrf.mxu0
    %3120 = vdwg.mxu0
    %v3122 = vsel %vm499, %v3033, 0
    %v3125 = vsel %vm499, %v3045, 0
    %3127 = vmatpush.bf16.xpose.msra.mxu0 0
    %3128 = vmatpush.bf16.xpose.msra.mxu0 0
    %3129 = vmatpush.bf16.xpose.msra.mxu0 0
    %3130 = vmatpush.bf16.xpose.msra.mxu0 0
    %3131 = vmatpush.bf16.xpose.msra.mxu0 0
    %3132 = vmatpush.bf16.xpose.msra.mxu0 0
    %3133 = vmatpush.bf16.xpose.msra.mxu0 0
    %3134 = vmatpush.bf16.xpose.msra.mxu0 %v3125
    %3135 = vmatmul.bf16.gmra.mxu0 %v3122
    %v3136 = vpop.f32.mrf.mxu0
    %v3137 = vadd.f32 %v486, %v3136
    %v3138 = vpop.f32.mrf.mxu0
    %3139 = vdwg.mxu0
    %v3141 = vsel %vm499, %v3035, 0
    %v3144 = vsel %vm499, %v3046, 0
    %3146 = vmatpush.bf16.xpose.msra.mxu0 0
    %3147 = vmatpush.bf16.xpose.msra.mxu0 0
    %3148 = vmatpush.bf16.xpose.msra.mxu0 0
    %3149 = vmatpush.bf16.xpose.msra.mxu0 0
    %3150 = vmatpush.bf16.xpose.msra.mxu0 0
    %3151 = vmatpush.bf16.xpose.msra.mxu0 0
    %3152 = vmatpush.bf16.xpose.msra.mxu0 0
    %3153 = vmatpush.bf16.xpose.msra.mxu0 %v3144
    %3154 = vmatmul.bf16.gmra.mxu0 %v3141
    %v3155 = vpop.f32.mrf.mxu0
    %v3156 = vadd.f32 %v487, %v3155
    %v3157 = vpop.f32.mrf.mxu0
    %3158 = vdwg.mxu0
    %v3160 = vsel %vm499, %v3037, 0
    %v3163 = vsel %vm499, %v3047, 0
    %3165 = vmatpush.bf16.xpose.msra.mxu0 0
    %3166 = vmatpush.bf16.xpose.msra.mxu0 0
    %3167 = vmatpush.bf16.xpose.msra.mxu0 0
    %3168 = vmatpush.bf16.xpose.msra.mxu0 0
    %3169 = vmatpush.bf16.xpose.msra.mxu0 0
    %3170 = vmatpush.bf16.xpose.msra.mxu0 0
    %3171 = vmatpush.bf16.xpose.msra.mxu0 0
    %3172 = vmatpush.bf16.xpose.msra.mxu0 %v3163
    %3173 = vmatmul.bf16.gmra.mxu0 %v3160
    %v3174 = vpop.f32.mrf.mxu0
    %v3175 = vadd.f32 %v488, %v3174
    %v3176 = vpop.f32.mrf.mxu0
    %3177 = vdwg.mxu0
    %v3179 = vsel %vm499, %v3039, 0
    %v3182 = vsel %vm499, %v3048, 0
    %3184 = vmatpush.bf16.xpose.msra.mxu0 0
    %3185 = vmatpush.bf16.xpose.msra.mxu0 0
    %3186 = vmatpush.bf16.xpose.msra.mxu0 0
    %3187 = vmatpush.bf16.xpose.msra.mxu0 0
    %3188 = vmatpush.bf16.xpose.msra.mxu0 0
    %3189 = vmatpush.bf16.xpose.msra.mxu0 0
    %3190 = vmatpush.bf16.xpose.msra.mxu0 0
    %3191 = vmatpush.bf16.xpose.msra.mxu0 %v3182
    %3192 = vmatmul.bf16.gmra.mxu0 %v3179
    %v3193 = vpop.f32.mrf.mxu0
    %v3194 = vadd.f32 %v489, %v3193
    %v3195 = vpop.f32.mrf.mxu0
    %3196 = vdwg.mxu0
    %v3198 = vsel %vm499, %v3041, 0
    %v3201 = vsel %vm499, %v3049, 0
    %3203 = vmatpush.bf16.xpose.msra.mxu0 0
    %3204 = vmatpush.bf16.xpose.msra.mxu0 0
    %3205 = vmatpush.bf16.xpose.msra.mxu0 0
    %3206 = vmatpush.bf16.xpose.msra.mxu0 0
    %3207 = vmatpush.bf16.xpose.msra.mxu0 0
    %3208 = vmatpush.bf16.xpose.msra.mxu0 0
    %3209 = vmatpush.bf16.xpose.msra.mxu0 0
    %3210 = vmatpush.bf16.xpose.msra.mxu0 %v3201
    %3211 = vmatmul.bf16.gmra.mxu0 %v3198
    %v3212 = vpop.f32.mrf.mxu0
    %v3213 = vadd.f32 %v490, %v3212
    %v3214 = vpop.f32.mrf.mxu0
    %3215 = vdwg.mxu0
    %v3216 = vsel %vm652, %v3080, -inf
    %3217 = vmax.xlane.f32.xlu0 %v3216
    %v3218 = vpop.xlane.xlu0 %3217
    %v3219 = vsel %vm652, %v3099, -inf
    %3220 = vmax.xlane.f32.xlu0 %v3219
    %v3221 = vpop.xlane.xlu0 %3220
    %v3222 = vsel %vm652, %v3118, -inf
    %3223 = vmax.xlane.f32.xlu0 %v3222
    %v3224 = vpop.xlane.xlu0 %3223
    %v3225 = vsel %vm652, %v3137, -inf
    %3226 = vmax.xlane.f32.xlu0 %v3225
    %v3227 = vpop.xlane.xlu0 %3226
    %v3228 = vsel %vm652, %v3156, -inf
    %3229 = vmax.xlane.f32.xlu0 %v3228
    %v3230 = vpop.xlane.xlu0 %3229
    %v3231 = vsel %vm652, %v3175, -inf
    %3232 = vmax.xlane.f32.xlu0 %v3231
    %v3233 = vpop.xlane.xlu0 %3232
    %v3234 = vsel %vm652, %v3194, -inf
    %3235 = vmax.xlane.f32.xlu0 %v3234
    %v3236 = vpop.xlane.xlu0 %3235
    %v3237 = vsel %vm652, %v3213, -inf
    %3238 = vmax.xlane.f32.xlu0 %v3237
    %v3239 = vpop.xlane.xlu0 %3238
    %v3240 = vsub.f32 %v3080, %v3218
    %v3241 = vsub.f32 %v3099, %v3221
    %v3242 = vsub.f32 %v3118, %v3224
    %v3243 = vsub.f32 %v3137, %v3227
    %v3244 = vsub.f32 %v3156, %v3230
    %v3245 = vsub.f32 %v3175, %v3233
    %v3246 = vsub.f32 %v3194, %v3236
    %v3247 = vsub.f32 %v3213, %v3239
    %v3248 = vmul.f32 %v3240, 1.442695
    %v3249 = vpow.pop %v3248
    %v3250 = vmul.f32 %v3241, 1.442695
    %v3251 = vpow.pop %v3250
    %v3252 = vmul.f32 %v3242, 1.442695
    %v3253 = vpow.pop %v3252
    %v3254 = vmul.f32 %v3243, 1.442695
    %v3255 = vpow.pop %v3254
    %v3256 = vmul.f32 %v3244, 1.442695
    %v3257 = vpow.pop %v3256
    %v3258 = vmul.f32 %v3245, 1.442695
    %v3259 = vpow.pop %v3258
    %v3260 = vmul.f32 %v3246, 1.442695
    %v3261 = vpow.pop %v3260
    %v3262 = vmul.f32 %v3247, 1.442695
    %v3263 = vpow.pop %v3262
    %v3264 = vsel %vm652, %v3249, 0.0
    %3265 = vadd.xlane.f32.xlu0 %v3264
    %v3266 = vpop.xlane.xlu0 %3265
    %v3267 = vsel %vm652, %v3251, 0.0
    %3268 = vadd.xlane.f32.xlu0 %v3267
    %v3269 = vpop.xlane.xlu0 %3268
    %v3270 = vsel %vm652, %v3253, 0.0
    %3271 = vadd.xlane.f32.xlu0 %v3270
    %v3272 = vpop.xlane.xlu0 %3271
    %v3273 = vsel %vm652, %v3255, 0.0
    %3274 = vadd.xlane.f32.xlu0 %v3273
    %v3275 = vpop.xlane.xlu0 %3274
    %v3276 = vsel %vm652, %v3257, 0.0
    %3277 = vadd.xlane.f32.xlu0 %v3276
    %v3278 = vpop.xlane.xlu0 %3277
    %v3279 = vsel %vm652, %v3259, 0.0
    %3280 = vadd.xlane.f32.xlu0 %v3279
    %v3281 = vpop.xlane.xlu0 %3280
    %v3282 = vsel %vm652, %v3261, 0.0
    %3283 = vadd.xlane.f32.xlu0 %v3282
    %v3284 = vpop.xlane.xlu0 %3283
    %v3285 = vsel %vm652, %v3263, 0.0
    %3286 = vadd.xlane.f32.xlu0 %v3285
    %v3287 = vpop.xlane.xlu0 %3286
    %v3288 = vrcp.pop %v3266
    %v3289 = vrcp.pop %v3269
    %v3290 = vrcp.pop %v3272
    %v3291 = vrcp.pop %v3275
    %v3292 = vrcp.pop %v3278
    %v3293 = vrcp.pop %v3281
    %v3294 = vrcp.pop %v3284
    %v3295 = vrcp.pop %v3287
    %v3296 = vmul.f32 %v3249, %v3288
    %v3297 = vmul.f32 %v3251, %v3289
    %v3298 = vmul.f32 %v3253, %v3290
    %v3299 = vmul.f32 %v3255, %v3291
    %v3300 = vmul.f32 %v3257, %v3292
    %v3301 = vmul.f32 %v3259, %v3293
    %v3302 = vmul.f32 %v3261, %v3294
    %v3303 = vmul.f32 %v3263, %v3295
    %v3304 = vpack.c.bf16 %v3296, %v3296
    %v3305 = vpack.c.bf16 %v3297, %v3297
    %v3306 = vpack.c.bf16 %v3298, %v3298
    %v3307 = vpack.c.bf16 %v3299, %v3299
    %v3308 = vpack.c.bf16 %v3300, %v3300
    %v3309 = vpack.c.bf16 %v3301, %v3301
    %v3310 = vpack.c.bf16 %v3302, %v3302
    %v3311 = vpack.c.bf16 %v3303, %v3303
    %v3313 = vsel %vm652, %v3304, 0
    %v3316 = vsel %vm159, %v3025, 0
    %3318 = vmatpush.bf16.msra.mxu0 0
    %3319 = vmatpush.bf16.msra.mxu0 0
    %3320 = vmatpush.bf16.msra.mxu0 0
    %3321 = vmatpush.bf16.msra.mxu0 0
    %3322 = vmatpush.bf16.msra.mxu0 0
    %3323 = vmatpush.bf16.msra.mxu0 0
    %3324 = vmatpush.bf16.msra.mxu0 0
    %3325 = vmatpush.bf16.msra.mxu0 %v3316
    %3326 = vmatmul.bf16.gmra.mxu0 %v3313
    %v3327 = vpop.f32.mrf.mxu0
    %v3328 = vadd.f32 0.0, %v3327
    %v3329 = vpop.f32.mrf.mxu0
    %3330 = vdwg.mxu0
    %v3332 = vsel %vm652, %v3305, 0
    %v3335 = vsel %vm159, %v3027, 0
    %3337 = vmatpush.bf16.msra.mxu0 0
    %3338 = vmatpush.bf16.msra.mxu0 0
    %3339 = vmatpush.bf16.msra.mxu0 0
    %3340 = vmatpush.bf16.msra.mxu0 0
    %3341 = vmatpush.bf16.msra.mxu0 0
    %3342 = vmatpush.bf16.msra.mxu0 0
    %3343 = vmatpush.bf16.msra.mxu0 0
    %3344 = vmatpush.bf16.msra.mxu0 %v3335
    %3345 = vmatmul.bf16.gmra.mxu0 %v3332
    %v3346 = vpop.f32.mrf.mxu0
    %v3347 = vadd.f32 0.0, %v3346
    %v3348 = vpop.f32.mrf.mxu0
    %3349 = vdwg.mxu0
    %v3351 = vsel %vm652, %v3306, 0
    %v3354 = vsel %vm159, %v3053, 0
    %3356 = vmatpush.bf16.msra.mxu0 0
    %3357 = vmatpush.bf16.msra.mxu0 0
    %3358 = vmatpush.bf16.msra.mxu0 0
    %3359 = vmatpush.bf16.msra.mxu0 0
    %3360 = vmatpush.bf16.msra.mxu0 0
    %3361 = vmatpush.bf16.msra.mxu0 0
    %3362 = vmatpush.bf16.msra.mxu0 0
    %3363 = vmatpush.bf16.msra.mxu0 %v3354
    %3364 = vmatmul.bf16.gmra.mxu0 %v3351
    %v3365 = vpop.f32.mrf.mxu0
    %v3366 = vadd.f32 0.0, %v3365
    %v3367 = vpop.f32.mrf.mxu0
    %3368 = vdwg.mxu0
    %v3370 = vsel %vm652, %v3307, 0
    %v3373 = vsel %vm159, %v3055, 0
    %3375 = vmatpush.bf16.msra.mxu0 0
    %3376 = vmatpush.bf16.msra.mxu0 0
    %3377 = vmatpush.bf16.msra.mxu0 0
    %3378 = vmatpush.bf16.msra.mxu0 0
    %3379 = vmatpush.bf16.msra.mxu0 0
    %3380 = vmatpush.bf16.msra.mxu0 0
    %3381 = vmatpush.bf16.msra.mxu0 0
    %3382 = vmatpush.bf16.msra.mxu0 %v3373
    %3383 = vmatmul.bf16.gmra.mxu0 %v3370
    %v3384 = vpop.f32.mrf.mxu0
    %v3385 = vadd.f32 0.0, %v3384
    %v3386 = vpop.f32.mrf.mxu0
    %3387 = vdwg.mxu0
    %v3389 = vsel %vm652, %v3308, 0
    %v3392 = vsel %vm159, %v3057, 0
    %3394 = vmatpush.bf16.msra.mxu0 0
    %3395 = vmatpush.bf16.msra.mxu0 0
    %3396 = vmatpush.bf16.msra.mxu0 0
    %3397 = vmatpush.bf16.msra.mxu0 0
    %3398 = vmatpush.bf16.msra.mxu0 0
    %3399 = vmatpush.bf16.msra.mxu0 0
    %3400 = vmatpush.bf16.msra.mxu0 0
    %3401 = vmatpush.bf16.msra.mxu0 %v3392
    %3402 = vmatmul.bf16.gmra.mxu0 %v3389
    %v3403 = vpop.f32.mrf.mxu0
    %v3404 = vadd.f32 0.0, %v3403
    %v3405 = vpop.f32.mrf.mxu0
    %3406 = vdwg.mxu0
    %v3408 = vsel %vm652, %v3309, 0
    %v3411 = vsel %vm159, %v3059, 0
    %3413 = vmatpush.bf16.msra.mxu0 0
    %3414 = vmatpush.bf16.msra.mxu0 0
    %3415 = vmatpush.bf16.msra.mxu0 0
    %3416 = vmatpush.bf16.msra.mxu0 0
    %3417 = vmatpush.bf16.msra.mxu0 0
    %3418 = vmatpush.bf16.msra.mxu0 0
    %3419 = vmatpush.bf16.msra.mxu0 0
    %3420 = vmatpush.bf16.msra.mxu0 %v3411
    %3421 = vmatmul.bf16.gmra.mxu0 %v3408
    %v3422 = vpop.f32.mrf.mxu0
    %v3423 = vadd.f32 0.0, %v3422
    %v3424 = vpop.f32.mrf.mxu0
    %3425 = vdwg.mxu0
    %v3427 = vsel %vm652, %v3310, 0
    %v3430 = vsel %vm159, %v3061, 0
    %3432 = vmatpush.bf16.msra.mxu0 0
    %3433 = vmatpush.bf16.msra.mxu0 0
    %3434 = vmatpush.bf16.msra.mxu0 0
    %3435 = vmatpush.bf16.msra.mxu0 0
    %3436 = vmatpush.bf16.msra.mxu0 0
    %3437 = vmatpush.bf16.msra.mxu0 0
    %3438 = vmatpush.bf16.msra.mxu0 0
    %3439 = vmatpush.bf16.msra.mxu0 %v3430
    %3440 = vmatmul.bf16.gmra.mxu0 %v3427
    %v3441 = vpop.f32.mrf.mxu0
    %v3442 = vadd.f32 0.0, %v3441
    %v3443 = vpop.f32.mrf.mxu0
    %3444 = vdwg.mxu0
    %v3446 = vsel %vm652, %v3311, 0
    %v3449 = vsel %vm159, %v3063, 0
    %3451 = vmatpush.bf16.msra.mxu0 0
    %3452 = vmatpush.bf16.msra.mxu0 0
    %3453 = vmatpush.bf16.msra.mxu0 0
    %3454 = vmatpush.bf16.msra.mxu0 0
    %3455 = vmatpush.bf16.msra.mxu0 0
    %3456 = vmatpush.bf16.msra.mxu0 0
    %3457 = vmatpush.bf16.msra.mxu0 0
    %3458 = vmatpush.bf16.msra.mxu0 %v3449
    %3459 = vmatmul.bf16.gmra.mxu0 %v3446
    %v3460 = vpop.f32.mrf.mxu0
    %v3461 = vadd.f32 0.0, %v3460
    %v3462 = vpop.f32.mrf.mxu0
    %3463 = vdwg.mxu0
    %3466 = vrot.lane.b32.xlu0 %v3366, 32
    %v3467 = vpop.permute.xlu0 %3466
    %3468 = vrot.lane.b32.xlu0 %v3385, 32
    %v3469 = vpop.permute.xlu0 %3468
    %3474 = vrot.lane.b32.xlu0 %v3404, 64
    %v3475 = vpop.permute.xlu0 %3474
    %3476 = vrot.lane.b32.xlu0 %v3423, 64
    %v3477 = vpop.permute.xlu0 %3476
    %3482 = vrot.lane.b32.xlu0 %v3442, 96
    %v3483 = vpop.permute.xlu0 %3482
    %3484 = vrot.lane.b32.xlu0 %v3461, 96
    %v3485 = vpop.permute.xlu0 %3484
    %v3488 = vsel %vm499, %v3328, %v3467
    %v3489 = vsel %vm499, %v3347, %v3469
    %v3490 = vsel %vm927, %v3488, %v3475
    %v3491 = vsel %vm927, %v3489, %v3477
    %v3492 = vsel %vm930, %v3490, %v3483
    %v3493 = vsel %vm930, %v3491, %v3485
    %v3494 = vpack.c.bf16 %v3493, %v3492
    %s3495 = scalar_lea.vmem [#allocation4], 64
    %v3496 = vld [vmem:[%s3495] sm:$0xf]
    %v3497 = vld [vmem:[%s3495 + $0x4] sm:$0xf]
    %v3498 = vld [vmem:[%s3495 + $0x8] sm:$0xf]
    %v3499 = vld [vmem:[%s3495 + $0xc] sm:$0xf]
    %v3500 = vld [vmem:[%s3495 + $0x10] sm:$0xf]
    %v3501 = vld [vmem:[%s3495 + $0x14] sm:$0xf]
    %v3502 = vld [vmem:[%s3495 + $0x18] sm:$0xf]
    %v3503 = vld [vmem:[%s3495 + $0x1c] sm:$0xf]
    %v3504 = vld [vmem:[%s3495 + $0x20] sm:$0xf]
    %v3505 = vld [vmem:[%s3495 + $0x24] sm:$0xf]
    %v3506 = vld [vmem:[%s3495 + $0x28] sm:$0xf]
    %v3507 = vld [vmem:[%s3495 + $0x2c] sm:$0xf]
    %v3508 = vld [vmem:[%s3495 + $0x30] sm:$0xf]
    %v3509 = vld [vmem:[%s3495 + $0x34] sm:$0xf]
    %v3510 = vld [vmem:[%s3495 + $0x38] sm:$0xf]
    %v3511 = vld [vmem:[%s3495 + $0x3c] sm:$0xf]
    %s3512 = scalar_lea.vmem %s7, 1
    %v3513 = vld [vmem:[%s3512] sm:$0x1]
    %v3515 = vperm.slane %v3513, 0
    %v3533 = vunpack.c.l.b16 %v3496
    %v3534 = vunpack.c.l.b16 %v3497
    %v3535 = vunpack.c.l.b16 %v3498
    %v3536 = vunpack.c.l.b16 %v3499
    %v3537 = vunpack.c.l.b16 %v3500
    %v3538 = vunpack.c.l.b16 %v3501
    %v3539 = vunpack.c.l.b16 %v3502
    %v3540 = vunpack.c.l.b16 %v3503
    %v3541 = vunpack.c.l.b16 %v3504
    %v3542 = vunpack.c.l.b16 %v3505
    %v3543 = vunpack.c.l.b16 %v3506
    %v3544 = vunpack.c.l.b16 %v3507
    %v3545 = vunpack.c.l.b16 %v3508
    %v3546 = vunpack.c.l.b16 %v3509
    %v3547 = vunpack.c.l.b16 %v3510
    %v3548 = vunpack.c.l.b16 %v3511
    %v3549 = vpack.c.b16 %v3534, %v3533
    %v3550 = vpack.c.b16 %v3536, %v3535
    %v3551 = vpack.c.b16 %v3538, %v3537
    %v3552 = vpack.c.b16 %v3540, %v3539
    %v3553 = vpack.c.b16 %v3542, %v3541
    %v3554 = vpack.c.b16 %v3544, %v3543
    %v3555 = vpack.c.b16 %v3546, %v3545
    %v3556 = vpack.c.b16 %v3548, %v3547
    %3565 = vmatpush.bf16.msra.mxu0 %v3556
    %3566 = vmatpush.bf16.msra.mxu0 %v3555
    %3567 = vmatpush.bf16.msra.mxu0 %v3554
    %3568 = vmatpush.bf16.msra.mxu0 %v3553
    %3569 = vmatpush.bf16.msra.mxu0 %v3552
    %3570 = vmatpush.bf16.msra.mxu0 %v3551
    %3571 = vmatpush.bf16.msra.mxu0 %v3550
    %3572 = vmatpush.bf16.msra.mxu0 %v3549
    %3573 = vmatmul.bf16.gmra.mxu0 %v3494
    %v3574 = vpop.f32.mrf.mxu0
    %v3575 = vadd.f32 %v3515, %v3574
    %v3576 = vpop.f32.mrf.mxu0
    %v3577 = vadd.f32 %v3515, %v3576
    %3578 = vdwg.mxu0
    %v3579 = vadd.f32 %v3575, %v2809
    %v3580 = vadd.f32 %v3577, %v2810
    %s3581 = scalar_lea.vmem %s8, 1
    %v3582 = vld [vmem:[%s3581] sm:$0x1]
    %s3583 = scalar_lea.vmem %s9, 1
    %v3584 = vld [vmem:[%s3583] sm:$0x1]
    %3585 = vadd.xlane.f32.xlu0 %v3579
    %v3586 = vpop.xlane.xlu0 %3585
    %3587 = vadd.xlane.f32.xlu0 %v3580
    %v3588 = vpop.xlane.xlu0 %3587
    %v3589 = vmul.f32 %v3586, %v177
    %v3590 = vmul.f32 %v3588, %v177
    %v3591 = vsub.f32 %v3579, %v3589
    %v3592 = vsub.f32 %v3580, %v3590
    %v3593 = vmul.f32 %v3591, %v3591
    %v3594 = vmul.f32 %v3592, %v3592
    %3595 = vadd.xlane.f32.xlu0 %v3593
    %v3596 = vpop.xlane.xlu0 %3595
    %3597 = vadd.xlane.f32.xlu0 %v3594
    %v3598 = vpop.xlane.xlu0 %3597
    %v3599 = vmul.f32 %v3596, %v177
    %v3600 = vmul.f32 %v3598, %v177
    %v3601 = vadd.f32 %v3599, 1e-12
    %v3602 = vadd.f32 %v3600, 1e-12
    %v3603 = vrsqrt.pop %v3601
    %v3604 = vmul.f32 %v3603, %v3601
    %v3605 = vmul.f32 %v3604, %v3603
    %v3606 = vmul.f32 0.5, %v3605
    %v3607 = vsub.f32 1.5, %v3606
    %v3608 = vmul.f32 %v3603, %v3607
    %vm3609 = vweird.f32 %v3601
    %vm3610 = vweird.f32 %v3603
    %vm3611 = vmor %vm3609, %vm3610
    %v3612 = vsel %vm3611, %v3603, %v3608
    %v3613 = vrsqrt.pop %v3602
    %v3614 = vmul.f32 %v3613, %v3602
    %v3615 = vmul.f32 %v3614, %v3613
    %v3616 = vmul.f32 0.5, %v3615
    %v3617 = vsub.f32 1.5, %v3616
    %v3618 = vmul.f32 %v3613, %v3617
    %vm3619 = vweird.f32 %v3602
    %vm3620 = vweird.f32 %v3613
    %vm3621 = vmor %vm3619, %vm3620
    %v3622 = vsel %vm3621, %v3613, %v3618
    %v3623 = vmul.f32 %v3591, %v3612
    %v3624 = vmul.f32 %v3592, %v3622
    %v3626 = vperm.slane %v3582, 0
    %v3628 = vmul.f32 %v3623, %v3626
    %v3629 = vmul.f32 %v3624, %v3626
    %v3631 = vperm.slane %v3584, 0
    %v3633 = vadd.f32 %v3628, %v3631
    %v3634 = vadd.f32 %v3629, %v3631
    %v3635 = vpack.c.bf16 %v3634, %v3633
    %s3636 = scalar_lea.vmem [#allocation6], 128
    %v3637 = vld [vmem:[%s3636] sm:$0xff]
    %v3638 = vld [vmem:[%s3636 + $0x8] sm:$0xff]
    %v3639 = vld [vmem:[%s3636 + $0x10] sm:$0xff]
    %v3640 = vld [vmem:[%s3636 + $0x18] sm:$0xff]
    %v3641 = vld [vmem:[%s3636 + $0x20] sm:$0xff]
    %v3642 = vld [vmem:[%s3636 + $0x28] sm:$0xff]
    %v3643 = vld [vmem:[%s3636 + $0x30] sm:$0xff]
    %v3644 = vld [vmem:[%s3636 + $0x38] sm:$0xff]
    %v3645 = vld [vmem:[%s3636 + $0x40] sm:$0xff]
    %v3646 = vld [vmem:[%s3636 + $0x48] sm:$0xff]
    %v3647 = vld [vmem:[%s3636 + $0x50] sm:$0xff]
    %v3648 = vld [vmem:[%s3636 + $0x58] sm:$0xff]
    %v3649 = vld [vmem:[%s3636 + $0x60] sm:$0xff]
    %v3650 = vld [vmem:[%s3636 + $0x68] sm:$0xff]
    %v3651 = vld [vmem:[%s3636 + $0x70] sm:$0xff]
    %v3652 = vld [vmem:[%s3636 + $0x78] sm:$0xff]
    %s3653 = scalar_lea.vmem %s11, 2
    %v3654 = vld [vmem:[%s3653] sm:$0x3]
    %v3656 = vperm.slane %v3654, 0
    %v3657 = vperm.slane %v3654, 1
    %v3676 = vunpack.c.l.b16 %v3637
    %v3677 = vunpack.c.h.b16 %v3637
    %v3678 = vunpack.c.l.b16 %v3638
    %v3679 = vunpack.c.h.b16 %v3638
    %v3680 = vunpack.c.l.b16 %v3639
    %v3681 = vunpack.c.h.b16 %v3639
    %v3682 = vunpack.c.l.b16 %v3640
    %v3683 = vunpack.c.h.b16 %v3640
    %v3684 = vunpack.c.l.b16 %v3641
    %v3685 = vunpack.c.h.b16 %v3641
    %v3686 = vunpack.c.l.b16 %v3642
    %v3687 = vunpack.c.h.b16 %v3642
    %v3688 = vunpack.c.l.b16 %v3643
    %v3689 = vunpack.c.h.b16 %v3643
    %v3690 = vunpack.c.l.b16 %v3644
    %v3691 = vunpack.c.h.b16 %v3644
    %v3692 = vunpack.c.l.b16 %v3645
    %v3693 = vunpack.c.h.b16 %v3645
    %v3694 = vunpack.c.l.b16 %v3646
    %v3695 = vunpack.c.h.b16 %v3646
    %v3696 = vunpack.c.l.b16 %v3647
    %v3697 = vunpack.c.h.b16 %v3647
    %v3698 = vunpack.c.l.b16 %v3648
    %v3699 = vunpack.c.h.b16 %v3648
    %v3700 = vunpack.c.l.b16 %v3649
    %v3701 = vunpack.c.h.b16 %v3649
    %v3702 = vunpack.c.l.b16 %v3650
    %v3703 = vunpack.c.h.b16 %v3650
    %v3704 = vunpack.c.l.b16 %v3651
    %v3705 = vunpack.c.h.b16 %v3651
    %v3706 = vunpack.c.l.b16 %v3652
    %v3707 = vunpack.c.h.b16 %v3652
    %v3708 = vpack.c.b16 %v3678, %v3676
    %v3709 = vpack.c.b16 %v3679, %v3677
    %v3710 = vpack.c.b16 %v3682, %v3680
    %v3711 = vpack.c.b16 %v3683, %v3681
    %v3712 = vpack.c.b16 %v3686, %v3684
    %v3713 = vpack.c.b16 %v3687, %v3685
    %v3714 = vpack.c.b16 %v3690, %v3688
    %v3715 = vpack.c.b16 %v3691, %v3689
    %v3716 = vpack.c.b16 %v3694, %v3692
    %v3717 = vpack.c.b16 %v3695, %v3693
    %v3718 = vpack.c.b16 %v3698, %v3696
    %v3719 = vpack.c.b16 %v3699, %v3697
    %v3720 = vpack.c.b16 %v3702, %v3700
    %v3721 = vpack.c.b16 %v3703, %v3701
    %v3722 = vpack.c.b16 %v3706, %v3704
    %v3723 = vpack.c.b16 %v3707, %v3705
    %3740 = vmatpush.bf16.msra.mxu0 %v3722
    %3741 = vmatpush.bf16.msra.mxu0 %v3720
    %3742 = vmatpush.bf16.msra.mxu0 %v3718
    %3743 = vmatpush.bf16.msra.mxu0 %v3716
    %3744 = vmatpush.bf16.msra.mxu0 %v3714
    %3745 = vmatpush.bf16.msra.mxu0 %v3712
    %3746 = vmatpush.bf16.msra.mxu0 %v3710
    %3747 = vmatpush.bf16.msra.mxu0 %v3708
    %3748 = vmatmul.bf16.gmra.mxu0 %v3635
    %v3749 = vpop.f32.mrf.mxu0
    %v3750 = vadd.f32 %v3656, %v3749
    %v3751 = vpop.f32.mrf.mxu0
    %v3752 = vadd.f32 %v3656, %v3751
    %3753 = vdwg.mxu0
    %3754 = vmatpush.bf16.msra.mxu0 %v3723
    %3755 = vmatpush.bf16.msra.mxu0 %v3721
    %3756 = vmatpush.bf16.msra.mxu0 %v3719
    %3757 = vmatpush.bf16.msra.mxu0 %v3717
    %3758 = vmatpush.bf16.msra.mxu0 %v3715
    %3759 = vmatpush.bf16.msra.mxu0 %v3713
    %3760 = vmatpush.bf16.msra.mxu0 %v3711
    %3761 = vmatpush.bf16.msra.mxu0 %v3709
    %3762 = vmatmul.bf16.gmra.mxu0 %v3635
    %v3763 = vpop.f32.mrf.mxu0
    %v3764 = vadd.f32 %v3657, %v3763
    %v3765 = vpop.f32.mrf.mxu0
    %v3766 = vadd.f32 %v3657, %v3765
    %3767 = vdwg.mxu0
    %v3768 = vmul.f32 %v3750, %v3750
    %v3769 = vmul.f32 %v3764, %v3764
    %v3770 = vmul.f32 %v3752, %v3752
    %v3771 = vmul.f32 %v3766, %v3766
    %v3772 = vmul.f32 %v3750, %v3768
    %v3773 = vmul.f32 %v3764, %v3769
    %v3774 = vmul.f32 %v3752, %v3770
    %v3775 = vmul.f32 %v3766, %v3771
    %v3776 = vmul.f32 %v3772, 0.044715
    %v3777 = vmul.f32 %v3773, 0.044715
    %v3778 = vmul.f32 %v3774, 0.044715
    %v3779 = vmul.f32 %v3775, 0.044715
    %v3780 = vadd.f32 %v3750, %v3776
    %v3781 = vadd.f32 %v3764, %v3777
    %v3782 = vadd.f32 %v3752, %v3778
    %v3783 = vadd.f32 %v3766, %v3779
    %v3784 = vmul.f32 %v3780, 0.7978846
    %v3785 = vmul.f32 %v3781, 0.7978846
    %v3786 = vmul.f32 %v3782, 0.7978846
    %v3787 = vmul.f32 %v3783, 0.7978846
    %v3788 = vtanh.pop %v3784
    %v3789 = vtanh.pop %v3785
    %v3790 = vtanh.pop %v3786
    %v3791 = vtanh.pop %v3787
    %v3792 = vadd.f32 %v3788, 1.0
    %v3793 = vadd.f32 %v3789, 1.0
    %v3794 = vadd.f32 %v3790, 1.0
    %v3795 = vadd.f32 %v3791, 1.0
    %v3796 = vmul.f32 %v3792, 0.5
    %v3797 = vmul.f32 %v3793, 0.5
    %v3798 = vmul.f32 %v3794, 0.5
    %v3799 = vmul.f32 %v3795, 0.5
    %v3800 = vmul.f32 %v3750, %v3796
    %v3801 = vmul.f32 %v3764, %v3797
    %v3802 = vmul.f32 %v3752, %v3798
    %v3803 = vmul.f32 %v3766, %v3799
    %v3804 = vpack.c.bf16 %v3802, %v3800
    %v3805 = vpack.c.bf16 %v3803, %v3801
    %s3806 = scalar_lea.vmem [#allocation7], 128
    %v3807 = vld [vmem:[%s3806] sm:$0xf]
    %v3808 = vld [vmem:[%s3806 + $0x4] sm:$0xf]
    %v3809 = vld [vmem:[%s3806 + $0x8] sm:$0xf]
    %v3810 = vld [vmem:[%s3806 + $0xc] sm:$0xf]
    %v3811 = vld [vmem:[%s3806 + $0x10] sm:$0xf]
    %v3812 = vld [vmem:[%s3806 + $0x14] sm:$0xf]
    %v3813 = vld [vmem:[%s3806 + $0x18] sm:$0xf]
    %v3814 = vld [vmem:[%s3806 + $0x1c] sm:$0xf]
    %v3815 = vld [vmem:[%s3806 + $0x20] sm:$0xf]
    %v3816 = vld [vmem:[%s3806 + $0x24] sm:$0xf]
    %v3817 = vld [vmem:[%s3806 + $0x28] sm:$0xf]
    %v3818 = vld [vmem:[%s3806 + $0x2c] sm:$0xf]
    %v3819 = vld [vmem:[%s3806 + $0x30] sm:$0xf]
    %v3820 = vld [vmem:[%s3806 + $0x34] sm:$0xf]
    %v3821 = vld [vmem:[%s3806 + $0x38] sm:$0xf]
    %v3822 = vld [vmem:[%s3806 + $0x3c] sm:$0xf]
    %v3823 = vld [vmem:[%s3806 + $0x40] sm:$0xf]
    %v3824 = vld [vmem:[%s3806 + $0x44] sm:$0xf]
    %v3825 = vld [vmem:[%s3806 + $0x48] sm:$0xf]
    %v3826 = vld [vmem:[%s3806 + $0x4c] sm:$0xf]
    %v3827 = vld [vmem:[%s3806 + $0x50] sm:$0xf]
    %v3828 = vld [vmem:[%s3806 + $0x54] sm:$0xf]
    %v3829 = vld [vmem:[%s3806 + $0x58] sm:$0xf]
    %v3830 = vld [vmem:[%s3806 + $0x5c] sm:$0xf]
    %v3831 = vld [vmem:[%s3806 + $0x60] sm:$0xf]
    %v3832 = vld [vmem:[%s3806 + $0x64] sm:$0xf]
    %v3833 = vld [vmem:[%s3806 + $0x68] sm:$0xf]
    %v3834 = vld [vmem:[%s3806 + $0x6c] sm:$0xf]
    %v3835 = vld [vmem:[%s3806 + $0x70] sm:$0xf]
    %v3836 = vld [vmem:[%s3806 + $0x74] sm:$0xf]
    %v3837 = vld [vmem:[%s3806 + $0x78] sm:$0xf]
    %v3838 = vld [vmem:[%s3806 + $0x7c] sm:$0xf]
    %s3839 = scalar_lea.vmem %s13, 1
    %v3840 = vld [vmem:[%s3839] sm:$0x1]
    %v3842 = vperm.slane %v3840, 0
    %v3876 = vunpack.c.l.b16 %v3807
    %v3877 = vunpack.c.l.b16 %v3808
    %v3878 = vunpack.c.l.b16 %v3809
    %v3879 = vunpack.c.l.b16 %v3810
    %v3880 = vunpack.c.l.b16 %v3811
    %v3881 = vunpack.c.l.b16 %v3812
    %v3882 = vunpack.c.l.b16 %v3813
    %v3883 = vunpack.c.l.b16 %v3814
    %v3884 = vunpack.c.l.b16 %v3815
    %v3885 = vunpack.c.l.b16 %v3816
    %v3886 = vunpack.c.l.b16 %v3817
    %v3887 = vunpack.c.l.b16 %v3818
    %v3888 = vunpack.c.l.b16 %v3819
    %v3889 = vunpack.c.l.b16 %v3820
    %v3890 = vunpack.c.l.b16 %v3821
    %v3891 = vunpack.c.l.b16 %v3822
    %v3892 = vunpack.c.l.b16 %v3823
    %v3893 = vunpack.c.l.b16 %v3824
    %v3894 = vunpack.c.l.b16 %v3825
    %v3895 = vunpack.c.l.b16 %v3826
    %v3896 = vunpack.c.l.b16 %v3827
    %v3897 = vunpack.c.l.b16 %v3828
    %v3898 = vunpack.c.l.b16 %v3829
    %v3899 = vunpack.c.l.b16 %v3830
    %v3900 = vunpack.c.l.b16 %v3831
    %v3901 = vunpack.c.l.b16 %v3832
    %v3902 = vunpack.c.l.b16 %v3833
    %v3903 = vunpack.c.l.b16 %v3834
    %v3904 = vunpack.c.l.b16 %v3835
    %v3905 = vunpack.c.l.b16 %v3836
    %v3906 = vunpack.c.l.b16 %v3837
    %v3907 = vunpack.c.l.b16 %v3838
    %v3908 = vpack.c.b16 %v3877, %v3876
    %v3909 = vpack.c.b16 %v3879, %v3878
    %v3910 = vpack.c.b16 %v3881, %v3880
    %v3911 = vpack.c.b16 %v3883, %v3882
    %v3912 = vpack.c.b16 %v3885, %v3884
    %v3913 = vpack.c.b16 %v3887, %v3886
    %v3914 = vpack.c.b16 %v3889, %v3888
    %v3915 = vpack.c.b16 %v3891, %v3890
    %v3916 = vpack.c.b16 %v3893, %v3892
    %v3917 = vpack.c.b16 %v3895, %v3894
    %v3918 = vpack.c.b16 %v3897, %v3896
    %v3919 = vpack.c.b16 %v3899, %v3898
    %v3920 = vpack.c.b16 %v3901, %v3900
    %v3921 = vpack.c.b16 %v3903, %v3902
    %v3922 = vpack.c.b16 %v3905, %v3904
    %v3923 = vpack.c.b16 %v3907, %v3906
    %3940 = vmatpush.bf16.msra.mxu0 %v3915
    %3941 = vmatpush.bf16.msra.mxu0 %v3914
    %3942 = vmatpush.bf16.msra.mxu0 %v3913
    %3943 = vmatpush.bf16.msra.mxu0 %v3912
    %3944 = vmatpush.bf16.msra.mxu0 %v3911
    %3945 = vmatpush.bf16.msra.mxu0 %v3910
    %3946 = vmatpush.bf16.msra.mxu0 %v3909
    %3947 = vmatpush.bf16.msra.mxu0 %v3908
    %3948 = vmatmul.bf16.gmra.mxu0 %v3804
    %v3949 = vpop.f32.mrf.mxu0
    %v3950 = vadd.f32 %v3842, %v3949
    %v3951 = vpop.f32.mrf.mxu0
    %v3952 = vadd.f32 %v3842, %v3951
    %3953 = vdwg.mxu0
    %3954 = vmatpush.bf16.msra.mxu0 %v3923
    %3955 = vmatpush.bf16.msra.mxu0 %v3922
    %3956 = vmatpush.bf16.msra.mxu0 %v3921
    %3957 = vmatpush.bf16.msra.mxu0 %v3920
    %3958 = vmatpush.bf16.msra.mxu0 %v3919
    %3959 = vmatpush.bf16.msra.mxu0 %v3918
    %3960 = vmatpush.bf16.msra.mxu0 %v3917
    %3961 = vmatpush.bf16.msra.mxu0 %v3916
    %3962 = vmatmul.bf16.gmra.mxu0 %v3805
    %v3963 = vpop.f32.mrf.mxu0
    %v3964 = vadd.f32 %v3950, %v3963
    %v3965 = vpop.f32.mrf.mxu0
    %v3966 = vadd.f32 %v3952, %v3965
    %3967 = vdwg.mxu0
    %v3968 = vadd.f32 %v3964, %v3633
    %v3969 = vadd.f32 %v3966, %v3634
    %s3970 = scalar_lea.vmem %s14, 1
    %v3971 = vld [vmem:[%s3970] sm:$0x1]
    %s3972 = scalar_lea.vmem %s15, 1
    %v3973 = vld [vmem:[%s3972] sm:$0x1]
    %3974 = vadd.xlane.f32.xlu0 %v3968
    %v3975 = vpop.xlane.xlu0 %3974
    %3976 = vadd.xlane.f32.xlu0 %v3969
    %v3977 = vpop.xlane.xlu0 %3976
    %v3978 = vmul.f32 %v3975, %v177
    %v3979 = vmul.f32 %v3977, %v177
    %v3980 = vsub.f32 %v3968, %v3978
    %v3981 = vsub.f32 %v3969, %v3979
    %v3982 = vmul.f32 %v3980, %v3980
    %v3983 = vmul.f32 %v3981, %v3981
    %3984 = vadd.xlane.f32.xlu0 %v3982
    %v3985 = vpop.xlane.xlu0 %3984
    %3986 = vadd.xlane.f32.xlu0 %v3983
    %v3987 = vpop.xlane.xlu0 %3986
    %v3988 = vmul.f32 %v3985, %v177
    %v3989 = vmul.f32 %v3987, %v177
    %v3990 = vadd.f32 %v3988, 1e-12
    %v3991 = vadd.f32 %v3989, 1e-12
    %v3992 = vrsqrt.pop %v3990
    %v3993 = vmul.f32 %v3992, %v3990
    %v3994 = vmul.f32 %v3993, %v3992
    %v3995 = vmul.f32 0.5, %v3994
    %v3996 = vsub.f32 1.5, %v3995
    %v3997 = vmul.f32 %v3992, %v3996
    %vm3998 = vweird.f32 %v3990
    %vm3999 = vweird.f32 %v3992
    %vm4000 = vmor %vm3998, %vm3999
    %v4001 = vsel %vm4000, %v3992, %v3997
    %v4002 = vrsqrt.pop %v3991
    %v4003 = vmul.f32 %v4002, %v3991
    %v4004 = vmul.f32 %v4003, %v4002
    %v4005 = vmul.f32 0.5, %v4004
    %v4006 = vsub.f32 1.5, %v4005
    %v4007 = vmul.f32 %v4002, %v4006
    %vm4008 = vweird.f32 %v3991
    %vm4009 = vweird.f32 %v4002
    %vm4010 = vmor %vm4008, %vm4009
    %v4011 = vsel %vm4010, %v4002, %v4007
    %v4012 = vmul.f32 %v3980, %v4001
    %v4013 = vmul.f32 %v3981, %v4011
    %v4015 = vperm.slane %v3971, 0
    %v4017 = vmul.f32 %v4012, %v4015
    %v4018 = vmul.f32 %v4013, %v4015
    %v4020 = vperm.slane %v3973, 0
    %v4022 = vadd.f32 %v4017, %v4020
    %v4023 = vadd.f32 %v4018, %v4020
    %v4024 = vpack.c.bf16 %v4023, %v4022
    %s4025 = scalar_lea.vmem [#allocation2], 576
    %v4026 = vld [vmem:[%s4025] sm:$0xff]
    %v4027 = vld [vmem:[%s4025 + $0x8] sm:$0xf]
    %v4028 = vld [vmem:[%s4025 + $0xc] sm:$0xff]
    %v4029 = vld [vmem:[%s4025 + $0x14] sm:$0xf]
    %v4030 = vld [vmem:[%s4025 + $0x18] sm:$0xff]
    %v4031 = vld [vmem:[%s4025 + $0x20] sm:$0xf]
    %v4032 = vld [vmem:[%s4025 + $0x24] sm:$0xff]
    %v4033 = vld [vmem:[%s4025 + $0x2c] sm:$0xf]
    %v4034 = vld [vmem:[%s4025 + $0x30] sm:$0xff]
    %v4035 = vld [vmem:[%s4025 + $0x38] sm:$0xf]
    %v4036 = vld [vmem:[%s4025 + $0x3c] sm:$0xff]
    %v4037 = vld [vmem:[%s4025 + $0x44] sm:$0xf]
    %v4038 = vld [vmem:[%s4025 + $0x48] sm:$0xff]
    %v4039 = vld [vmem:[%s4025 + $0x50] sm:$0xf]
    %v4040 = vld [vmem:[%s4025 + $0x54] sm:$0xff]
    %v4041 = vld [vmem:[%s4025 + $0x5c] sm:$0xf]
    %v4042 = vld [vmem:[%s4025 + $0x60] sm:$0xff]
    %v4043 = vld [vmem:[%s4025 + $0x68] sm:$0xf]
    %v4044 = vld [vmem:[%s4025 + $0x6c] sm:$0xff]
    %v4045 = vld [vmem:[%s4025 + $0x74] sm:$0xf]
    %v4046 = vld [vmem:[%s4025 + $0x78] sm:$0xff]
    %v4047 = vld [vmem:[%s4025 + $0x80] sm:$0xf]
    %v4048 = vld [vmem:[%s4025 + $0x84] sm:$0xff]
    %v4049 = vld [vmem:[%s4025 + $0x8c] sm:$0xf]
    %v4050 = vld [vmem:[%s4025 + $0x90] sm:$0xff]
    %v4051 = vld [vmem:[%s4025 + $0x98] sm:$0xf]
    %v4052 = vld [vmem:[%s4025 + $0x9c] sm:$0xff]
    %v4053 = vld [vmem:[%s4025 + $0xa4] sm:$0xf]
    %v4054 = vld [vmem:[%s4025 + $0xa8] sm:$0xff]
    %v4055 = vld [vmem:[%s4025 + $0xb0] sm:$0xf]
    %v4056 = vld [vmem:[%s4025 + $0xb4] sm:$0xff]
    %v4057 = vld [vmem:[%s4025 + $0xbc] sm:$0xf]
    %s4058 = scalar_lea.vmem %s5, 9
    %v4059 = vld [vmem:[%s4058] sm:$0x7]
    %v4061 = vperm.slane %v4059, 0
    %v4062 = vperm.slane %v4059, 1
    %v4063 = vperm.slane %v4059, 2
    %v4099 = vunpack.c.l.b16 %v4026
    %v4100 = vunpack.c.h.b16 %v4026
    %v4101 = vunpack.c.l.b16 %v4027
    %v4102 = vunpack.c.l.b16 %v4028
    %v4103 = vunpack.c.h.b16 %v4028
    %v4104 = vunpack.c.l.b16 %v4029
    %v4105 = vunpack.c.l.b16 %v4030
    %v4106 = vunpack.c.h.b16 %v4030
    %v4107 = vunpack.c.l.b16 %v4031
    %v4108 = vunpack.c.l.b16 %v4032
    %v4109 = vunpack.c.h.b16 %v4032
    %v4110 = vunpack.c.l.b16 %v4033
    %v4111 = vunpack.c.l.b16 %v4034
    %v4112 = vunpack.c.h.b16 %v4034
    %v4113 = vunpack.c.l.b16 %v4035
    %v4114 = vunpack.c.l.b16 %v4036
    %v4115 = vunpack.c.h.b16 %v4036
    %v4116 = vunpack.c.l.b16 %v4037
    %v4117 = vunpack.c.l.b16 %v4038
    %v4118 = vunpack.c.h.b16 %v4038
    %v4119 = vunpack.c.l.b16 %v4039
    %v4120 = vunpack.c.l.b16 %v4040
    %v4121 = vunpack.c.h.b16 %v4040
    %v4122 = vunpack.c.l.b16 %v4041
    %v4123 = vunpack.c.l.b16 %v4042
    %v4124 = vunpack.c.h.b16 %v4042
    %v4125 = vunpack.c.l.b16 %v4043
    %v4126 = vunpack.c.l.b16 %v4044
    %v4127 = vunpack.c.h.b16 %v4044
    %v4128 = vunpack.c.l.b16 %v4045
    %v4129 = vunpack.c.l.b16 %v4046
    %v4130 = vunpack.c.h.b16 %v4046
    %v4131 = vunpack.c.l.b16 %v4047
    %v4132 = vunpack.c.l.b16 %v4048
    %v4133 = vunpack.c.h.b16 %v4048
    %v4134 = vunpack.c.l.b16 %v4049
    %v4135 = vunpack.c.l.b16 %v4050
    %v4136 = vunpack.c.h.b16 %v4050
    %v4137 = vunpack.c.l.b16 %v4051
    %v4138 = vunpack.c.l.b16 %v4052
    %v4139 = vunpack.c.h.b16 %v4052
    %v4140 = vunpack.c.l.b16 %v4053
    %v4141 = vunpack.c.l.b16 %v4054
    %v4142 = vunpack.c.h.b16 %v4054
    %v4143 = vunpack.c.l.b16 %v4055
    %v4144 = vunpack.c.l.b16 %v4056
    %v4145 = vunpack.c.h.b16 %v4056
    %v4146 = vunpack.c.l.b16 %v4057
    %v4147 = vpack.c.b16 %v4102, %v4099
    %v4148 = vpack.c.b16 %v4103, %v4100
    %v4149 = vpack.c.b16 %v4104, %v4101
    %v4150 = vpack.c.b16 %v4108, %v4105
    %v4151 = vpack.c.b16 %v4109, %v4106
    %v4152 = vpack.c.b16 %v4110, %v4107
    %v4153 = vpack.c.b16 %v4114, %v4111
    %v4154 = vpack.c.b16 %v4115, %v4112
    %v4155 = vpack.c.b16 %v4116, %v4113
    %v4156 = vpack.c.b16 %v4120, %v4117
    %v4157 = vpack.c.b16 %v4121, %v4118
    %v4158 = vpack.c.b16 %v4122, %v4119
    %v4159 = vpack.c.b16 %v4126, %v4123
    %v4160 = vpack.c.b16 %v4127, %v4124
    %v4161 = vpack.c.b16 %v4128, %v4125
    %v4162 = vpack.c.b16 %v4132, %v4129
    %v4163 = vpack.c.b16 %v4133, %v4130
    %v4164 = vpack.c.b16 %v4134, %v4131
    %v4165 = vpack.c.b16 %v4138, %v4135
    %v4166 = vpack.c.b16 %v4139, %v4136
    %v4167 = vpack.c.b16 %v4140, %v4137
    %v4168 = vpack.c.b16 %v4144, %v4141
    %v4169 = vpack.c.b16 %v4145, %v4142
    %v4170 = vpack.c.b16 %v4146, %v4143
    %4195 = vmatpush.bf16.msra.mxu0 %v4168
    %4196 = vmatpush.bf16.msra.mxu0 %v4165
    %4197 = vmatpush.bf16.msra.mxu0 %v4162
    %4198 = vmatpush.bf16.msra.mxu0 %v4159
    %4199 = vmatpush.bf16.msra.mxu0 %v4156
    %4200 = vmatpush.bf16.msra.mxu0 %v4153
    %4201 = vmatpush.bf16.msra.mxu0 %v4150
    %4202 = vmatpush.bf16.msra.mxu0 %v4147
    %4203 = vmatmul.bf16.gmra.mxu0 %v4024
    %v4204 = vpop.f32.mrf.mxu0
    %v4205 = vadd.f32 %v4061, %v4204
    %v4206 = vpop.f32.mrf.mxu0
    %v4207 = vadd.f32 %v4061, %v4206
    %4208 = vdwg.mxu0
    %4209 = vmatpush.bf16.msra.mxu0 %v4169
    %4210 = vmatpush.bf16.msra.mxu0 %v4166
    %4211 = vmatpush.bf16.msra.mxu0 %v4163
    %4212 = vmatpush.bf16.msra.mxu0 %v4160
    %4213 = vmatpush.bf16.msra.mxu0 %v4157
    %4214 = vmatpush.bf16.msra.mxu0 %v4154
    %4215 = vmatpush.bf16.msra.mxu0 %v4151
    %4216 = vmatpush.bf16.msra.mxu0 %v4148
    %4217 = vmatmul.bf16.gmra.mxu0 %v4024
    %v4218 = vpop.f32.mrf.mxu0
    %v4219 = vadd.f32 %v4062, %v4218
    %v4220 = vpop.f32.mrf.mxu0
    %v4221 = vadd.f32 %v4062, %v4220
    %4222 = vdwg.mxu0
    %4223 = vmatpush.bf16.msra.mxu0 %v4170
    %4224 = vmatpush.bf16.msra.mxu0 %v4167
    %4225 = vmatpush.bf16.msra.mxu0 %v4164
    %4226 = vmatpush.bf16.msra.mxu0 %v4161
    %4227 = vmatpush.bf16.msra.mxu0 %v4158
    %4228 = vmatpush.bf16.msra.mxu0 %v4155
    %4229 = vmatpush.bf16.msra.mxu0 %v4152
    %4230 = vmatpush.bf16.msra.mxu0 %v4149
    %4231 = vmatmul.bf16.gmra.mxu0 %v4024
    %v4232 = vpop.f32.mrf.mxu0
    %v4233 = vadd.f32 %v4063, %v4232
    %v4234 = vpop.f32.mrf.mxu0
    %v4235 = vadd.f32 %v4063, %v4234
    %4236 = vdwg.mxu0
    %v4237 = vpack.c.bf16 %v4219, %v4205
    %v4238 = vpack.c.bf16 %v4233, %v4233
    %v4239 = vpack.c.bf16 %v4221, %v4207
    %v4240 = vpack.c.bf16 %v4235, %v4235
    %4243 = vrot.lane.b32.xlu0 %v4237, 96
    %v4244 = vpop.permute.xlu0 %4243
    %4245 = vrot.lane.b32.xlu0 %v4239, 96
    %v4246 = vpop.permute.xlu0 %4245
    %4247 = vrot.lane.b32.xlu0 %v4237, 64
    %v4248 = vpop.permute.xlu0 %4247
    %4249 = vrot.lane.b32.xlu0 %v4239, 64
    %v4250 = vpop.permute.xlu0 %4249
    %4251 = vrot.lane.b32.xlu0 %v4237, 32
    %v4252 = vpop.permute.xlu0 %4251
    %4253 = vrot.lane.b32.xlu0 %v4239, 32
    %v4254 = vpop.permute.xlu0 %4253
    %v4255 = vrot.slane %v4237, 4
    %v4256 = vrot.slane %v4239, 4
    %v4257 = vrot.slane %v4244, 4
    %v4258 = vrot.slane %v4246, 4
    %v4259 = vrot.slane %v4248, 4
    %v4260 = vrot.slane %v4250, 4
    %v4261 = vrot.slane %v4252, 4
    %v4262 = vrot.slane %v4254, 4
    %4265 = vrot.lane.b32.xlu0 %v4238, 96
    %v4266 = vpop.permute.xlu0 %4265
    %4267 = vrot.lane.b32.xlu0 %v4240, 96
    %v4268 = vpop.permute.xlu0 %4267
    %4269 = vrot.lane.b32.xlu0 %v4238, 64
    %v4270 = vpop.permute.xlu0 %4269
    %4271 = vrot.lane.b32.xlu0 %v4240, 64
    %v4272 = vpop.permute.xlu0 %4271
    %4273 = vrot.lane.b32.xlu0 %v4238, 32
    %v4274 = vpop.permute.xlu0 %4273
    %4275 = vrot.lane.b32.xlu0 %v4240, 32
    %v4276 = vpop.permute.xlu0 %4275
    %v4278 = vsel %vm499, %v4237, 0
    %v4281 = vsel %vm499, %v4255, 0
    %4283 = vmatpush.bf16.xpose.msra.mxu0 0
    %4284 = vmatpush.bf16.xpose.msra.mxu0 0
    %4285 = vmatpush.bf16.xpose.msra.mxu0 0
    %4286 = vmatpush.bf16.xpose.msra.mxu0 0
    %4287 = vmatpush.bf16.xpose.msra.mxu0 0
    %4288 = vmatpush.bf16.xpose.msra.mxu0 0
    %4289 = vmatpush.bf16.xpose.msra.mxu0 0
    %4290 = vmatpush.bf16.xpose.msra.mxu0 %v4281
    %4291 = vmatmul.bf16.gmra.mxu0 %v4278
    %v4292 = vpop.f32.mrf.mxu0
    %v4293 = vadd.f32 %v483, %v4292
    %v4294 = vpop.f32.mrf.mxu0
    %4295 = vdwg.mxu0
    %v4297 = vsel %vm499, %v4239, 0
    %v4300 = vsel %vm499, %v4256, 0
    %4302 = vmatpush.bf16.xpose.msra.mxu0 0
    %4303 = vmatpush.bf16.xpose.msra.mxu0 0
    %4304 = vmatpush.bf16.xpose.msra.mxu0 0
    %4305 = vmatpush.bf16.xpose.msra.mxu0 0
    %4306 = vmatpush.bf16.xpose.msra.mxu0 0
    %4307 = vmatpush.bf16.xpose.msra.mxu0 0
    %4308 = vmatpush.bf16.xpose.msra.mxu0 0
    %4309 = vmatpush.bf16.xpose.msra.mxu0 %v4300
    %4310 = vmatmul.bf16.gmra.mxu0 %v4297
    %v4311 = vpop.f32.mrf.mxu0
    %v4312 = vadd.f32 %v484, %v4311
    %v4313 = vpop.f32.mrf.mxu0
    %4314 = vdwg.mxu0
    %v4316 = vsel %vm499, %v4244, 0
    %v4319 = vsel %vm499, %v4257, 0
    %4321 = vmatpush.bf16.xpose.msra.mxu0 0
    %4322 = vmatpush.bf16.xpose.msra.mxu0 0
    %4323 = vmatpush.bf16.xpose.msra.mxu0 0
    %4324 = vmatpush.bf16.xpose.msra.mxu0 0
    %4325 = vmatpush.bf16.xpose.msra.mxu0 0
    %4326 = vmatpush.bf16.xpose.msra.mxu0 0
    %4327 = vmatpush.bf16.xpose.msra.mxu0 0
    %4328 = vmatpush.bf16.xpose.msra.mxu0 %v4319
    %4329 = vmatmul.bf16.gmra.mxu0 %v4316
    %v4330 = vpop.f32.mrf.mxu0
    %v4331 = vadd.f32 %v485, %v4330
    %v4332 = vpop.f32.mrf.mxu0
    %4333 = vdwg.mxu0
    %v4335 = vsel %vm499, %v4246, 0
    %v4338 = vsel %vm499, %v4258, 0
    %4340 = vmatpush.bf16.xpose.msra.mxu0 0
    %4341 = vmatpush.bf16.xpose.msra.mxu0 0
    %4342 = vmatpush.bf16.xpose.msra.mxu0 0
    %4343 = vmatpush.bf16.xpose.msra.mxu0 0
    %4344 = vmatpush.bf16.xpose.msra.mxu0 0
    %4345 = vmatpush.bf16.xpose.msra.mxu0 0
    %4346 = vmatpush.bf16.xpose.msra.mxu0 0
    %4347 = vmatpush.bf16.xpose.msra.mxu0 %v4338
    %4348 = vmatmul.bf16.gmra.mxu0 %v4335
    %v4349 = vpop.f32.mrf.mxu0
    %v4350 = vadd.f32 %v486, %v4349
    %v4351 = vpop.f32.mrf.mxu0
    %4352 = vdwg.mxu0
    %v4354 = vsel %vm499, %v4248, 0
    %v4357 = vsel %vm499, %v4259, 0
    %4359 = vmatpush.bf16.xpose.msra.mxu0 0
    %4360 = vmatpush.bf16.xpose.msra.mxu0 0
    %4361 = vmatpush.bf16.xpose.msra.mxu0 0
    %4362 = vmatpush.bf16.xpose.msra.mxu0 0
    %4363 = vmatpush.bf16.xpose.msra.mxu0 0
    %4364 = vmatpush.bf16.xpose.msra.mxu0 0
    %4365 = vmatpush.bf16.xpose.msra.mxu0 0
    %4366 = vmatpush.bf16.xpose.msra.mxu0 %v4357
    %4367 = vmatmul.bf16.gmra.mxu0 %v4354
    %v4368 = vpop.f32.mrf.mxu0
    %v4369 = vadd.f32 %v487, %v4368
    %v4370 = vpop.f32.mrf.mxu0
    %4371 = vdwg.mxu0
    %v4373 = vsel %vm499, %v4250, 0
    %v4376 = vsel %vm499, %v4260, 0
    %4378 = vmatpush.bf16.xpose.msra.mxu0 0
    %4379 = vmatpush.bf16.xpose.msra.mxu0 0
    %4380 = vmatpush.bf16.xpose.msra.mxu0 0
    %4381 = vmatpush.bf16.xpose.msra.mxu0 0
    %4382 = vmatpush.bf16.xpose.msra.mxu0 0
    %4383 = vmatpush.bf16.xpose.msra.mxu0 0
    %4384 = vmatpush.bf16.xpose.msra.mxu0 0
    %4385 = vmatpush.bf16.xpose.msra.mxu0 %v4376
    %4386 = vmatmul.bf16.gmra.mxu0 %v4373
    %v4387 = vpop.f32.mrf.mxu0
    %v4388 = vadd.f32 %v488, %v4387
    %v4389 = vpop.f32.mrf.mxu0
    %4390 = vdwg.mxu0
    %v4392 = vsel %vm499, %v4252, 0
    %v4395 = vsel %vm499, %v4261, 0
    %4397 = vmatpush.bf16.xpose.msra.mxu0 0
    %4398 = vmatpush.bf16.xpose.msra.mxu0 0
    %4399 = vmatpush.bf16.xpose.msra.mxu0 0
    %4400 = vmatpush.bf16.xpose.msra.mxu0 0
    %4401 = vmatpush.bf16.xpose.msra.mxu0 0
    %4402 = vmatpush.bf16.xpose.msra.mxu0 0
    %4403 = vmatpush.bf16.xpose.msra.mxu0 0
    %4404 = vmatpush.bf16.xpose.msra.mxu0 %v4395
    %4405 = vmatmul.bf16.gmra.mxu0 %v4392
    %v4406 = vpop.f32.mrf.mxu0
    %v4407 = vadd.f32 %v489, %v4406
    %v4408 = vpop.f32.mrf.mxu0
    %4409 = vdwg.mxu0
    %v4411 = vsel %vm499, %v4254, 0
    %v4414 = vsel %vm499, %v4262, 0
    %4416 = vmatpush.bf16.xpose.msra.mxu0 0
    %4417 = vmatpush.bf16.xpose.msra.mxu0 0
    %4418 = vmatpush.bf16.xpose.msra.mxu0 0
    %4419 = vmatpush.bf16.xpose.msra.mxu0 0
    %4420 = vmatpush.bf16.xpose.msra.mxu0 0
    %4421 = vmatpush.bf16.xpose.msra.mxu0 0
    %4422 = vmatpush.bf16.xpose.msra.mxu0 0
    %4423 = vmatpush.bf16.xpose.msra.mxu0 %v4414
    %4424 = vmatmul.bf16.gmra.mxu0 %v4411
    %v4425 = vpop.f32.mrf.mxu0
    %v4426 = vadd.f32 %v490, %v4425
    %v4427 = vpop.f32.mrf.mxu0
    %4428 = vdwg.mxu0
    %v4429 = vsel %vm652, %v4293, -inf
    %4430 = vmax.xlane.f32.xlu0 %v4429
    %v4431 = vpop.xlane.xlu0 %4430
    %v4432 = vsel %vm652, %v4312, -inf
    %4433 = vmax.xlane.f32.xlu0 %v4432
    %v4434 = vpop.xlane.xlu0 %4433
    %v4435 = vsel %vm652, %v4331, -inf
    %4436 = vmax.xlane.f32.xlu0 %v4435
    %v4437 = vpop.xlane.xlu0 %4436
    %v4438 = vsel %vm652, %v4350, -inf
    %4439 = vmax.xlane.f32.xlu0 %v4438
    %v4440 = vpop.xlane.xlu0 %4439
    %v4441 = vsel %vm652, %v4369, -inf
    %4442 = vmax.xlane.f32.xlu0 %v4441
    %v4443 = vpop.xlane.xlu0 %4442
    %v4444 = vsel %vm652, %v4388, -inf
    %4445 = vmax.xlane.f32.xlu0 %v4444
    %v4446 = vpop.xlane.xlu0 %4445
    %v4447 = vsel %vm652, %v4407, -inf
    %4448 = vmax.xlane.f32.xlu0 %v4447
    %v4449 = vpop.xlane.xlu0 %4448
    %v4450 = vsel %vm652, %v4426, -inf
    %4451 = vmax.xlane.f32.xlu0 %v4450
    %v4452 = vpop.xlane.xlu0 %4451
    %v4453 = vsub.f32 %v4293, %v4431
    %v4454 = vsub.f32 %v4312, %v4434
    %v4455 = vsub.f32 %v4331, %v4437
    %v4456 = vsub.f32 %v4350, %v4440
    %v4457 = vsub.f32 %v4369, %v4443
    %v4458 = vsub.f32 %v4388, %v4446
    %v4459 = vsub.f32 %v4407, %v4449
    %v4460 = vsub.f32 %v4426, %v4452
    %v4461 = vmul.f32 %v4453, 1.442695
    %v4462 = vpow.pop %v4461
    %v4463 = vmul.f32 %v4454, 1.442695
    %v4464 = vpow.pop %v4463
    %v4465 = vmul.f32 %v4455, 1.442695
    %v4466 = vpow.pop %v4465
    %v4467 = vmul.f32 %v4456, 1.442695
    %v4468 = vpow.pop %v4467
    %v4469 = vmul.f32 %v4457, 1.442695
    %v4470 = vpow.pop %v4469
    %v4471 = vmul.f32 %v4458, 1.442695
    %v4472 = vpow.pop %v4471
    %v4473 = vmul.f32 %v4459, 1.442695
    %v4474 = vpow.pop %v4473
    %v4475 = vmul.f32 %v4460, 1.442695
    %v4476 = vpow.pop %v4475
    %v4477 = vsel %vm652, %v4462, 0.0
    %4478 = vadd.xlane.f32.xlu0 %v4477
    %v4479 = vpop.xlane.xlu0 %4478
    %v4480 = vsel %vm652, %v4464, 0.0
    %4481 = vadd.xlane.f32.xlu0 %v4480
    %v4482 = vpop.xlane.xlu0 %4481
    %v4483 = vsel %vm652, %v4466, 0.0
    %4484 = vadd.xlane.f32.xlu0 %v4483
    %v4485 = vpop.xlane.xlu0 %4484
    %v4486 = vsel %vm652, %v4468, 0.0
    %4487 = vadd.xlane.f32.xlu0 %v4486
    %v4488 = vpop.xlane.xlu0 %4487
    %v4489 = vsel %vm652, %v4470, 0.0
    %4490 = vadd.xlane.f32.xlu0 %v4489
    %v4491 = vpop.xlane.xlu0 %4490
    %v4492 = vsel %vm652, %v4472, 0.0
    %4493 = vadd.xlane.f32.xlu0 %v4492
    %v4494 = vpop.xlane.xlu0 %4493
    %v4495 = vsel %vm652, %v4474, 0.0
    %4496 = vadd.xlane.f32.xlu0 %v4495
    %v4497 = vpop.xlane.xlu0 %4496
    %v4498 = vsel %vm652, %v4476, 0.0
    %4499 = vadd.xlane.f32.xlu0 %v4498
    %v4500 = vpop.xlane.xlu0 %4499
    %v4501 = vrcp.pop %v4479
    %v4502 = vrcp.pop %v4482
    %v4503 = vrcp.pop %v4485
    %v4504 = vrcp.pop %v4488
    %v4505 = vrcp.pop %v4491
    %v4506 = vrcp.pop %v4494
    %v4507 = vrcp.pop %v4497
    %v4508 = vrcp.pop %v4500
    %v4509 = vmul.f32 %v4462, %v4501
    %v4510 = vmul.f32 %v4464, %v4502
    %v4511 = vmul.f32 %v4466, %v4503
    %v4512 = vmul.f32 %v4468, %v4504
    %v4513 = vmul.f32 %v4470, %v4505
    %v4514 = vmul.f32 %v4472, %v4506
    %v4515 = vmul.f32 %v4474, %v4507
    %v4516 = vmul.f32 %v4476, %v4508
    %v4517 = vpack.c.bf16 %v4509, %v4509
    %v4518 = vpack.c.bf16 %v4510, %v4510
    %v4519 = vpack.c.bf16 %v4511, %v4511
    %v4520 = vpack.c.bf16 %v4512, %v4512
    %v4521 = vpack.c.bf16 %v4513, %v4513
    %v4522 = vpack.c.bf16 %v4514, %v4514
    %v4523 = vpack.c.bf16 %v4515, %v4515
    %v4524 = vpack.c.bf16 %v4516, %v4516
    %v4526 = vsel %vm652, %v4517, 0
    %v4529 = vsel %vm159, %v4238, 0
    %4531 = vmatpush.bf16.msra.mxu0 0
    %4532 = vmatpush.bf16.msra.mxu0 0
    %4533 = vmatpush.bf16.msra.mxu0 0
    %4534 = vmatpush.bf16.msra.mxu0 0
    %4535 = vmatpush.bf16.msra.mxu0 0
    %4536 = vmatpush.bf16.msra.mxu0 0
    %4537 = vmatpush.bf16.msra.mxu0 0
    %4538 = vmatpush.bf16.msra.mxu0 %v4529
    %4539 = vmatmul.bf16.gmra.mxu0 %v4526
    %v4540 = vpop.f32.mrf.mxu0
    %v4541 = vadd.f32 0.0, %v4540
    %v4542 = vpop.f32.mrf.mxu0
    %4543 = vdwg.mxu0
    %v4545 = vsel %vm652, %v4518, 0
    %v4548 = vsel %vm159, %v4240, 0
    %4550 = vmatpush.bf16.msra.mxu0 0
    %4551 = vmatpush.bf16.msra.mxu0 0
    %4552 = vmatpush.bf16.msra.mxu0 0
    %4553 = vmatpush.bf16.msra.mxu0 0
    %4554 = vmatpush.bf16.msra.mxu0 0
    %4555 = vmatpush.bf16.msra.mxu0 0
    %4556 = vmatpush.bf16.msra.mxu0 0
    %4557 = vmatpush.bf16.msra.mxu0 %v4548
    %4558 = vmatmul.bf16.gmra.mxu0 %v4545
    %v4559 = vpop.f32.mrf.mxu0
    %v4560 = vadd.f32 0.0, %v4559
    %v4561 = vpop.f32.mrf.mxu0
    %4562 = vdwg.mxu0
    %v4564 = vsel %vm652, %v4519, 0
    %v4567 = vsel %vm159, %v4266, 0
    %4569 = vmatpush.bf16.msra.mxu0 0
    %4570 = vmatpush.bf16.msra.mxu0 0
    %4571 = vmatpush.bf16.msra.mxu0 0
    %4572 = vmatpush.bf16.msra.mxu0 0
    %4573 = vmatpush.bf16.msra.mxu0 0
    %4574 = vmatpush.bf16.msra.mxu0 0
    %4575 = vmatpush.bf16.msra.mxu0 0
    %4576 = vmatpush.bf16.msra.mxu0 %v4567
    %4577 = vmatmul.bf16.gmra.mxu0 %v4564
    %v4578 = vpop.f32.mrf.mxu0
    %v4579 = vadd.f32 0.0, %v4578
    %v4580 = vpop.f32.mrf.mxu0
    %4581 = vdwg.mxu0
    %v4583 = vsel %vm652, %v4520, 0
    %v4586 = vsel %vm159, %v4268, 0
    %4588 = vmatpush.bf16.msra.mxu0 0
    %4589 = vmatpush.bf16.msra.mxu0 0
    %4590 = vmatpush.bf16.msra.mxu0 0
    %4591 = vmatpush.bf16.msra.mxu0 0
    %4592 = vmatpush.bf16.msra.mxu0 0
    %4593 = vmatpush.bf16.msra.mxu0 0
    %4594 = vmatpush.bf16.msra.mxu0 0
    %4595 = vmatpush.bf16.msra.mxu0 %v4586
    %4596 = vmatmul.bf16.gmra.mxu0 %v4583
    %v4597 = vpop.f32.mrf.mxu0
    %v4598 = vadd.f32 0.0, %v4597
    %v4599 = vpop.f32.mrf.mxu0
    %4600 = vdwg.mxu0
    %v4602 = vsel %vm652, %v4521, 0
    %v4605 = vsel %vm159, %v4270, 0
    %4607 = vmatpush.bf16.msra.mxu0 0
    %4608 = vmatpush.bf16.msra.mxu0 0
    %4609 = vmatpush.bf16.msra.mxu0 0
    %4610 = vmatpush.bf16.msra.mxu0 0
    %4611 = vmatpush.bf16.msra.mxu0 0
    %4612 = vmatpush.bf16.msra.mxu0 0
    %4613 = vmatpush.bf16.msra.mxu0 0
    %4614 = vmatpush.bf16.msra.mxu0 %v4605
    %4615 = vmatmul.bf16.gmra.mxu0 %v4602
    %v4616 = vpop.f32.mrf.mxu0
    %v4617 = vadd.f32 0.0, %v4616
    %v4618 = vpop.f32.mrf.mxu0
    %4619 = vdwg.mxu0
    %v4621 = vsel %vm652, %v4522, 0
    %v4624 = vsel %vm159, %v4272, 0
    %4626 = vmatpush.bf16.msra.mxu0 0
    %4627 = vmatpush.bf16.msra.mxu0 0
    %4628 = vmatpush.bf16.msra.mxu0 0
    %4629 = vmatpush.bf16.msra.mxu0 0
    %4630 = vmatpush.bf16.msra.mxu0 0
    %4631 = vmatpush.bf16.msra.mxu0 0
    %4632 = vmatpush.bf16.msra.mxu0 0
    %4633 = vmatpush.bf16.msra.mxu0 %v4624
    %4634 = vmatmul.bf16.gmra.mxu0 %v4621
    %v4635 = vpop.f32.mrf.mxu0
    %v4636 = vadd.f32 0.0, %v4635
    %v4637 = vpop.f32.mrf.mxu0
    %4638 = vdwg.mxu0
    %v4640 = vsel %vm652, %v4523, 0
    %v4643 = vsel %vm159, %v4274, 0
    %4645 = vmatpush.bf16.msra.mxu0 0
    %4646 = vmatpush.bf16.msra.mxu0 0
    %4647 = vmatpush.bf16.msra.mxu0 0
    %4648 = vmatpush.bf16.msra.mxu0 0
    %4649 = vmatpush.bf16.msra.mxu0 0
    %4650 = vmatpush.bf16.msra.mxu0 0
    %4651 = vmatpush.bf16.msra.mxu0 0
    %4652 = vmatpush.bf16.msra.mxu0 %v4643
    %4653 = vmatmul.bf16.gmra.mxu0 %v4640
    %v4654 = vpop.f32.mrf.mxu0
    %v4655 = vadd.f32 0.0, %v4654
    %v4656 = vpop.f32.mrf.mxu0
    %4657 = vdwg.mxu0
    %v4659 = vsel %vm652, %v4524, 0
    %v4662 = vsel %vm159, %v4276, 0
    %4664 = vmatpush.bf16.msra.mxu0 0
    %4665 = vmatpush.bf16.msra.mxu0 0
    %4666 = vmatpush.bf16.msra.mxu0 0
    %4667 = vmatpush.bf16.msra.mxu0 0
    %4668 = vmatpush.bf16.msra.mxu0 0
    %4669 = vmatpush.bf16.msra.mxu0 0
    %4670 = vmatpush.bf16.msra.mxu0 0
    %4671 = vmatpush.bf16.msra.mxu0 %v4662
    %4672 = vmatmul.bf16.gmra.mxu0 %v4659
    %v4673 = vpop.f32.mrf.mxu0
    %v4674 = vadd.f32 0.0, %v4673
    %v4675 = vpop.f32.mrf.mxu0
    %4676 = vdwg.mxu0
    %4679 = vrot.lane.b32.xlu0 %v4579, 32
    %v4680 = vpop.permute.xlu0 %4679
    %4681 = vrot.lane.b32.xlu0 %v4598, 32
    %v4682 = vpop.permute.xlu0 %4681
    %4687 = vrot.lane.b32.xlu0 %v4617, 64
    %v4688 = vpop.permute.xlu0 %4687
    %4689 = vrot.lane.b32.xlu0 %v4636, 64
    %v4690 = vpop.permute.xlu0 %4689
    %4695 = vrot.lane.b32.xlu0 %v4655, 96
    %v4696 = vpop.permute.xlu0 %4695
    %4697 = vrot.lane.b32.xlu0 %v4674, 96
    %v4698 = vpop.permute.xlu0 %4697
    %v4701 = vsel %vm499, %v4541, %v4680
    %v4702 = vsel %vm499, %v4560, %v4682
    %v4703 = vsel %vm927, %v4701, %v4688
    %v4704 = vsel %vm927, %v4702, %v4690
    %v4705 = vsel %vm930, %v4703, %v4696
    %v4706 = vsel %vm930, %v4704, %v4698
    %v4707 = vpack.c.bf16 %v4706, %v4705
    %s4708 = scalar_lea.vmem [#allocation4], 192
    %v4709 = vld [vmem:[%s4708] sm:$0xf]
    %v4710 = vld [vmem:[%s4708 + $0x4] sm:$0xf]
    %v4711 = vld [vmem:[%s4708 + $0x8] sm:$0xf]
    %v4712 = vld [vmem:[%s4708 + $0xc] sm:$0xf]
    %v4713 = vld [vmem:[%s4708 + $0x10] sm:$0xf]
    %v4714 = vld [vmem:[%s4708 + $0x14] sm:$0xf]
    %v4715 = vld [vmem:[%s4708 + $0x18] sm:$0xf]
    %v4716 = vld [vmem:[%s4708 + $0x1c] sm:$0xf]
    %v4717 = vld [vmem:[%s4708 + $0x20] sm:$0xf]
    %v4718 = vld [vmem:[%s4708 + $0x24] sm:$0xf]
    %v4719 = vld [vmem:[%s4708 + $0x28] sm:$0xf]
    %v4720 = vld [vmem:[%s4708 + $0x2c] sm:$0xf]
    %v4721 = vld [vmem:[%s4708 + $0x30] sm:$0xf]
    %v4722 = vld [vmem:[%s4708 + $0x34] sm:$0xf]
    %v4723 = vld [vmem:[%s4708 + $0x38] sm:$0xf]
    %v4724 = vld [vmem:[%s4708 + $0x3c] sm:$0xf]
    %s4725 = scalar_lea.vmem %s7, 3
    %v4726 = vld [vmem:[%s4725] sm:$0x1]
    %v4728 = vperm.slane %v4726, 0
    %v4746 = vunpack.c.l.b16 %v4709
    %v4747 = vunpack.c.l.b16 %v4710
    %v4748 = vunpack.c.l.b16 %v4711
    %v4749 = vunpack.c.l.b16 %v4712
    %v4750 = vunpack.c.l.b16 %v4713
    %v4751 = vunpack.c.l.b16 %v4714
    %v4752 = vunpack.c.l.b16 %v4715
    %v4753 = vunpack.c.l.b16 %v4716
    %v4754 = vunpack.c.l.b16 %v4717
    %v4755 = vunpack.c.l.b16 %v4718
    %v4756 = vunpack.c.l.b16 %v4719
    %v4757 = vunpack.c.l.b16 %v4720
    %v4758 = vunpack.c.l.b16 %v4721
    %v4759 = vunpack.c.l.b16 %v4722
    %v4760 = vunpack.c.l.b16 %v4723
    %v4761 = vunpack.c.l.b16 %v4724
    %v4762 = vpack.c.b16 %v4747, %v4746
    %v4763 = vpack.c.b16 %v4749, %v4748
    %v4764 = vpack.c.b16 %v4751, %v4750
    %v4765 = vpack.c.b16 %v4753, %v4752
    %v4766 = vpack.c.b16 %v4755, %v4754
    %v4767 = vpack.c.b16 %v4757, %v4756
    %v4768 = vpack.c.b16 %v4759, %v4758
    %v4769 = vpack.c.b16 %v4761, %v4760
    %4778 = vmatpush.bf16.msra.mxu0 %v4769
    %4779 = vmatpush.bf16.msra.mxu0 %v4768
    %4780 = vmatpush.bf16.msra.mxu0 %v4767
    %4781 = vmatpush.bf16.msra.mxu0 %v4766
    %4782 = vmatpush.bf16.msra.mxu0 %v4765
    %4783 = vmatpush.bf16.msra.mxu0 %v4764
    %4784 = vmatpush.bf16.msra.mxu0 %v4763
    %4785 = vmatpush.bf16.msra.mxu0 %v4762
    %4786 = vmatmul.bf16.gmra.mxu0 %v4707
    %v4787 = vpop.f32.mrf.mxu0
    %v4788 = vadd.f32 %v4728, %v4787
    %v4789 = vpop.f32.mrf.mxu0
    %v4790 = vadd.f32 %v4728, %v4789
    %4791 = vdwg.mxu0
    %v4792 = vadd.f32 %v4788, %v4022
    %v4793 = vadd.f32 %v4790, %v4023
    %s4794 = scalar_lea.vmem %s8, 3
    %v4795 = vld [vmem:[%s4794] sm:$0x1]
    %s4796 = scalar_lea.vmem %s9, 3
    %v4797 = vld [vmem:[%s4796] sm:$0x1]
    %4798 = vadd.xlane.f32.xlu0 %v4792
    %v4799 = vpop.xlane.xlu0 %4798
    %4800 = vadd.xlane.f32.xlu0 %v4793
    %v4801 = vpop.xlane.xlu0 %4800
    %v4802 = vmul.f32 %v4799, %v177
    %v4803 = vmul.f32 %v4801, %v177
    %v4804 = vsub.f32 %v4792, %v4802
    %v4805 = vsub.f32 %v4793, %v4803
    %v4806 = vmul.f32 %v4804, %v4804
    %v4807 = vmul.f32 %v4805, %v4805
    %4808 = vadd.xlane.f32.xlu0 %v4806
    %v4809 = vpop.xlane.xlu0 %4808
    %4810 = vadd.xlane.f32.xlu0 %v4807
    %v4811 = vpop.xlane.xlu0 %4810
    %v4812 = vmul.f32 %v4809, %v177
    %v4813 = vmul.f32 %v4811, %v177
    %v4814 = vadd.f32 %v4812, 1e-12
    %v4815 = vadd.f32 %v4813, 1e-12
    %v4816 = vrsqrt.pop %v4814
    %v4817 = vmul.f32 %v4816, %v4814
    %v4818 = vmul.f32 %v4817, %v4816
    %v4819 = vmul.f32 0.5, %v4818
    %v4820 = vsub.f32 1.5, %v4819
    %v4821 = vmul.f32 %v4816, %v4820
    %vm4822 = vweird.f32 %v4814
    %vm4823 = vweird.f32 %v4816
    %vm4824 = vmor %vm4822, %vm4823
    %v4825 = vsel %vm4824, %v4816, %v4821
    %v4826 = vrsqrt.pop %v4815
    %v4827 = vmul.f32 %v4826, %v4815
    %v4828 = vmul.f32 %v4827, %v4826
    %v4829 = vmul.f32 0.5, %v4828
    %v4830 = vsub.f32 1.5, %v4829
    %v4831 = vmul.f32 %v4826, %v4830
    %vm4832 = vweird.f32 %v4815
    %vm4833 = vweird.f32 %v4826
    %vm4834 = vmor %vm4832, %vm4833
    %v4835 = vsel %vm4834, %v4826, %v4831
    %v4836 = vmul.f32 %v4804, %v4825
    %v4837 = vmul.f32 %v4805, %v4835
    %v4839 = vperm.slane %v4795, 0
    %v4841 = vmul.f32 %v4836, %v4839
    %v4842 = vmul.f32 %v4837, %v4839
    %v4844 = vperm.slane %v4797, 0
    %v4846 = vadd.f32 %v4841, %v4844
    %v4847 = vadd.f32 %v4842, %v4844
    %v4848 = vpack.c.bf16 %v4847, %v4846
    %s4849 = scalar_lea.vmem [#allocation6], 384
    %v4850 = vld [vmem:[%s4849] sm:$0xff]
    %v4851 = vld [vmem:[%s4849 + $0x8] sm:$0xff]
    %v4852 = vld [vmem:[%s4849 + $0x10] sm:$0xff]
    %v4853 = vld [vmem:[%s4849 + $0x18] sm:$0xff]
    %v4854 = vld [vmem:[%s4849 + $0x20] sm:$0xff]
    %v4855 = vld [vmem:[%s4849 + $0x28] sm:$0xff]
    %v4856 = vld [vmem:[%s4849 + $0x30] sm:$0xff]
    %v4857 = vld [vmem:[%s4849 + $0x38] sm:$0xff]
    %v4858 = vld [vmem:[%s4849 + $0x40] sm:$0xff]
    %v4859 = vld [vmem:[%s4849 + $0x48] sm:$0xff]
    %v4860 = vld [vmem:[%s4849 + $0x50] sm:$0xff]
    %v4861 = vld [vmem:[%s4849 + $0x58] sm:$0xff]
    %v4862 = vld [vmem:[%s4849 + $0x60] sm:$0xff]
    %v4863 = vld [vmem:[%s4849 + $0x68] sm:$0xff]
    %v4864 = vld [vmem:[%s4849 + $0x70] sm:$0xff]
    %v4865 = vld [vmem:[%s4849 + $0x78] sm:$0xff]
    %s4866 = scalar_lea.vmem %s11, 6
    %v4867 = vld [vmem:[%s4866] sm:$0x3]
    %v4869 = vperm.slane %v4867, 0
    %v4870 = vperm.slane %v4867, 1
    %v4889 = vunpack.c.l.b16 %v4850
    %v4890 = vunpack.c.h.b16 %v4850
    %v4891 = vunpack.c.l.b16 %v4851
    %v4892 = vunpack.c.h.b16 %v4851
    %v4893 = vunpack.c.l.b16 %v4852
    %v4894 = vunpack.c.h.b16 %v4852
    %v4895 = vunpack.c.l.b16 %v4853
    %v4896 = vunpack.c.h.b16 %v4853
    %v4897 = vunpack.c.l.b16 %v4854
    %v4898 = vunpack.c.h.b16 %v4854
    %v4899 = vunpack.c.l.b16 %v4855
    %v4900 = vunpack.c.h.b16 %v4855
    %v4901 = vunpack.c.l.b16 %v4856
    %v4902 = vunpack.c.h.b16 %v4856
    %v4903 = vunpack.c.l.b16 %v4857
    %v4904 = vunpack.c.h.b16 %v4857
    %v4905 = vunpack.c.l.b16 %v4858
    %v4906 = vunpack.c.h.b16 %v4858
    %v4907 = vunpack.c.l.b16 %v4859
    %v4908 = vunpack.c.h.b16 %v4859
    %v4909 = vunpack.c.l.b16 %v4860
    %v4910 = vunpack.c.h.b16 %v4860
    %v4911 = vunpack.c.l.b16 %v4861
    %v4912 = vunpack.c.h.b16 %v4861
    %v4913 = vunpack.c.l.b16 %v4862
    %v4914 = vunpack.c.h.b16 %v4862
    %v4915 = vunpack.c.l.b16 %v4863
    %v4916 = vunpack.c.h.b16 %v4863
    %v4917 = vunpack.c.l.b16 %v4864
    %v4918 = vunpack.c.h.b16 %v4864
    %v4919 = vunpack.c.l.b16 %v4865
    %v4920 = vunpack.c.h.b16 %v4865
    %v4921 = vpack.c.b16 %v4891, %v4889
    %v4922 = vpack.c.b16 %v4892, %v4890
    %v4923 = vpack.c.b16 %v4895, %v4893
    %v4924 = vpack.c.b16 %v4896, %v4894
    %v4925 = vpack.c.b16 %v4899, %v4897
    %v4926 = vpack.c.b16 %v4900, %v4898
    %v4927 = vpack.c.b16 %v4903, %v4901
    %v4928 = vpack.c.b16 %v4904, %v4902
    %v4929 = vpack.c.b16 %v4907, %v4905
    %v4930 = vpack.c.b16 %v4908, %v4906
    %v4931 = vpack.c.b16 %v4911, %v4909
    %v4932 = vpack.c.b16 %v4912, %v4910
    %v4933 = vpack.c.b16 %v4915, %v4913
    %v4934 = vpack.c.b16 %v4916, %v4914
    %v4935 = vpack.c.b16 %v4919, %v4917
    %v4936 = vpack.c.b16 %v4920, %v4918
    %4953 = vmatpush.bf16.msra.mxu0 %v4935
    %4954 = vmatpush.bf16.msra.mxu0 %v4933
    %4955 = vmatpush.bf16.msra.mxu0 %v4931
    %4956 = vmatpush.bf16.msra.mxu0 %v4929
    %4957 = vmatpush.bf16.msra.mxu0 %v4927
    %4958 = vmatpush.bf16.msra.mxu0 %v4925
    %4959 = vmatpush.bf16.msra.mxu0 %v4923
    %4960 = vmatpush.bf16.msra.mxu0 %v4921
    %4961 = vmatmul.bf16.gmra.mxu0 %v4848
    %v4962 = vpop.f32.mrf.mxu0
    %v4963 = vadd.f32 %v4869, %v4962
    %v4964 = vpop.f32.mrf.mxu0
    %v4965 = vadd.f32 %v4869, %v4964
    %4966 = vdwg.mxu0
    %4967 = vmatpush.bf16.msra.mxu0 %v4936
    %4968 = vmatpush.bf16.msra.mxu0 %v4934
    %4969 = vmatpush.bf16.msra.mxu0 %v4932
    %4970 = vmatpush.bf16.msra.mxu0 %v4930
    %4971 = vmatpush.bf16.msra.mxu0 %v4928
    %4972 = vmatpush.bf16.msra.mxu0 %v4926
    %4973 = vmatpush.bf16.msra.mxu0 %v4924
    %4974 = vmatpush.bf16.msra.mxu0 %v4922
    %4975 = vmatmul.bf16.gmra.mxu0 %v4848
    %v4976 = vpop.f32.mrf.mxu0
    %v4977 = vadd.f32 %v4870, %v4976
    %v4978 = vpop.f32.mrf.mxu0
    %v4979 = vadd.f32 %v4870, %v4978
    %4980 = vdwg.mxu0
    %v4981 = vmul.f32 %v4963, %v4963
    %v4982 = vmul.f32 %v4977, %v4977
    %v4983 = vmul.f32 %v4965, %v4965
    %v4984 = vmul.f32 %v4979, %v4979
    %v4985 = vmul.f32 %v4963, %v4981
    %v4986 = vmul.f32 %v4977, %v4982
    %v4987 = vmul.f32 %v4965, %v4983
    %v4988 = vmul.f32 %v4979, %v4984
    %v4989 = vmul.f32 %v4985, 0.044715
    %v4990 = vmul.f32 %v4986, 0.044715
    %v4991 = vmul.f32 %v4987, 0.044715
    %v4992 = vmul.f32 %v4988, 0.044715
    %v4993 = vadd.f32 %v4963, %v4989
    %v4994 = vadd.f32 %v4977, %v4990
    %v4995 = vadd.f32 %v4965, %v4991
    %v4996 = vadd.f32 %v4979, %v4992
    %v4997 = vmul.f32 %v4993, 0.7978846
    %v4998 = vmul.f32 %v4994, 0.7978846
    %v4999 = vmul.f32 %v4995, 0.7978846
    %v5000 = vmul.f32 %v4996, 0.7978846
    %v5001 = vtanh.pop %v4997
    %v5002 = vtanh.pop %v4998
    %v5003 = vtanh.pop %v4999
    %v5004 = vtanh.pop %v5000
    %v5005 = vadd.f32 %v5001, 1.0
    %v5006 = vadd.f32 %v5002, 1.0
    %v5007 = vadd.f32 %v5003, 1.0
    %v5008 = vadd.f32 %v5004, 1.0
    %v5009 = vmul.f32 %v5005, 0.5
    %v5010 = vmul.f32 %v5006, 0.5
    %v5011 = vmul.f32 %v5007, 0.5
    %v5012 = vmul.f32 %v5008, 0.5
    %v5013 = vmul.f32 %v4963, %v5009
    %v5014 = vmul.f32 %v4977, %v5010
    %v5015 = vmul.f32 %v4965, %v5011
    %v5016 = vmul.f32 %v4979, %v5012
    %v5017 = vpack.c.bf16 %v5015, %v5013
    %v5018 = vpack.c.bf16 %v5016, %v5014
    %s5019 = scalar_lea.vmem [#allocation7], 384
    %v5020 = vld [vmem:[%s5019] sm:$0xf]
    %v5021 = vld [vmem:[%s5019 + $0x4] sm:$0xf]
    %v5022 = vld [vmem:[%s5019 + $0x8] sm:$0xf]
    %v5023 = vld [vmem:[%s5019 + $0xc] sm:$0xf]
    %v5024 = vld [vmem:[%s5019 + $0x10] sm:$0xf]
    %v5025 = vld [vmem:[%s5019 + $0x14] sm:$0xf]
    %v5026 = vld [vmem:[%s5019 + $0x18] sm:$0xf]
    %v5027 = vld [vmem:[%s5019 + $0x1c] sm:$0xf]
    %v5028 = vld [vmem:[%s5019 + $0x20] sm:$0xf]
    %v5029 = vld [vmem:[%s5019 + $0x24] sm:$0xf]
    %v5030 = vld [vmem:[%s5019 + $0x28] sm:$0xf]
    %v5031 = vld [vmem:[%s5019 + $0x2c] sm:$0xf]
    %v5032 = vld [vmem:[%s5019 + $0x30] sm:$0xf]
    %v5033 = vld [vmem:[%s5019 + $0x34] sm:$0xf]
    %v5034 = vld [vmem:[%s5019 + $0x38] sm:$0xf]
    %v5035 = vld [vmem:[%s5019 + $0x3c] sm:$0xf]
    %v5036 = vld [vmem:[%s5019 + $0x40] sm:$0xf]
    %v5037 = vld [vmem:[%s5019 + $0x44] sm:$0xf]
    %v5038 = vld [vmem:[%s5019 + $0x48] sm:$0xf]
    %v5039 = vld [vmem:[%s5019 + $0x4c] sm:$0xf]
    %v5040 = vld [vmem:[%s5019 + $0x50] sm:$0xf]
    %v5041 = vld [vmem:[%s5019 + $0x54] sm:$0xf]
    %v5042 = vld [vmem:[%s5019 + $0x58] sm:$0xf]
    %v5043 = vld [vmem:[%s5019 + $0x5c] sm:$0xf]
    %v5044 = vld [vmem:[%s5019 + $0x60] sm:$0xf]
    %v5045 = vld [vmem:[%s5019 + $0x64] sm:$0xf]
    %v5046 = vld [vmem:[%s5019 + $0x68] sm:$0xf]
    %v5047 = vld [vmem:[%s5019 + $0x6c] sm:$0xf]
    %v5048 = vld [vmem:[%s5019 + $0x70] sm:$0xf]
    %v5049 = vld [vmem:[%s5019 + $0x74] sm:$0xf]
    %v5050 = vld [vmem:[%s5019 + $0x78] sm:$0xf]
    %v5051 = vld [vmem:[%s5019 + $0x7c] sm:$0xf]
    %s5052 = scalar_lea.vmem %s13, 3
    %v5053 = vld [vmem:[%s5052] sm:$0x1]
    %v5055 = vperm.slane %v5053, 0
    %v5089 = vunpack.c.l.b16 %v5020
    %v5090 = vunpack.c.l.b16 %v5021
    %v5091 = vunpack.c.l.b16 %v5022
    %v5092 = vunpack.c.l.b16 %v5023
    %v5093 = vunpack.c.l.b16 %v5024
    %v5094 = vunpack.c.l.b16 %v5025
    %v5095 = vunpack.c.l.b16 %v5026
    %v5096 = vunpack.c.l.b16 %v5027
    %v5097 = vunpack.c.l.b16 %v5028
    %v5098 = vunpack.c.l.b16 %v5029
    %v5099 = vunpack.c.l.b16 %v5030
    %v5100 = vunpack.c.l.b16 %v5031
    %v5101 = vunpack.c.l.b16 %v5032
    %v5102 = vunpack.c.l.b16 %v5033
    %v5103 = vunpack.c.l.b16 %v5034
    %v5104 = vunpack.c.l.b16 %v5035
    %v5105 = vunpack.c.l.b16 %v5036
    %v5106 = vunpack.c.l.b16 %v5037
    %v5107 = vunpack.c.l.b16 %v5038
    %v5108 = vunpack.c.l.b16 %v5039
    %v5109 = vunpack.c.l.b16 %v5040
    %v5110 = vunpack.c.l.b16 %v5041
    %v5111 = vunpack.c.l.b16 %v5042
    %v5112 = vunpack.c.l.b16 %v5043
    %v5113 = vunpack.c.l.b16 %v5044
    %v5114 = vunpack.c.l.b16 %v5045
    %v5115 = vunpack.c.l.b16 %v5046
    %v5116 = vunpack.c.l.b16 %v5047
    %v5117 = vunpack.c.l.b16 %v5048
    %v5118 = vunpack.c.l.b16 %v5049
    %v5119 = vunpack.c.l.b16 %v5050
    %v5120 = vunpack.c.l.b16 %v5051
    %v5121 = vpack.c.b16 %v5090, %v5089
    %v5122 = vpack.c.b16 %v5092, %v5091
    %v5123 = vpack.c.b16 %v5094, %v5093
    %v5124 = vpack.c.b16 %v5096, %v5095
    %v5125 = vpack.c.b16 %v5098, %v5097
    %v5126 = vpack.c.b16 %v5100, %v5099
    %v5127 = vpack.c.b16 %v5102, %v5101
    %v5128 = vpack.c.b16 %v5104, %v5103
    %v5129 = vpack.c.b16 %v5106, %v5105
    %v5130 = vpack.c.b16 %v5108, %v5107
    %v5131 = vpack.c.b16 %v5110, %v5109
    %v5132 = vpack.c.b16 %v5112, %v5111
    %v5133 = vpack.c.b16 %v5114, %v5113
    %v5134 = vpack.c.b16 %v5116, %v5115
    %v5135 = vpack.c.b16 %v5118, %v5117
    %v5136 = vpack.c.b16 %v5120, %v5119
    %5153 = vmatpush.bf16.msra.mxu0 %v5128
    %5154 = vmatpush.bf16.msra.mxu0 %v5127
    %5155 = vmatpush.bf16.msra.mxu0 %v5126
    %5156 = vmatpush.bf16.msra.mxu0 %v5125
    %5157 = vmatpush.bf16.msra.mxu0 %v5124
    %5158 = vmatpush.bf16.msra.mxu0 %v5123
    %5159 = vmatpush.bf16.msra.mxu0 %v5122
    %5160 = vmatpush.bf16.msra.mxu0 %v5121
    %5161 = vmatmul.bf16.gmra.mxu0 %v5017
    %v5162 = vpop.f32.mrf.mxu0
    %v5163 = vadd.f32 %v5055, %v5162
    %v5164 = vpop.f32.mrf.mxu0
    %v5165 = vadd.f32 %v5055, %v5164
    %5166 = vdwg.mxu0
    %5167 = vmatpush.bf16.msra.mxu0 %v5136
    %5168 = vmatpush.bf16.msra.mxu0 %v5135
    %5169 = vmatpush.bf16.msra.mxu0 %v5134
    %5170 = vmatpush.bf16.msra.mxu0 %v5133
    %5171 = vmatpush.bf16.msra.mxu0 %v5132
    %5172 = vmatpush.bf16.msra.mxu0 %v5131
    %5173 = vmatpush.bf16.msra.mxu0 %v5130
    %5174 = vmatpush.bf16.msra.mxu0 %v5129
    %5175 = vmatmul.bf16.gmra.mxu0 %v5018
    %v5176 = vpop.f32.mrf.mxu0
    %v5177 = vadd.f32 %v5163, %v5176
    %v5178 = vpop.f32.mrf.mxu0
    %v5179 = vadd.f32 %v5165, %v5178
    %5180 = vdwg.mxu0
    %v5181 = vadd.f32 %v5177, %v4846
    %v5182 = vadd.f32 %v5179, %v4847
    %s5183 = scalar_lea.vmem %s14, 3
    %v5184 = vld [vmem:[%s5183] sm:$0x1]
    %s5185 = scalar_lea.vmem %s15, 3
    %v5186 = vld [vmem:[%s5185] sm:$0x1]
    %5187 = vadd.xlane.f32.xlu0 %v5181
    %v5188 = vpop.xlane.xlu0 %5187
    %5189 = vadd.xlane.f32.xlu0 %v5182
    %v5190 = vpop.xlane.xlu0 %5189
    %v5191 = vmul.f32 %v5188, %v177
    %v5192 = vmul.f32 %v5190, %v177
    %v5193 = vsub.f32 %v5181, %v5191
    %v5194 = vsub.f32 %v5182, %v5192
    %v5195 = vmul.f32 %v5193, %v5193
    %v5196 = vmul.f32 %v5194, %v5194
    %5197 = vadd.xlane.f32.xlu0 %v5195
    %v5198 = vpop.xlane.xlu0 %5197
    %5199 = vadd.xlane.f32.xlu0 %v5196
    %v5200 = vpop.xlane.xlu0 %5199
    %v5201 = vmul.f32 %v5198, %v177
    %v5202 = vmul.f32 %v5200, %v177
    %v5203 = vadd.f32 %v5201, 1e-12
    %v5204 = vadd.f32 %v5202, 1e-12
    %v5205 = vrsqrt.pop %v5203
    %v5206 = vmul.f32 %v5205, %v5203
    %v5207 = vmul.f32 %v5206, %v5205
    %v5208 = vmul.f32 0.5, %v5207
    %v5209 = vsub.f32 1.5, %v5208
    %v5210 = vmul.f32 %v5205, %v5209
    %vm5211 = vweird.f32 %v5203
    %vm5212 = vweird.f32 %v5205
    %vm5213 = vmor %vm5211, %vm5212
    %v5214 = vsel %vm5213, %v5205, %v5210
    %v5215 = vrsqrt.pop %v5204
    %v5216 = vmul.f32 %v5215, %v5204
    %v5217 = vmul.f32 %v5216, %v5215
    %v5218 = vmul.f32 0.5, %v5217
    %v5219 = vsub.f32 1.5, %v5218
    %v5220 = vmul.f32 %v5215, %v5219
    %vm5221 = vweird.f32 %v5204
    %vm5222 = vweird.f32 %v5215
    %vm5223 = vmor %vm5221, %vm5222
    %v5224 = vsel %vm5223, %v5215, %v5220
    %v5225 = vmul.f32 %v5193, %v5214
    %v5226 = vmul.f32 %v5194, %v5224
    %v5228 = vperm.slane %v5184, 0
    %v5230 = vmul.f32 %v5225, %v5228
    %v5231 = vmul.f32 %v5226, %v5228
    %v5233 = vperm.slane %v5186, 0
    %v5235 = vadd.f32 %v5230, %v5233
    %v5236 = vadd.f32 %v5231, %v5233
    %v5238 = vrot.slane %v5236, 7
    %v5240 = vsel %vm2669, %v5235, %v5238
    %v5241 = vpack.c.bf16 %v5240, %v5240
    %s5242 = scalar_lea.vmem [#allocation9], 64
    %v5243 = vld [vmem:[%s5242] sm:$0xf]
    %v5244 = vld [vmem:[%s5242 + $0x4] sm:$0xf]
    %v5245 = vld [vmem:[%s5242 + $0x8] sm:$0xf]
    %v5246 = vld [vmem:[%s5242 + $0xc] sm:$0xf]
    %v5247 = vld [vmem:[%s5242 + $0x10] sm:$0xf]
    %v5248 = vld [vmem:[%s5242 + $0x14] sm:$0xf]
    %v5249 = vld [vmem:[%s5242 + $0x18] sm:$0xf]
    %v5250 = vld [vmem:[%s5242 + $0x1c] sm:$0xf]
    %v5251 = vld [vmem:[%s5242 + $0x20] sm:$0xf]
    %v5252 = vld [vmem:[%s5242 + $0x24] sm:$0xf]
    %v5253 = vld [vmem:[%s5242 + $0x28] sm:$0xf]
    %v5254 = vld [vmem:[%s5242 + $0x2c] sm:$0xf]
    %v5255 = vld [vmem:[%s5242 + $0x30] sm:$0xf]
    %v5256 = vld [vmem:[%s5242 + $0x34] sm:$0xf]
    %v5257 = vld [vmem:[%s5242 + $0x38] sm:$0xf]
    %v5258 = vld [vmem:[%s5242 + $0x3c] sm:$0xf]
    %s5259 = scalar_lea.vmem %s17, 1
    %v5260 = vld [vmem:[%s5259] sm:$0x1]
    %v5262 = vperm.slane %v5260, 0
    %v5280 = vunpack.c.l.b16 %v5243
    %v5281 = vunpack.c.l.b16 %v5244
    %v5282 = vunpack.c.l.b16 %v5245
    %v5283 = vunpack.c.l.b16 %v5246
    %v5284 = vunpack.c.l.b16 %v5247
    %v5285 = vunpack.c.l.b16 %v5248
    %v5286 = vunpack.c.l.b16 %v5249
    %v5287 = vunpack.c.l.b16 %v5250
    %v5288 = vunpack.c.l.b16 %v5251
    %v5289 = vunpack.c.l.b16 %v5252
    %v5290 = vunpack.c.l.b16 %v5253
    %v5291 = vunpack.c.l.b16 %v5254
    %v5292 = vunpack.c.l.b16 %v5255
    %v5293 = vunpack.c.l.b16 %v5256
    %v5294 = vunpack.c.l.b16 %v5257
    %v5295 = vunpack.c.l.b16 %v5258
    %v5296 = vpack.c.b16 %v5281, %v5280
    %v5297 = vpack.c.b16 %v5283, %v5282
    %v5298 = vpack.c.b16 %v5285, %v5284
    %v5299 = vpack.c.b16 %v5287, %v5286
    %v5300 = vpack.c.b16 %v5289, %v5288
    %v5301 = vpack.c.b16 %v5291, %v5290
    %v5302 = vpack.c.b16 %v5293, %v5292
    %v5303 = vpack.c.b16 %v5295, %v5294
    %5312 = vmatpush.bf16.msra.mxu0 %v5303
    %5313 = vmatpush.bf16.msra.mxu0 %v5302
    %5314 = vmatpush.bf16.msra.mxu0 %v5301
    %5315 = vmatpush.bf16.msra.mxu0 %v5300
    %5316 = vmatpush.bf16.msra.mxu0 %v5299
    %5317 = vmatpush.bf16.msra.mxu0 %v5298
    %5318 = vmatpush.bf16.msra.mxu0 %v5297
    %5319 = vmatpush.bf16.msra.mxu0 %v5296
    %5320 = vmatmul.bf16.gmra.mxu0 %v5241
    %v5321 = vpop.f32.mrf.mxu0
    %v5322 = vadd.f32 %v5262, %v5321
    %v5323 = vpop.f32.mrf.mxu0
    %5324 = vdwg.mxu0
    %v5325 = vtanh.pop %v5322
    %v5326 = vmax.f32 %v2753, %v5325
    %v5327 = vpack.c.bf16 %v5326, %v5326
    %v5328 = vld [vmem:[%s18] sm:$0xf]
    %v5329 = vld [vmem:[%s18 + $0x4] sm:$0xf]
    %v5330 = vld [vmem:[%s18 + $0x8] sm:$0xf]
    %v5331 = vld [vmem:[%s18 + $0xc] sm:$0xf]
    %v5332 = vld [vmem:[%s18 + $0x10] sm:$0xf]
    %v5333 = vld [vmem:[%s18 + $0x14] sm:$0xf]
    %v5334 = vld [vmem:[%s18 + $0x18] sm:$0xf]
    %v5335 = vld [vmem:[%s18 + $0x1c] sm:$0xf]
    %v5336 = vld [vmem:[%s18 + $0x20] sm:$0xf]
    %v5337 = vld [vmem:[%s18 + $0x24] sm:$0xf]
    %v5338 = vld [vmem:[%s18 + $0x28] sm:$0xf]
    %v5339 = vld [vmem:[%s18 + $0x2c] sm:$0xf]
    %v5340 = vld [vmem:[%s18 + $0x30] sm:$0xf]
    %v5341 = vld [vmem:[%s18 + $0x34] sm:$0xf]
    %v5342 = vld [vmem:[%s18 + $0x38] sm:$0xf]
    %v5343 = vld [vmem:[%s18 + $0x3c] sm:$0xf]
    %v5344 = vld [vmem:[%s19] sm:$0x1]
    %v5346 = vperm.slane %v5344, 0
    %v5364 = vunpack.c.l.b16 %v5328
    %v5365 = vunpack.c.l.b16 %v5329
    %v5366 = vunpack.c.l.b16 %v5330
    %v5367 = vunpack.c.l.b16 %v5331
    %v5368 = vunpack.c.l.b16 %v5332
    %v5369 = vunpack.c.l.b16 %v5333
    %v5370 = vunpack.c.l.b16 %v5334
    %v5371 = vunpack.c.l.b16 %v5335
    %v5372 = vunpack.c.l.b16 %v5336
    %v5373 = vunpack.c.l.b16 %v5337
    %v5374 = vunpack.c.l.b16 %v5338
    %v5375 = vunpack.c.l.b16 %v5339
    %v5376 = vunpack.c.l.b16 %v5340
    %v5377 = vunpack.c.l.b16 %v5341
    %v5378 = vunpack.c.l.b16 %v5342
    %v5379 = vunpack.c.l.b16 %v5343
    %v5380 = vpack.c.b16 %v5365, %v5364
    %v5381 = vpack.c.b16 %v5367, %v5366
    %v5382 = vpack.c.b16 %v5369, %v5368
    %v5383 = vpack.c.b16 %v5371, %v5370
    %v5384 = vpack.c.b16 %v5373, %v5372
    %v5385 = vpack.c.b16 %v5375, %v5374
    %v5386 = vpack.c.b16 %v5377, %v5376
    %v5387 = vpack.c.b16 %v5379, %v5378
    %5396 = vmatpush.bf16.msra.mxu0 %v5387
    %5397 = vmatpush.bf16.msra.mxu0 %v5386
    %5398 = vmatpush.bf16.msra.mxu0 %v5385
    %5399 = vmatpush.bf16.msra.mxu0 %v5384
    %5400 = vmatpush.bf16.msra.mxu0 %v5383
    %5401 = vmatpush.bf16.msra.mxu0 %v5382
    %5402 = vmatpush.bf16.msra.mxu0 %v5381
    %5403 = vmatpush.bf16.msra.mxu0 %v5380
    %5404 = vmatmul.bf16.gmra.mxu0 %v5327
    %v5405 = vpop.f32.mrf.mxu0
    %v5406 = vadd.f32 %v5346, %v5405
    %v5407 = vpop.f32.mrf.mxu0
    %5408 = vdwg.mxu0
    %v5409 = vsel %vm157, %v5406, -inf
    %5410 = vmax.xlane.f32.xlu0 %v5409
    %v5411 = vpop.xlane.xlu0 %5410
    %v5412 = vsub.f32 %v5406, %v5411
    %v5413 = vmul.f32 %v5412, 1.442695
    %v5414 = vpow.pop %v5413
    %v5415 = vsel %vm157, %v5414, 0.0
    %5416 = vadd.xlane.f32.xlu0 %v5415
    %v5417 = vpop.xlane.xlu0 %5416
    %v5418 = vlog2.pop %v5417
    %v5419 = vmul.f32 %v5418, 0.6931472
    %v5420 = vadd.f32 %v5411, %v5419
    %v5421 = vld [vmem:[%s20] sm:$0x3]
    %v5422 = vmul.f32 %v5406, %v5421
    %v5423 = vsel %vm157, %v5422, 0.0
    %5424 = vadd.xlane.f32.xlu0 %v5423
    %v5425 = vpop.xlane.xlu0 %5424
    %v5426 = vsub.f32 %v5420, %v5425
    %vm5427 = vcmask 1024
    %v5428 = vsel %vm5427, %v5426, 0.0
    %5429 = vadd.xlane.f32.xlu0 %v5428
    %v5430 = vpop.xlane.xlu0 %5429
    %v5431 = vrot.slane %v5430, 4
    %v5432 = vadd.f32 %v5430, %v5431
    %v5433 = vrot.slane %v5432, 2
    %v5434 = vadd.f32 %v5432, %v5433
    %v5435 = vrot.slane %v5434, 1
    %v5436 = vadd.f32 %v5434, %v5435
    %s5437 = vtos %v5436
    %v5438 = vrcp.pop 2.0
    %v5439 = vmul.f32 2.0, %v5438
    %v5440 = vsub.f32 1.0, %v5439
    %v5441 = vmul.f32 %v5438, %v5440
    %v5442 = vadd.f32 %v5438, %v5441
    %vm5443 = vweird.f32 %v5438
    %v5444 = vsel %vm5443, %v5438, %v5442
    %s5445 = vtos %v5444
    %s5446 = smul.f32 %s5437, %s5445
    %v5447 = vlaneseq
    %v5448 = vshrl.u32 %v5447, 7
    %v5449 = vlaneseq
    %v5450 = vand.u32 %v5449, 127
    %vm5451 = vcmp.eq.s32.totalorder %v5448, 0
    %vm5452 = vcmp.eq.s32.totalorder %v5450, 8
    %vm5453 = vmand %vm5451, %vm5452
    %v5454 = vstv %s5446
    %v5455 = vsel %vm5453, %v5454, %v5406
    %5456 = vst [vmem:[%s21] sm:$0x3] %v5455
    // Predicated region
    $region106: #{bert_mtl_forward.1} parent=1 // pred_check
      _
    $region107: #{bert_mtl_forward.1} parent=1 // pred_check_branch
      %5458 = sbr.rel (0) target = $region109
    $region108: #{bert_mtl_forward.1} parent=1 // pred_region
      _
    $region109: #{bert_mtl_forward.1} parent=1 // pred_fallthru
      _
    // Predicated region
    $region110: #{bert_mtl_forward.1} parent=1 // pred_check
      _
    $region111: #{bert_mtl_forward.1} parent=1 // pred_check_branch
      %5460 = sbr.rel (0) target = $region113
    $region112: #{bert_mtl_forward.1} parent=1 // pred_region
      _
    $region113: #{bert_mtl_forward.1} parent=1 // pred_fallthru
      _
    %5461 = vsyncpa [#allocation3], 1
    %5462 = vsyncpa [#allocation5], 1
    %5463 = vsyncpa [#allocation8], 1

</llo_original>
